<compile_context>
chip_gen: v6e
topology: v6e:2x2x1
jax: 0.10.0
libtpu: 0.0.40
codegen_flags: <defaults>
</compile_context>

<pallas_src>
import functools

import jax
import jax.numpy as jnp
from jax import lax
from jax.experimental import pallas as pl
from jax.experimental.pallas import tpu as pltpu

_A = -0.75  # PyTorch bicubic convolution constant


def _cubic1(t):
    return ((_A + 2.0) * t - (_A + 3.0)) * t * t + 1.0


def _cubic2(t):
    return ((_A * t - 5.0 * _A) * t + 8.0 * _A) * t - 4.0 * _A


def _cubic_coeffs(t):
    # 4 tap weights for fractional offset t in [0, 1)
    return (_cubic2(t + 1.0), _cubic1(t), _cubic1(1.0 - t), _cubic2(2.0 - t))


def _interp_kernel(pos_ref, x_ref, o_ref, *, Hf, Wf, Cp, H, W):
    # pos_ref: [1, 2, TN]     lane-major positions (row 0 = x, row 1 = y)
    # x_ref:   [1, Hf, Wf*Cp] h-major, channel-padded feature slab
    # o_ref:   [1, TN, Cp]
    p = pos_ref[0].astype(jnp.float32)                  # [2, TN]
    px = p[0:1, :]                                      # [1, TN]
    py = p[1:2, :]

    # normgrid: g = 2*pos/[W-1, H-1] - 1, then grid_sample(align_corners=True).
    # Precondition: H > 1 and W > 1 (asserted in the wrapper).
    ix = (2.0 * (px / (W - 1.0)) - 1.0 + 1.0) * 0.5 * (Wf - 1.0)
    iy = (2.0 * (py / (H - 1.0)) - 1.0 + 1.0) * 0.5 * (Hf - 1.0)

    ix0f = jnp.floor(ix)
    iy0f = jnp.floor(iy)
    tx = ix - ix0f
    ty = iy - iy0f
    ix0 = ix0f.astype(jnp.int32)                        # [1, TN]
    iy0 = iy0f.astype(jnp.int32)

    cx = _cubic_coeffs(tx)                              # 4 x [1, TN] (f32)
    cy = _cubic_coeffs(ty)

    TN = p.shape[1]

    # Separable tap weights, built lane-major (positions along lanes):
    #   WyT[h, n] = sum_k cy_k[n] * [h == iy0[n] - 1 + k]
    # Out-of-range taps never match any valid h/w -> weight 0, which is exactly
    # padding_mode='zeros'.
    h_iota = lax.broadcasted_iota(jnp.int32, (Hf, TN), 0)
    w_iota = lax.broadcasted_iota(jnp.int32, (Wf, TN), 0)
    wy_t = jnp.zeros((Hf, TN), jnp.float32)
    wx_t = jnp.zeros((Wf, TN), jnp.float32)
    for k in range(4):
        wy_t = wy_t + jnp.where(h_iota == iy0 - 1 + k, cy[k], 0.0)
        wx_t = wx_t + jnp.where(w_iota == ix0 - 1 + k, cx[k], 0.0)

    # Stage 1 (MXU): tmp[n, w*Cp + c] = sum_h Wy[n, h] * X[h, w*Cp + c]
    xb = x_ref[0]                                       # [Hf, Wf*Cp]
    wy = wy_t.T.astype(xb.dtype)                        # [TN, Hf]
    tmp = jnp.dot(wy, xb, preferred_element_type=jnp.float32)   # [TN, Wf*Cp] f32

    # Stage 2 (VPU): out[n, c] = sum_w Wx[n, w] * tmp[n, w*Cp + c]
    # Static, lane-aligned slices of tmp (offsets are multiples of Cp % 128 == 0).
    wx = wx_t.T                                         # [TN, Wf] f32
    acc = jnp.zeros((TN, Cp), jnp.float32)
    for w in range(Wf):
        acc = acc + wx[:, w:w + 1] * tmp[:, w * Cp:(w + 1) * Cp]
    o_ref[0] = acc


def interpolate_sparse2d(x_list, pos, H, W, *, tn=128, compute_dtype=jnp.bfloat16):
    """JAX/Pallas equivalent of InterpolateSparse2d.forward (mode='bicubic').

    x_list: list of [B, C, Hf, Wf] feature maps; only the last one is used.
    pos:    [B, N, 2] (x, y) positions in output-map pixel coordinates.
    H, W:   OUTPUT map size used for normalization (must both be > 1).
    tn:     positions per grid step (128 works everywhere; ~256 is reasonable on
            v6e's larger VMEM).
    compute_dtype: dtype of the feature slab / MXU operands.  bf16 (default)
            halves HBM->VMEM traffic; use jnp.float32 for exact PyTorch
            float32 semantics.  Accumulation is always f32.
    """
    assert H > 1 and W > 1, "normgrid divides by (W-1, H-1)"
    x = x_list[-1].astype(jnp.float32)
    B, C, Hf, Wf = x.shape
    N = pos.shape[1]

    Cp = pl.cdiv(C, 128) * 128            # lane-dense channel padding
    Np = pl.cdiv(N, tn) * tn              # MXU-friendly position padding

    # NCHW -> h-major [B, Hf, Wf*Cp] feature slab.
    # TODO(synk): have the producer emit NHWC (or use allow_input_fusion) so this
    # extra full-HBM transpose pass before the kernel disappears.
    xt = jnp.transpose(x, (0, 2, 3, 1))                           # [B, Hf, Wf, C]
    xt = jnp.pad(xt, ((0, 0), (0, 0), (0, 0), (0, Cp - C)))
    x_slab = xt.reshape(B, Hf, Wf * Cp).astype(compute_dtype)

    # Positions -> lane-major [B, 2, Np]; padded rows sample pixel (0, 0)
    # (harmless, sliced off below).
    pos_t = jnp.transpose(pos.astype(jnp.float32), (0, 2, 1))     # [B, 2, N]
    pos_t = jnp.pad(pos_t, ((0, 0), (0, 0), (0, Np - N)))

    kernel = functools.partial(_interp_kernel, Hf=Hf, Wf=Wf, Cp=Cp, H=H, W=W)
    out = pl.pallas_call(
        kernel,
        out_shape=jax.ShapeDtypeStruct((B, Np, Cp), jnp.float32),
        grid_spec=pltpu.PrefetchScalarGridSpec(
            num_scalar_prefetch=0,
            grid=(B, Np // tn),
            in_specs=[
                pl.BlockSpec((1, 2, tn), lambda b, n: (b, 0, n)),
                # Feature slab: index_map ignores the N-tile index, so the block
                # stays resident in VMEM across all N tiles of a batch.
                pl.BlockSpec((1, Hf, Wf * Cp), lambda b, n: (b, 0, 0)),
            ],
            out_specs=pl.BlockSpec((1, tn, Cp), lambda b, n: (b, n, 0)),
        ),
        compiler_params=pltpu.CompilerParams(
            dimension_semantics=("parallel", "parallel"),
            vmem_limit_bytes=32 * 1024 * 1024,
        ),
    )(pos_t, x_slab)
    return [out[:, :N, :C]]


def _reference(x_list, pos, H, W):
    """Pure-JAX gather-based bicubic grid_sample reference (same semantics)."""
    x = x_list[-1].astype(jnp.float32)        # [B, C, Hf, Wf]
    B, C, Hf, Wf = x.shape
    px = pos[..., 0].astype(jnp.float32)      # [B, N]
    py = pos[..., 1].astype(jnp.float32)
    ix = (2.0 * (px / (W - 1.0)) - 1.0 + 1.0) * 0.5 * (Wf - 1.0)
    iy = (2.0 * (py / (H - 1.0)) - 1.0 + 1.0) * 0.5 * (Hf - 1.0)
    ix0 = jnp.floor(ix)
    iy0 = jnp.floor(iy)
    tx = ix - ix0
    ty = iy - iy0
    cx = _cubic_coeffs(tx)
    cy = _cubic_coeffs(ty)
    out = jnp.zeros((B, pos.shape[1], C), jnp.float32)
    for ky in range(4):
        for kx in range(4):
            hh = iy0.astype(jnp.int32) - 1 + ky
            ww = ix0.astype(jnp.int32) - 1 + kx
            valid = (hh >= 0) & (hh < Hf) & (ww >= 0) & (ww < Wf)
            hh_c = jnp.clip(hh, 0, Hf - 1)
            ww_c = jnp.clip(ww, 0, Wf - 1)
            v = jax.vmap(lambda xb, h, w: xb[:, h, w].T)(x, hh_c, ww_c)  # [B,N,C]
            wgt = (cy[ky] * cx[kx] * valid.astype(jnp.float32))[..., None]
            out = out + wgt * v
    return [out]


if __name__ == "__main__":
    key = jax.random.PRNGKey(0)
    B, C, Hf, Wf = 2, 4, 16, 16     # feature maps (last list entry used)
    N = 8                           # number of sparse 2D positions
    H, W = 32, 32                   # OUTPUT map size used for normalization

    k1, k2, k3 = jax.random.split(key, 3)
    feat_lo = jax.random.normal(k1, (B, C, Hf // 2, Wf // 2), jnp.float32)
    feat_hi = jax.random.normal(k2, (B, C, Hf, Wf), jnp.float32)
    # positions in [0, W-1] x [0, H-1], (x, y) order
    pos = jax.random.uniform(k3, (B, N, 2), jnp.float32,
                             minval=0.0, maxval=float(W - 1))
    x_list = [feat_lo, feat_hi]

    ref0 = _reference(x_list, pos, H, W)[0]

    # Exact-semantics path (f32 feature slab == the module's forced float32).
    out_f32 = interpolate_sparse2d(x_list, pos, H, W, compute_dtype=jnp.float32)[0]
    out_f32 = jax.block_until_ready(out_f32)
    assert out_f32.shape == (B, N, C), out_f32.shape
    assert jnp.allclose(out_f32, ref0, atol=2e-3, rtol=2e-3), \
        float(jnp.max(jnp.abs(out_f32 - ref0)))

    # Fast path (bf16 feature slab / MXU operands, f32 accumulation).
    out_bf16 = jax.block_until_ready(interpolate_sparse2d(x_list, pos, H, W)[0])
    assert out_bf16.shape == (B, N, C), out_bf16.shape
    assert jnp.allclose(out_bf16, ref0, atol=5e-2, rtol=5e-2), \
        float(jnp.max(jnp.abs(out_bf16 - ref0)))

    print("KERNEL_OK")
</pallas_src>

<mosaic_0001>
module attributes {stable_mosaic.version = 11 : i64} {
  func.func @_interp_kernel(%arg0: i32, %arg1: i32, %arg2: memref<1x2x128xf32, #tpu.memory_space<vmem>>, %arg3: memref<1x16x2048xf32, #tpu.memory_space<vmem>>, %arg4: memref<1x128x128xf32, #tpu.memory_space<vmem>>) attributes {dimension_semantics = [#tpu.dimension_semantics<parallel>, #tpu.dimension_semantics<parallel>], iteration_bounds = array<i64: 2, 1>, scalar_prefetch = 0 : i64, scratch_operands = 0 : i64, tpu.core_type = #tpu.core_type<tc>, window_params = [{transform_indices = @transform_0, window_bounds = array<i64: 1, 2, 128>}, {transform_indices = @transform_1, window_bounds = array<i64: 1, 16, 2048>}, {transform_indices = @transform_2, window_bounds = array<i64: 1, 128, 128>}]} {
    %c0 = arith.constant 0 : index
    %c0_0 = arith.constant 0 : index
    %c0_1 = arith.constant 0 : index
    %0 = vector.load %arg2[%c0, %c0_0, %c0_1] : memref<1x2x128xf32, #tpu.memory_space<vmem>>, vector<1x2x128xf32>
    %1 = vector.shape_cast %0 : vector<1x2x128xf32> to vector<2x128xf32>
    %2 = vector.extract_strided_slice %1 {offsets = [0, 0], sizes = [1, 128], strides = [1, 1]} : vector<2x128xf32> to vector<1x128xf32>
    %3 = vector.extract_strided_slice %1 {offsets = [1, 0], sizes = [1, 128], strides = [1, 1]} : vector<2x128xf32> to vector<1x128xf32>
    %cst = arith.constant 3.100000e+01 : f32
    %4 = vector.broadcast %cst : f32 to vector<1x128xf32>
    %5 = arith.divf %2, %4 : vector<1x128xf32>
    %cst_2 = arith.constant 2.000000e+00 : f32
    %6 = vector.broadcast %cst_2 : f32 to vector<1x128xf32>
    %7 = arith.mulf %6, %5 : vector<1x128xf32>
    %cst_3 = arith.constant 1.000000e+00 : f32
    %8 = vector.broadcast %cst_3 : f32 to vector<1x128xf32>
    %9 = arith.subf %7, %8 : vector<1x128xf32>
    %cst_4 = arith.constant 1.000000e+00 : f32
    %10 = vector.broadcast %cst_4 : f32 to vector<1x128xf32>
    %11 = arith.addf %9, %10 : vector<1x128xf32>
    %cst_5 = arith.constant 5.000000e-01 : f32
    %12 = vector.broadcast %cst_5 : f32 to vector<1x128xf32>
    %13 = arith.mulf %11, %12 : vector<1x128xf32>
    %cst_6 = arith.constant 1.500000e+01 : f32
    %14 = vector.broadcast %cst_6 : f32 to vector<1x128xf32>
    %15 = arith.mulf %13, %14 : vector<1x128xf32>
    %cst_7 = arith.constant 3.100000e+01 : f32
    %16 = vector.broadcast %cst_7 : f32 to vector<1x128xf32>
    %17 = arith.divf %3, %16 : vector<1x128xf32>
    %cst_8 = arith.constant 2.000000e+00 : f32
    %18 = vector.broadcast %cst_8 : f32 to vector<1x128xf32>
    %19 = arith.mulf %18, %17 : vector<1x128xf32>
    %cst_9 = arith.constant 1.000000e+00 : f32
    %20 = vector.broadcast %cst_9 : f32 to vector<1x128xf32>
    %21 = arith.subf %19, %20 : vector<1x128xf32>
    %cst_10 = arith.constant 1.000000e+00 : f32
    %22 = vector.broadcast %cst_10 : f32 to vector<1x128xf32>
    %23 = arith.addf %21, %22 : vector<1x128xf32>
    %cst_11 = arith.constant 5.000000e-01 : f32
    %24 = vector.broadcast %cst_11 : f32 to vector<1x128xf32>
    %25 = arith.mulf %23, %24 : vector<1x128xf32>
    %cst_12 = arith.constant 1.500000e+01 : f32
    %26 = vector.broadcast %cst_12 : f32 to vector<1x128xf32>
    %27 = arith.mulf %25, %26 : vector<1x128xf32>
    %28 = math.floor %15 : vector<1x128xf32>
    %29 = math.floor %27 : vector<1x128xf32>
    %30 = arith.subf %15, %28 : vector<1x128xf32>
    %31 = arith.subf %27, %29 : vector<1x128xf32>
    %32 = arith.fptosi %28 : vector<1x128xf32> to vector<1x128xi32>
    %33 = arith.fptosi %29 : vector<1x128xf32> to vector<1x128xi32>
    %cst_13 = arith.constant 1.000000e+00 : f32
    %34 = vector.broadcast %cst_13 : f32 to vector<1x128xf32>
    %35 = arith.addf %30, %34 : vector<1x128xf32>
    %cst_14 = arith.constant -7.500000e-01 : f32
    %36 = vector.broadcast %cst_14 : f32 to vector<1x128xf32>
    %37 = arith.mulf %36, %35 : vector<1x128xf32>
    %cst_15 = arith.constant -3.750000e+00 : f32
    %38 = vector.broadcast %cst_15 : f32 to vector<1x128xf32>
    %39 = arith.subf %37, %38 : vector<1x128xf32>
    %40 = arith.mulf %39, %35 : vector<1x128xf32>
    %cst_16 = arith.constant -6.000000e+00 : f32
    %41 = vector.broadcast %cst_16 : f32 to vector<1x128xf32>
    %42 = arith.addf %40, %41 : vector<1x128xf32>
    %43 = arith.mulf %42, %35 : vector<1x128xf32>
    %cst_17 = arith.constant -3.000000e+00 : f32
    %44 = vector.broadcast %cst_17 : f32 to vector<1x128xf32>
    %45 = arith.subf %43, %44 : vector<1x128xf32>
    %cst_18 = arith.constant 1.250000e+00 : f32
    %46 = vector.broadcast %cst_18 : f32 to vector<1x128xf32>
    %47 = arith.mulf %46, %30 : vector<1x128xf32>
    %cst_19 = arith.constant 2.250000e+00 : f32
    %48 = vector.broadcast %cst_19 : f32 to vector<1x128xf32>
    %49 = arith.subf %47, %48 : vector<1x128xf32>
    %50 = arith.mulf %49, %30 : vector<1x128xf32>
    %51 = arith.mulf %50, %30 : vector<1x128xf32>
    %cst_20 = arith.constant 1.000000e+00 : f32
    %52 = vector.broadcast %cst_20 : f32 to vector<1x128xf32>
    %53 = arith.addf %51, %52 : vector<1x128xf32>
    %cst_21 = arith.constant 1.000000e+00 : f32
    %54 = vector.broadcast %cst_21 : f32 to vector<1x128xf32>
    %55 = arith.subf %54, %30 : vector<1x128xf32>
    %cst_22 = arith.constant 1.250000e+00 : f32
    %56 = vector.broadcast %cst_22 : f32 to vector<1x128xf32>
    %57 = arith.mulf %56, %55 : vector<1x128xf32>
    %cst_23 = arith.constant 2.250000e+00 : f32
    %58 = vector.broadcast %cst_23 : f32 to vector<1x128xf32>
    %59 = arith.subf %57, %58 : vector<1x128xf32>
    %60 = arith.mulf %59, %55 : vector<1x128xf32>
    %61 = arith.mulf %60, %55 : vector<1x128xf32>
    %cst_24 = arith.constant 1.000000e+00 : f32
    %62 = vector.broadcast %cst_24 : f32 to vector<1x128xf32>
    %63 = arith.addf %61, %62 : vector<1x128xf32>
    %cst_25 = arith.constant 2.000000e+00 : f32
    %64 = vector.broadcast %cst_25 : f32 to vector<1x128xf32>
    %65 = arith.subf %64, %30 : vector<1x128xf32>
    %cst_26 = arith.constant -7.500000e-01 : f32
    %66 = vector.broadcast %cst_26 : f32 to vector<1x128xf32>
    %67 = arith.mulf %66, %65 : vector<1x128xf32>
    %cst_27 = arith.constant -3.750000e+00 : f32
    %68 = vector.broadcast %cst_27 : f32 to vector<1x128xf32>
    %69 = arith.subf %67, %68 : vector<1x128xf32>
    %70 = arith.mulf %69, %65 : vector<1x128xf32>
    %cst_28 = arith.constant -6.000000e+00 : f32
    %71 = vector.broadcast %cst_28 : f32 to vector<1x128xf32>
    %72 = arith.addf %70, %71 : vector<1x128xf32>
    %73 = arith.mulf %72, %65 : vector<1x128xf32>
    %cst_29 = arith.constant -3.000000e+00 : f32
    %74 = vector.broadcast %cst_29 : f32 to vector<1x128xf32>
    %75 = arith.subf %73, %74 : vector<1x128xf32>
    %cst_30 = arith.constant 1.000000e+00 : f32
    %76 = vector.broadcast %cst_30 : f32 to vector<1x128xf32>
    %77 = arith.addf %31, %76 : vector<1x128xf32>
    %cst_31 = arith.constant -7.500000e-01 : f32
    %78 = vector.broadcast %cst_31 : f32 to vector<1x128xf32>
    %79 = arith.mulf %78, %77 : vector<1x128xf32>
    %cst_32 = arith.constant -3.750000e+00 : f32
    %80 = vector.broadcast %cst_32 : f32 to vector<1x128xf32>
    %81 = arith.subf %79, %80 : vector<1x128xf32>
    %82 = arith.mulf %81, %77 : vector<1x128xf32>
    %cst_33 = arith.constant -6.000000e+00 : f32
    %83 = vector.broadcast %cst_33 : f32 to vector<1x128xf32>
    %84 = arith.addf %82, %83 : vector<1x128xf32>
    %85 = arith.mulf %84, %77 : vector<1x128xf32>
    %cst_34 = arith.constant -3.000000e+00 : f32
    %86 = vector.broadcast %cst_34 : f32 to vector<1x128xf32>
    %87 = arith.subf %85, %86 : vector<1x128xf32>
    %cst_35 = arith.constant 1.250000e+00 : f32
    %88 = vector.broadcast %cst_35 : f32 to vector<1x128xf32>
    %89 = arith.mulf %88, %31 : vector<1x128xf32>
    %cst_36 = arith.constant 2.250000e+00 : f32
    %90 = vector.broadcast %cst_36 : f32 to vector<1x128xf32>
    %91 = arith.subf %89, %90 : vector<1x128xf32>
    %92 = arith.mulf %91, %31 : vector<1x128xf32>
    %93 = arith.mulf %92, %31 : vector<1x128xf32>
    %cst_37 = arith.constant 1.000000e+00 : f32
    %94 = vector.broadcast %cst_37 : f32 to vector<1x128xf32>
    %95 = arith.addf %93, %94 : vector<1x128xf32>
    %cst_38 = arith.constant 1.000000e+00 : f32
    %96 = vector.broadcast %cst_38 : f32 to vector<1x128xf32>
    %97 = arith.subf %96, %31 : vector<1x128xf32>
    %cst_39 = arith.constant 1.250000e+00 : f32
    %98 = vector.broadcast %cst_39 : f32 to vector<1x128xf32>
    %99 = arith.mulf %98, %97 : vector<1x128xf32>
    %cst_40 = arith.constant 2.250000e+00 : f32
    %100 = vector.broadcast %cst_40 : f32 to vector<1x128xf32>
    %101 = arith.subf %99, %100 : vector<1x128xf32>
    %102 = arith.mulf %101, %97 : vector<1x128xf32>
    %103 = arith.mulf %102, %97 : vector<1x128xf32>
    %cst_41 = arith.constant 1.000000e+00 : f32
    %104 = vector.broadcast %cst_41 : f32 to vector<1x128xf32>
    %105 = arith.addf %103, %104 : vector<1x128xf32>
    %cst_42 = arith.constant 2.000000e+00 : f32
    %106 = vector.broadcast %cst_42 : f32 to vector<1x128xf32>
    %107 = arith.subf %106, %31 : vector<1x128xf32>
    %cst_43 = arith.constant -7.500000e-01 : f32
    %108 = vector.broadcast %cst_43 : f32 to vector<1x128xf32>
    %109 = arith.mulf %108, %107 : vector<1x128xf32>
    %cst_44 = arith.constant -3.750000e+00 : f32
    %110 = vector.broadcast %cst_44 : f32 to vector<1x128xf32>
    %111 = arith.subf %109, %110 : vector<1x128xf32>
    %112 = arith.mulf %111, %107 : vector<1x128xf32>
    %cst_45 = arith.constant -6.000000e+00 : f32
    %113 = vector.broadcast %cst_45 : f32 to vector<1x128xf32>
    %114 = arith.addf %112, %113 : vector<1x128xf32>
    %115 = arith.mulf %114, %107 : vector<1x128xf32>
    %cst_46 = arith.constant -3.000000e+00 : f32
    %116 = vector.broadcast %cst_46 : f32 to vector<1x128xf32>
    %117 = arith.subf %115, %116 : vector<1x128xf32>
    %118 = tpu.iota {dimensions = array<i32: 0>} : vector<16x128xi32>
    %119 = tpu.iota {dimensions = array<i32: 0>} : vector<16x128xi32>
    %cst_47 = arith.constant 0.000000e+00 : f32
    %120 = vector.broadcast %cst_47 : f32 to vector<16x128xf32>
    %cst_48 = arith.constant 0.000000e+00 : f32
    %121 = vector.broadcast %cst_48 : f32 to vector<16x128xf32>
    %c1_i32 = arith.constant 1 : i32
    %122 = vector.broadcast %c1_i32 : i32 to vector<1x128xi32>
    %123 = arith.subi %33, %122 : vector<1x128xi32>
    %c0_i32 = arith.constant 0 : i32
    %124 = vector.broadcast %c0_i32 : i32 to vector<1x128xi32>
    %125 = arith.addi %123, %124 : vector<1x128xi32>
    %126 = vector.broadcast %125 : vector<1x128xi32> to vector<16x128xi32>
    %127 = arith.cmpi eq, %118, %126 : vector<16x128xi32>
    %cst_49 = arith.constant 0.000000e+00 : f32
    %128 = vector.shape_cast %87 : vector<1x128xf32> to vector<1x128xf32>
    %129 = vector.broadcast %128 : vector<1x128xf32> to vector<16x128xf32>
    %130 = vector.broadcast %cst_49 : f32 to vector<16x128xf32>
    %131 = arith.select %127, %129, %130 : vector<16x128xi1>, vector<16x128xf32>
    %132 = arith.addf %120, %131 : vector<16x128xf32>
    %c1_i32_50 = arith.constant 1 : i32
    %133 = vector.broadcast %c1_i32_50 : i32 to vector<1x128xi32>
    %134 = arith.subi %32, %133 : vector<1x128xi32>
    %c0_i32_51 = arith.constant 0 : i32
    %135 = vector.broadcast %c0_i32_51 : i32 to vector<1x128xi32>
    %136 = arith.addi %134, %135 : vector<1x128xi32>
    %137 = vector.broadcast %136 : vector<1x128xi32> to vector<16x128xi32>
    %138 = arith.cmpi eq, %119, %137 : vector<16x128xi32>
    %cst_52 = arith.constant 0.000000e+00 : f32
    %139 = vector.shape_cast %45 : vector<1x128xf32> to vector<1x128xf32>
    %140 = vector.broadcast %139 : vector<1x128xf32> to vector<16x128xf32>
    %141 = vector.broadcast %cst_52 : f32 to vector<16x128xf32>
    %142 = arith.select %138, %140, %141 : vector<16x128xi1>, vector<16x128xf32>
    %143 = arith.addf %121, %142 : vector<16x128xf32>
    %c1_i32_53 = arith.constant 1 : i32
    %144 = vector.broadcast %c1_i32_53 : i32 to vector<1x128xi32>
    %145 = arith.subi %33, %144 : vector<1x128xi32>
    %c1_i32_54 = arith.constant 1 : i32
    %146 = vector.broadcast %c1_i32_54 : i32 to vector<1x128xi32>
    %147 = arith.addi %145, %146 : vector<1x128xi32>
    %148 = vector.broadcast %147 : vector<1x128xi32> to vector<16x128xi32>
    %149 = arith.cmpi eq, %118, %148 : vector<16x128xi32>
    %cst_55 = arith.constant 0.000000e+00 : f32
    %150 = vector.shape_cast %95 : vector<1x128xf32> to vector<1x128xf32>
    %151 = vector.broadcast %150 : vector<1x128xf32> to vector<16x128xf32>
    %152 = vector.broadcast %cst_55 : f32 to vector<16x128xf32>
    %153 = arith.select %149, %151, %152 : vector<16x128xi1>, vector<16x128xf32>
    %154 = arith.addf %132, %153 : vector<16x128xf32>
    %c1_i32_56 = arith.constant 1 : i32
    %155 = vector.broadcast %c1_i32_56 : i32 to vector<1x128xi32>
    %156 = arith.subi %32, %155 : vector<1x128xi32>
    %c1_i32_57 = arith.constant 1 : i32
    %157 = vector.broadcast %c1_i32_57 : i32 to vector<1x128xi32>
    %158 = arith.addi %156, %157 : vector<1x128xi32>
    %159 = vector.broadcast %158 : vector<1x128xi32> to vector<16x128xi32>
    %160 = arith.cmpi eq, %119, %159 : vector<16x128xi32>
    %cst_58 = arith.constant 0.000000e+00 : f32
    %161 = vector.shape_cast %53 : vector<1x128xf32> to vector<1x128xf32>
    %162 = vector.broadcast %161 : vector<1x128xf32> to vector<16x128xf32>
    %163 = vector.broadcast %cst_58 : f32 to vector<16x128xf32>
    %164 = arith.select %160, %162, %163 : vector<16x128xi1>, vector<16x128xf32>
    %165 = arith.addf %143, %164 : vector<16x128xf32>
    %c1_i32_59 = arith.constant 1 : i32
    %166 = vector.broadcast %c1_i32_59 : i32 to vector<1x128xi32>
    %167 = arith.subi %33, %166 : vector<1x128xi32>
    %c2_i32 = arith.constant 2 : i32
    %168 = vector.broadcast %c2_i32 : i32 to vector<1x128xi32>
    %169 = arith.addi %167, %168 : vector<1x128xi32>
    %170 = vector.broadcast %169 : vector<1x128xi32> to vector<16x128xi32>
    %171 = arith.cmpi eq, %118, %170 : vector<16x128xi32>
    %cst_60 = arith.constant 0.000000e+00 : f32
    %172 = vector.shape_cast %105 : vector<1x128xf32> to vector<1x128xf32>
    %173 = vector.broadcast %172 : vector<1x128xf32> to vector<16x128xf32>
    %174 = vector.broadcast %cst_60 : f32 to vector<16x128xf32>
    %175 = arith.select %171, %173, %174 : vector<16x128xi1>, vector<16x128xf32>
    %176 = arith.addf %154, %175 : vector<16x128xf32>
    %c1_i32_61 = arith.constant 1 : i32
    %177 = vector.broadcast %c1_i32_61 : i32 to vector<1x128xi32>
    %178 = arith.subi %32, %177 : vector<1x128xi32>
    %c2_i32_62 = arith.constant 2 : i32
    %179 = vector.broadcast %c2_i32_62 : i32 to vector<1x128xi32>
    %180 = arith.addi %178, %179 : vector<1x128xi32>
    %181 = vector.broadcast %180 : vector<1x128xi32> to vector<16x128xi32>
    %182 = arith.cmpi eq, %119, %181 : vector<16x128xi32>
    %cst_63 = arith.constant 0.000000e+00 : f32
    %183 = vector.shape_cast %63 : vector<1x128xf32> to vector<1x128xf32>
    %184 = vector.broadcast %183 : vector<1x128xf32> to vector<16x128xf32>
    %185 = vector.broadcast %cst_63 : f32 to vector<16x128xf32>
    %186 = arith.select %182, %184, %185 : vector<16x128xi1>, vector<16x128xf32>
    %187 = arith.addf %165, %186 : vector<16x128xf32>
    %c1_i32_64 = arith.constant 1 : i32
    %188 = vector.broadcast %c1_i32_64 : i32 to vector<1x128xi32>
    %189 = arith.subi %33, %188 : vector<1x128xi32>
    %c3_i32 = arith.constant 3 : i32
    %190 = vector.broadcast %c3_i32 : i32 to vector<1x128xi32>
    %191 = arith.addi %189, %190 : vector<1x128xi32>
    %192 = vector.broadcast %191 : vector<1x128xi32> to vector<16x128xi32>
    %193 = arith.cmpi eq, %118, %192 : vector<16x128xi32>
    %cst_65 = arith.constant 0.000000e+00 : f32
    %194 = vector.shape_cast %117 : vector<1x128xf32> to vector<1x128xf32>
    %195 = vector.broadcast %194 : vector<1x128xf32> to vector<16x128xf32>
    %196 = vector.broadcast %cst_65 : f32 to vector<16x128xf32>
    %197 = arith.select %193, %195, %196 : vector<16x128xi1>, vector<16x128xf32>
    %198 = arith.addf %176, %197 : vector<16x128xf32>
    %c1_i32_66 = arith.constant 1 : i32
    %199 = vector.broadcast %c1_i32_66 : i32 to vector<1x128xi32>
    %200 = arith.subi %32, %199 : vector<1x128xi32>
    %c3_i32_67 = arith.constant 3 : i32
    %201 = vector.broadcast %c3_i32_67 : i32 to vector<1x128xi32>
    %202 = arith.addi %200, %201 : vector<1x128xi32>
    %203 = vector.broadcast %202 : vector<1x128xi32> to vector<16x128xi32>
    %204 = arith.cmpi eq, %119, %203 : vector<16x128xi32>
    %cst_68 = arith.constant 0.000000e+00 : f32
    %205 = vector.shape_cast %75 : vector<1x128xf32> to vector<1x128xf32>
    %206 = vector.broadcast %205 : vector<1x128xf32> to vector<16x128xf32>
    %207 = vector.broadcast %cst_68 : f32 to vector<16x128xf32>
    %208 = arith.select %204, %206, %207 : vector<16x128xi1>, vector<16x128xf32>
    %209 = arith.addf %187, %208 : vector<16x128xf32>
    %c0_69 = arith.constant 0 : index
    %c0_70 = arith.constant 0 : index
    %c0_71 = arith.constant 0 : index
    %210 = vector.load %arg3[%c0_69, %c0_70, %c0_71] : memref<1x16x2048xf32, #tpu.memory_space<vmem>>, vector<1x16x2048xf32>
    %211 = vector.shape_cast %210 : vector<1x16x2048xf32> to vector<16x2048xf32>
    %212 = tpu.transpose %198, [1, 0] : vector<16x128xf32> -> vector<128x16xf32>
    %cst_72 = arith.constant dense<0.000000e+00> : vector<128x2048xf32>
    %213 = tpu.matmul %212, %211, %cst_72 {dimension_numbers = #tpu.dot_dimension_numbers<[1], [0], [0], [1], [0, 0, 1, 1], [], []>} : vector<128x16xf32>, vector<16x2048xf32>, vector<128x2048xf32> -> vector<128x2048xf32>
    %214 = tpu.transpose %209, [1, 0] : vector<16x128xf32> -> vector<128x16xf32>
    %cst_73 = arith.constant 0.000000e+00 : f32
    %215 = vector.broadcast %cst_73 : f32 to vector<128x128xf32>
    %216 = vector.extract_strided_slice %214 {offsets = [0, 0], sizes = [128, 1], strides = [1, 1]} : vector<128x16xf32> to vector<128x1xf32>
    %217 = vector.extract_strided_slice %213 {offsets = [0, 0], sizes = [128, 128], strides = [1, 1]} : vector<128x2048xf32> to vector<128x128xf32>
    %218 = vector.broadcast %216 : vector<128x1xf32> to vector<128x128xf32>
    %219 = arith.mulf %218, %217 : vector<128x128xf32>
    %220 = arith.addf %215, %219 : vector<128x128xf32>
    %221 = vector.extract_strided_slice %214 {offsets = [0, 1], sizes = [128, 1], strides = [1, 1]} : vector<128x16xf32> to vector<128x1xf32>
    %222 = vector.extract_strided_slice %213 {offsets = [0, 128], sizes = [128, 128], strides = [1, 1]} : vector<128x2048xf32> to vector<128x128xf32>
    %223 = vector.broadcast %221 : vector<128x1xf32> to vector<128x128xf32>
    %224 = arith.mulf %223, %222 : vector<128x128xf32>
    %225 = arith.addf %220, %224 : vector<128x128xf32>
    %226 = vector.extract_strided_slice %214 {offsets = [0, 2], sizes = [128, 1], strides = [1, 1]} : vector<128x16xf32> to vector<128x1xf32>
    %227 = vector.extract_strided_slice %213 {offsets = [0, 256], sizes = [128, 128], strides = [1, 1]} : vector<128x2048xf32> to vector<128x128xf32>
    %228 = vector.broadcast %226 : vector<128x1xf32> to vector<128x128xf32>
    %229 = arith.mulf %228, %227 : vector<128x128xf32>
    %230 = arith.addf %225, %229 : vector<128x128xf32>
    %231 = vector.extract_strided_slice %214 {offsets = [0, 3], sizes = [128, 1], strides = [1, 1]} : vector<128x16xf32> to vector<128x1xf32>
    %232 = vector.extract_strided_slice %213 {offsets = [0, 384], sizes = [128, 128], strides = [1, 1]} : vector<128x2048xf32> to vector<128x128xf32>
    %233 = vector.broadcast %231 : vector<128x1xf32> to vector<128x128xf32>
    %234 = arith.mulf %233, %232 : vector<128x128xf32>
    %235 = arith.addf %230, %234 : vector<128x128xf32>
    %236 = vector.extract_strided_slice %214 {offsets = [0, 4], sizes = [128, 1], strides = [1, 1]} : vector<128x16xf32> to vector<128x1xf32>
    %237 = vector.extract_strided_slice %213 {offsets = [0, 512], sizes = [128, 128], strides = [1, 1]} : vector<128x2048xf32> to vector<128x128xf32>
    %238 = vector.broadcast %236 : vector<128x1xf32> to vector<128x128xf32>
    %239 = arith.mulf %238, %237 : vector<128x128xf32>
    %240 = arith.addf %235, %239 : vector<128x128xf32>
    %241 = vector.extract_strided_slice %214 {offsets = [0, 5], sizes = [128, 1], strides = [1, 1]} : vector<128x16xf32> to vector<128x1xf32>
    %242 = vector.extract_strided_slice %213 {offsets = [0, 640], sizes = [128, 128], strides = [1, 1]} : vector<128x2048xf32> to vector<128x128xf32>
    %243 = vector.broadcast %241 : vector<128x1xf32> to vector<128x128xf32>
    %244 = arith.mulf %243, %242 : vector<128x128xf32>
    %245 = arith.addf %240, %244 : vector<128x128xf32>
    %246 = vector.extract_strided_slice %214 {offsets = [0, 6], sizes = [128, 1], strides = [1, 1]} : vector<128x16xf32> to vector<128x1xf32>
    %247 = vector.extract_strided_slice %213 {offsets = [0, 768], sizes = [128, 128], strides = [1, 1]} : vector<128x2048xf32> to vector<128x128xf32>
    %248 = vector.broadcast %246 : vector<128x1xf32> to vector<128x128xf32>
    %249 = arith.mulf %248, %247 : vector<128x128xf32>
    %250 = arith.addf %245, %249 : vector<128x128xf32>
    %251 = vector.extract_strided_slice %214 {offsets = [0, 7], sizes = [128, 1], strides = [1, 1]} : vector<128x16xf32> to vector<128x1xf32>
    %252 = vector.extract_strided_slice %213 {offsets = [0, 896], sizes = [128, 128], strides = [1, 1]} : vector<128x2048xf32> to vector<128x128xf32>
    %253 = vector.broadcast %251 : vector<128x1xf32> to vector<128x128xf32>
    %254 = arith.mulf %253, %252 : vector<128x128xf32>
    %255 = arith.addf %250, %254 : vector<128x128xf32>
    %256 = vector.extract_strided_slice %214 {offsets = [0, 8], sizes = [128, 1], strides = [1, 1]} : vector<128x16xf32> to vector<128x1xf32>
    %257 = vector.extract_strided_slice %213 {offsets = [0, 1024], sizes = [128, 128], strides = [1, 1]} : vector<128x2048xf32> to vector<128x128xf32>
    %258 = vector.broadcast %256 : vector<128x1xf32> to vector<128x128xf32>
    %259 = arith.mulf %258, %257 : vector<128x128xf32>
    %260 = arith.addf %255, %259 : vector<128x128xf32>
    %261 = vector.extract_strided_slice %214 {offsets = [0, 9], sizes = [128, 1], strides = [1, 1]} : vector<128x16xf32> to vector<128x1xf32>
    %262 = vector.extract_strided_slice %213 {offsets = [0, 1152], sizes = [128, 128], strides = [1, 1]} : vector<128x2048xf32> to vector<128x128xf32>
    %263 = vector.broadcast %261 : vector<128x1xf32> to vector<128x128xf32>
    %264 = arith.mulf %263, %262 : vector<128x128xf32>
    %265 = arith.addf %260, %264 : vector<128x128xf32>
    %266 = vector.extract_strided_slice %214 {offsets = [0, 10], sizes = [128, 1], strides = [1, 1]} : vector<128x16xf32> to vector<128x1xf32>
    %267 = vector.extract_strided_slice %213 {offsets = [0, 1280], sizes = [128, 128], strides = [1, 1]} : vector<128x2048xf32> to vector<128x128xf32>
    %268 = vector.broadcast %266 : vector<128x1xf32> to vector<128x128xf32>
    %269 = arith.mulf %268, %267 : vector<128x128xf32>
    %270 = arith.addf %265, %269 : vector<128x128xf32>
    %271 = vector.extract_strided_slice %214 {offsets = [0, 11], sizes = [128, 1], strides = [1, 1]} : vector<128x16xf32> to vector<128x1xf32>
    %272 = vector.extract_strided_slice %213 {offsets = [0, 1408], sizes = [128, 128], strides = [1, 1]} : vector<128x2048xf32> to vector<128x128xf32>
    %273 = vector.broadcast %271 : vector<128x1xf32> to vector<128x128xf32>
    %274 = arith.mulf %273, %272 : vector<128x128xf32>
    %275 = arith.addf %270, %274 : vector<128x128xf32>
    %276 = vector.extract_strided_slice %214 {offsets = [0, 12], sizes = [128, 1], strides = [1, 1]} : vector<128x16xf32> to vector<128x1xf32>
    %277 = vector.extract_strided_slice %213 {offsets = [0, 1536], sizes = [128, 128], strides = [1, 1]} : vector<128x2048xf32> to vector<128x128xf32>
    %278 = vector.broadcast %276 : vector<128x1xf32> to vector<128x128xf32>
    %279 = arith.mulf %278, %277 : vector<128x128xf32>
    %280 = arith.addf %275, %279 : vector<128x128xf32>
    %281 = vector.extract_strided_slice %214 {offsets = [0, 13], sizes = [128, 1], strides = [1, 1]} : vector<128x16xf32> to vector<128x1xf32>
    %282 = vector.extract_strided_slice %213 {offsets = [0, 1664], sizes = [128, 128], strides = [1, 1]} : vector<128x2048xf32> to vector<128x128xf32>
    %283 = vector.broadcast %281 : vector<128x1xf32> to vector<128x128xf32>
    %284 = arith.mulf %283, %282 : vector<128x128xf32>
    %285 = arith.addf %280, %284 : vector<128x128xf32>
    %286 = vector.extract_strided_slice %214 {offsets = [0, 14], sizes = [128, 1], strides = [1, 1]} : vector<128x16xf32> to vector<128x1xf32>
    %287 = vector.extract_strided_slice %213 {offsets = [0, 1792], sizes = [128, 128], strides = [1, 1]} : vector<128x2048xf32> to vector<128x128xf32>
    %288 = vector.broadcast %286 : vector<128x1xf32> to vector<128x128xf32>
    %289 = arith.mulf %288, %287 : vector<128x128xf32>
    %290 = arith.addf %285, %289 : vector<128x128xf32>
    %291 = vector.extract_strided_slice %214 {offsets = [0, 15], sizes = [128, 1], strides = [1, 1]} : vector<128x16xf32> to vector<128x1xf32>
    %292 = vector.extract_strided_slice %213 {offsets = [0, 1920], sizes = [128, 128], strides = [1, 1]} : vector<128x2048xf32> to vector<128x128xf32>
    %293 = vector.broadcast %291 : vector<128x1xf32> to vector<128x128xf32>
    %294 = arith.mulf %293, %292 : vector<128x128xf32>
    %295 = arith.addf %290, %294 : vector<128x128xf32>
    %c0_74 = arith.constant 0 : index
    %c0_75 = arith.constant 0 : index
    %c0_76 = arith.constant 0 : index
    %296 = vector.load %arg4[%c0_74, %c0_75, %c0_76] : memref<1x128x128xf32, #tpu.memory_space<vmem>>, vector<1x128x128xf32>
    %297 = vector.shape_cast %296 : vector<1x128x128xf32> to vector<128x128xf32>
    %298 = vector.shape_cast %295 : vector<128x128xf32> to vector<1x128x128xf32>
    tpu.vector_store %arg4[%c0_74, %c0_75, %c0_76], %298 {strides = array<i32>} : memref<1x128x128xf32, #tpu.memory_space<vmem>>, vector<1x128x128xf32>,
    return
  }
  func.func @transform_0(%arg0: i32, %arg1: i32) -> (i32, i32, i32) {
    %c0_i32 = arith.constant 0 : i32
    %c0_i32_0 = arith.constant 0 : i32
    return %arg0, %c0_i32, %arg1 : i32, i32, i32
  }
  func.func @transform_1(%arg0: i32, %arg1: i32) -> (i32, i32, i32) {
    %c0_i32 = arith.constant 0 : i32
    %c0_i32_0 = arith.constant 0 : i32
    %c0_i32_1 = arith.constant 0 : i32
    return %arg0, %c0_i32, %c0_i32_0 : i32, i32, i32
  }
  func.func @transform_2(%arg0: i32, %arg1: i32) -> (i32, i32, i32) {
    %c0_i32 = arith.constant 0 : i32
    %c0_i32_0 = arith.constant 0 : i32
    return %arg0, %arg1, %c0_i32 : i32, i32, i32
  }
}

</mosaic_0001>

<llo_original>
// kernel: tpu_custom_call.1
$region0: #{tpu_custom_call.1}
  #allocation0 [shape = 'u32[]', space=smem, size = 0x4, offset = 0x4, fixed_abs, tag = 'smem constant byte address 0x4 - core index']
  #allocation1 [shape = 'u32[144,128]{1,0:T(1,128)}', space=vmem, size = 0x12000, scoped, tag = 'internal scratch']
  %s0 = inlined_call_operand.hbm [shape: f32[2,2,128], index: 0, kind: input, shape index: {}]
  %s1 = inlined_call_operand.hbm [shape: f32[2,16,2048], index: 1, kind: input, shape index: {}]
  %s2 = inlined_call_operand.hbm [shape: f32[2,128,128], index: 2, kind: output, shape index: {}]
  %s3 = sld [smem:[#allocation0]]
  $region49: #{tpu_custom_call.1} parent=0
    _
  %s5 = ssub.s32 1, %s3
  %s6 = scalar_select 0, %s5, %s3
  $region1: #{tpu_custom_call.1} parent=0
    #allocation2 [shape = 'u8[2048]{0}', space=vmem, size = 0x800, scoped, tag = 'input window, operand 0']
    #allocation3 [shape = 's32[2]{0}', space=sflag, size = 0x8, scoped, tag = 'scoped memory for tpu_custom_call.1']
    #allocation4 [shape = 's32[2]{0}', space=sflag, size = 0x8, scoped, tag = 'scoped memory for tpu_custom_call.1']
    #allocation5 [shape = 'u8[262144]{0}', space=vmem, size = 0x40000, scoped, tag = 'input window, operand 1']
    #allocation6 [shape = 's32[2]{0}', space=sflag, size = 0x8, scoped, tag = 'scoped memory for tpu_custom_call.1']
    #allocation7 [shape = 'u8[131072]{0}', space=vmem, size = 0x20000, scoped, tag = 'output window, operand 0']
    %7 = vsyncpa [#allocation3], 0
    %s8 = scalar_lea.sflag [#allocation3], 1
    %9 = vsyncpa %s8, 0
    %10 = vsyncpa [#allocation6], 0
    %s11 = scalar_lea.sflag [#allocation6], 1
    %12 = vsyncpa %s11, 0
    %13 = vsyncpa [#allocation4], 0
    %s14 = scalar_lea.sflag [#allocation4], 1
    %15 = vsyncpa %s14, 0
    loop: start=0, step=1, limit=4
    $region2: #{tpu_custom_call.1} parent=1 // loop_pre_header
      _
    $region3: #{tpu_custom_call.1} parent=1 // loop_header
      %s17 = sphi 0, %s21
      %p18 = scmp.ge.s32.totalorder %s17, 4
      %s24 = sphi 0, %s36
      %s25 = sphi 0, %s32
      %s26 = sphi 0, %s24
      %s27 = sphi 0, %s25
      %s28 = sphi 0, %s26
      %s29 = sphi 0, %s27
      %s41 = sphi 0, %s43
      %s44 = sphi 0, %s41
      %s45 = sphi 0, %s44
      %s61 = sphi 0, %s45
      %s67 = sphi 0, %s69
      %s70 = sphi 0, %s67
      %s71 = sphi 0, %s70
      %s87 = sphi 0, %s71
      %s95 = sphi 0, %s97
      %s98 = sphi 0, %s95
      %s99 = sphi 0, %s98
      %s115 = sphi 0, %s99
    $region4: #{tpu_custom_call.1} parent=1 // loop_header_branch
      %20 = sbr.rel (%p18) target = $region8
    $region5: #{tpu_custom_call.1} parent=1 // loop_body
      %s22 = ssub.s32 %s17, 1
      %s23 = ssub.s32 %s17, 2
      %s30 = sadd.s32 1, %s25
      %p31 = scmp.ge.s32.totalorder %s30, 1
      %s32 = scalar_select %p31, 0, %s30
      %s33 = sadd.s32 1, %s24
      %s34 = scalar_select %p31, %s33, %s24
      %p35 = scmp.ge.s32.totalorder %s34, 2
      %s36 = scalar_select %p35, 0, %s34
      %s37 = ssub.s32 %s24, %s36
      %s38 = ssub.s32 %s25, %s32
      %s39 = sor.u32 %s37, %s38
      %p40 = scmp.eq.s32.totalorder %s39, 0
      %s42 = sadd.s32 %s41, 1
      %s43 = scalar_select %p40, %s41, %s42
      %p46 = pneg %p40
      %p47 = scmp.eq.s32.totalorder %s17, 1
      %p48 = por %p46, %p47
      %p49 = scmp.ne.s32.totalorder %s41, %s44
      %p50 = scmp.eq.s32.totalorder %s17, 0
      %p51 = por %p49, %p50
      %p52 = scmp.ne.s32.totalorder %s41, %s44
      %p53 = scmp.eq.s32.totalorder %s22, 1
      %p54 = por %p52, %p53
      %p55 = scmp.ne.s32.totalorder %s44, %s45
      %p56 = scmp.eq.s32.totalorder %s22, 0
      %p57 = por %p55, %p56
      %p58 = scmp.ne.s32.totalorder %s44, %s45
      %p59 = scmp.eq.s32.totalorder %s23, 1
      %p60 = por %p58, %p59
      %p62 = scmp.ne.s32.totalorder %s45, %s61
      %p63 = scmp.eq.s32.totalorder %s23, 0
      %p64 = por %p62, %p63
      %s65 = ssub.s32 %s24, %s36
      %p66 = scmp.eq.s32.totalorder %s65, 0
      %s68 = sadd.s32 %s67, 1
      %s69 = scalar_select %p66, %s67, %s68
      %p72 = pneg %p66
      %p73 = scmp.eq.s32.totalorder %s17, 1
      %p74 = por %p72, %p73
      %p75 = scmp.ne.s32.totalorder %s67, %s70
      %p76 = scmp.eq.s32.totalorder %s17, 0
      %p77 = por %p75, %p76
      %p78 = scmp.ne.s32.totalorder %s67, %s70
      %p79 = scmp.eq.s32.totalorder %s22, 1
      %p80 = por %p78, %p79
      %p81 = scmp.ne.s32.totalorder %s70, %s71
      %p82 = scmp.eq.s32.totalorder %s22, 0
      %p83 = por %p81, %p82
      %p84 = scmp.ne.s32.totalorder %s70, %s71
      %p85 = scmp.eq.s32.totalorder %s23, 1
      %p86 = por %p84, %p85
      %p88 = scmp.ne.s32.totalorder %s71, %s87
      %p89 = scmp.eq.s32.totalorder %s23, 0
      %p90 = por %p88, %p89
      %s91 = ssub.s32 %s24, %s36
      %s92 = ssub.s32 %s25, %s32
      %s93 = sor.u32 %s91, %s92
      %p94 = scmp.eq.s32.totalorder %s93, 0
      %s96 = sadd.s32 %s95, 1
      %s97 = scalar_select %p94, %s95, %s96
      %p100 = pneg %p94
      %p101 = scmp.eq.s32.totalorder %s17, 1
      %p102 = por %p100, %p101
      %p103 = scmp.ne.s32.totalorder %s95, %s98
      %p104 = scmp.eq.s32.totalorder %s17, 0
      %p105 = por %p103, %p104
      %p106 = scmp.ne.s32.totalorder %s95, %s98
      %p107 = scmp.eq.s32.totalorder %s22, 1
      %p108 = por %p106, %p107
      %p109 = scmp.ne.s32.totalorder %s98, %s99
      %p110 = scmp.eq.s32.totalorder %s22, 0
      %p111 = por %p109, %p110
      %p112 = scmp.ne.s32.totalorder %s98, %s99
      %p113 = scmp.eq.s32.totalorder %s23, 1
      %p114 = por %p112, %p113
      %p116 = scmp.ne.s32.totalorder %s99, %s115
      %p117 = scmp.eq.s32.totalorder %s23, 0
      %p118 = por %p116, %p117
      %p119 = scmp.le.s32.totalorder 1, %s17
      %p120 = scmp.lt.s32.totalorder %s17, 3
      %p121 = pnand %p119, %p120
      %p122 = pneg %p121
      // Predicated region
      $region9: #{tpu_custom_call.1} parent=5 // pred_check
        _
      $region10: #{tpu_custom_call.1} parent=5 // pred_check_branch
        %124 = sbr.rel (%p121) target = $region12
      $region11: #{tpu_custom_call.1} parent=5 // pred_region
        %s125 = ssub.s32 %s17, 1
      $region12: #{tpu_custom_call.1} parent=5 // pred_fallthru
        _
      %p126 = scmp.lt.s32.totalorder %s17, 2
      // Predicated region
      $region13: #{tpu_custom_call.1} parent=5 // pred_check
        %p127 = pneg %p126
      $region14: #{tpu_custom_call.1} parent=5 // pred_check_branch
        %129 = sbr.rel (%p127) target = $region16
      $region15: #{tpu_custom_call.1} parent=5 // pred_region
        // Predicated region
        $region17: #{tpu_custom_call.1} parent=15 // pred_check
          %p130 = pneg %p51
        $region18: #{tpu_custom_call.1} parent=15 // pred_check_branch
          %132 = sbr.rel (%p130) target = $region20
        $region19: #{tpu_custom_call.1} parent=15 // pred_region
          %s133 = sand.u32 %s41, 1
          %s134 = scalar_lea.sflag [#allocation3], %s133
          %s135 = sand.u32 %s41, 1
          %s136 = smul.addr %s135, 2
          %s137 = scalar_lea.vmem [#allocation2], %s136
          %s139 = ssub.s32 32, 32
          %140 = vsyncadd %s134, %s139
          %s141 = sadd.s32 %s25, %s24
          %s142 = smul.addr %s141, 32
          %s143 = scalar_lea.hbm %s0, %s142
          %s145 = sshll.u32 %s137, 4
          %s146 = int_to_ptr.vmem [resolvable:$true] %s145
          %148 = dma.hbm_to_vmem [thread:$0]  %s143, 32, %s146, %s134
        $region20: #{tpu_custom_call.1} parent=15 // pred_fallthru
          _
        // Predicated region
        $region21: #{tpu_custom_call.1} parent=15 // pred_check
          %p149 = pneg %p77
        $region22: #{tpu_custom_call.1} parent=15 // pred_check_branch
          %151 = sbr.rel (%p149) target = $region24
        $region23: #{tpu_custom_call.1} parent=15 // pred_region
          %s152 = sand.u32 %s67, 1
          %s153 = scalar_lea.sflag [#allocation6], %s152
          %s154 = sand.u32 %s67, 1
          %s155 = smul.addr %s154, 256
          %s156 = scalar_lea.vmem [#allocation5], %s155
          %s158 = ssub.s32 4096, 4096
          %159 = vsyncadd %s153, %s158
          %s160 = smul.addr %s24, 32
          %s161 = smul.addr %s160, 128
          %s162 = scalar_lea.hbm %s1, %s161
          %s163 = sshll.u32 %s156, 4
          %s164 = int_to_ptr.vmem [resolvable:$true] %s163
          %169 = dma.hbm_to_vmem [thread:$0]  %s162, 4096, %s164, %s153, 2048, 2048, 128
        $region24: #{tpu_custom_call.1} parent=15 // pred_fallthru
          _
      $region16: #{tpu_custom_call.1} parent=5 // pred_fallthru
        _
      %p170 = scmp.le.s32.totalorder 1, %s17
      %p171 = scmp.lt.s32.totalorder %s17, 3
      %p172 = pnand %p170, %p171
      %p173 = pneg %p172
      // Predicated region
      $region25: #{tpu_custom_call.1} parent=5 // pred_check
        _
      $region26: #{tpu_custom_call.1} parent=5 // pred_check_branch
        %175 = sbr.rel (%p172) target = $region28
      $region27: #{tpu_custom_call.1} parent=5 // pred_region
        %s176 = ssub.s32 %s17, 1
        %s177 = sand.u32 %s44, 1
        %s178 = scalar_lea.sflag [#allocation3], %s177
        %s179 = sand.u32 %s44, 1
        %s180 = smul.addr %s179, 2
        %s181 = scalar_lea.vmem [#allocation2], %s180
        // Predicated region
        $region29: #{tpu_custom_call.1} parent=27 // pred_check
          %p182 = pneg %p57
        $region30: #{tpu_custom_call.1} parent=27 // pred_check_branch
          %184 = sbr.rel (%p182) target = $region32
        $region31: #{tpu_custom_call.1} parent=27 // pred_region
          %185 = dma.done %s178, 32
        $region32: #{tpu_custom_call.1} parent=27 // pred_fallthru
          _
        %s186 = sand.u32 %s70, 1
        %s187 = scalar_lea.sflag [#allocation6], %s186
        %s188 = sand.u32 %s70, 1
        %s189 = smul.addr %s188, 256
        %s190 = scalar_lea.vmem [#allocation5], %s189
        // Predicated region
        $region33: #{tpu_custom_call.1} parent=27 // pred_check
          %p191 = pneg %p83
        $region34: #{tpu_custom_call.1} parent=27 // pred_check_branch
          %193 = sbr.rel (%p191) target = $region36
        $region35: #{tpu_custom_call.1} parent=27 // pred_region
          %194 = dma.done %s187, 4096
        $region36: #{tpu_custom_call.1} parent=27 // pred_fallthru
          _
        %s195 = sand.u32 %s44, 1
        %s196 = scalar_lea.sflag [#allocation3], %s195
        %s197 = sand.u32 %s44, 1
        %s198 = smul.addr %s197, 2
        %s199 = scalar_lea.vmem [#allocation2], %s198
        %p200 = pneg %p57
        %p201 = pneg %p54
        %s202 = sand.u32 %s70, 1
        %s203 = scalar_lea.sflag [#allocation6], %s202
        %s204 = sand.u32 %s70, 1
        %s205 = smul.addr %s204, 256
        %s206 = scalar_lea.vmem [#allocation5], %s205
        %p207 = pneg %p83
        %p208 = pneg %p80
        %p209 = pneg %p111
        %p210 = pneg %p108
        %s211 = sand.u32 %s98, 1
        %s212 = scalar_lea.sflag [#allocation4], %s211
        %s213 = sand.u32 %s98, 1
        %s214 = smul.addr %s213, 128
        %s215 = scalar_lea.vmem [#allocation7], %s214
        %s216 = smul.u32 16, %s27
        %v217 = vld [vmem:[%s181] sm:$0x3]
        %v218 = vrcp.pop 31.0
        %v219 = vmul.f32 %v217, %v218
        %v220 = vmul.f32 %v219, 2.0
        %v221 = vsub.f32 %v220, 1.0
        %v222 = vadd.f32 %v221, 1.0
        %v223 = vmul.f32 %v222, 0.5
        %v224 = vmul.f32 %v223, 15.0
        %v225 = vfloor.f32 %v224
        %v226 = vsub.f32 %v224, %v225
        %v227 = vcvt.f32.s32.to.zero.pseudo %v225
        %v228 = vadd.f32 %v226, 1.0
        %v229 = vmul.f32 %v228, -0.75
        %v230 = vsub.f32 %v229, -3.75
        %v231 = vmul.f32 %v230, %v228
        %v232 = vadd.f32 %v231, -6.0
        %v233 = vmul.f32 %v232, %v228
        %v234 = vsub.f32 %v233, -3.0
        %v235 = vmul.f32 %v226, 1.25
        %v236 = vsub.f32 %v235, 2.25
        %v237 = vmul.f32 %v236, %v226
        %v238 = vmul.f32 %v237, %v226
        %v239 = vadd.f32 %v238, 1.0
        %v240 = vsub.f32 1.0, %v226
        %v241 = vmul.f32 %v240, 1.25
        %v242 = vsub.f32 %v241, 2.25
        %v243 = vmul.f32 %v242, %v240
        %v244 = vmul.f32 %v243, %v240
        %v245 = vadd.f32 %v244, 1.0
        %v246 = vsub.f32 2.0, %v226
        %v247 = vmul.f32 %v246, -0.75
        %v248 = vsub.f32 %v247, -3.75
        %v249 = vmul.f32 %v248, %v246
        %v250 = vadd.f32 %v249, -6.0
        %v251 = vmul.f32 %v250, %v246
        %v252 = vsub.f32 %v251, -3.0
        %v253 = vlaneseq
        %v254 = vshrl.u32 %v253, 7
        %v255 = vadd.s32 %v254, 8
        %v256 = vsub.s32 %v227, 1
        %v257 = vlaneseq
        %v258 = vshrl.u32 %v257, 7
        %v259 = vsub.s32 1, %v258
        %v260 = vrot.slane %v256, %v259
        %vm261 = vcmp.eq.s32.totalorder %v254, %v260
        %vm262 = vcmp.eq.s32.totalorder %v255, %v260
        %v263 = vlaneseq
        %v264 = vshrl.u32 %v263, 7
        %v265 = vsub.s32 1, %v264
        %v266 = vrot.slane %v234, %v265
        %v267 = vsel %vm261, %v266, 0.0
        %v268 = vsel %vm262, %v266, 0.0
        %v269 = vadd.f32 %v267, 0.0
        %v270 = vadd.f32 %v268, 0.0
        %v271 = vlaneseq
        %v272 = vshrl.u32 %v271, 7
        %v273 = vsub.s32 0, %v272
        %v274 = vrot.slane %v256, %v273
        %vm275 = vcmp.eq.s32.totalorder %v254, %v274
        %vm276 = vcmp.eq.s32.totalorder %v255, %v274
        %v277 = vlaneseq
        %v278 = vshrl.u32 %v277, 7
        %v279 = vsub.s32 0, %v278
        %v280 = vrot.slane %v234, %v279
        %v281 = vsel %vm275, %v280, 0.0
        %v282 = vsel %vm276, %v280, 0.0
        %v283 = vadd.f32 %v281, 0.0
        %v284 = vadd.f32 %v282, 0.0
        %v285 = vlaneseq
        %v286 = vshrl.u32 %v285, 7
        %v287 = vsub.s32 1, %v286
        %v288 = vrot.slane %v227, %v287
        %vm289 = vcmp.eq.s32.totalorder %v254, %v288
        %vm290 = vcmp.eq.s32.totalorder %v255, %v288
        %v291 = vlaneseq
        %v292 = vshrl.u32 %v291, 7
        %v293 = vsub.s32 1, %v292
        %v294 = vrot.slane %v239, %v293
        %v295 = vsel %vm289, %v294, 0.0
        %v296 = vsel %vm290, %v294, 0.0
        %v297 = vadd.f32 %v269, %v295
        %v298 = vadd.f32 %v270, %v296
        %v299 = vlaneseq
        %v300 = vshrl.u32 %v299, 7
        %v301 = vsub.s32 0, %v300
        %v302 = vrot.slane %v227, %v301
        %vm303 = vcmp.eq.s32.totalorder %v254, %v302
        %vm304 = vcmp.eq.s32.totalorder %v255, %v302
        %v305 = vlaneseq
        %v306 = vshrl.u32 %v305, 7
        %v307 = vsub.s32 0, %v306
        %v308 = vrot.slane %v239, %v307
        %v309 = vsel %vm303, %v308, 0.0
        %v310 = vsel %vm304, %v308, 0.0
        %v311 = vadd.f32 %v283, %v309
        %v312 = vadd.f32 %v284, %v310
        %v313 = vadd.s32 %v256, 2
        %v314 = vlaneseq
        %v315 = vshrl.u32 %v314, 7
        %v316 = vsub.s32 1, %v315
        %v317 = vrot.slane %v313, %v316
        %vm318 = vcmp.eq.s32.totalorder %v254, %v317
        %vm319 = vcmp.eq.s32.totalorder %v255, %v317
        %v320 = vlaneseq
        %v321 = vshrl.u32 %v320, 7
        %v322 = vsub.s32 1, %v321
        %v323 = vrot.slane %v245, %v322
        %v324 = vsel %vm318, %v323, 0.0
        %v325 = vsel %vm319, %v323, 0.0
        %v326 = vadd.f32 %v297, %v324
        %v327 = vadd.f32 %v298, %v325
        %v328 = vlaneseq
        %v329 = vshrl.u32 %v328, 7
        %v330 = vsub.s32 0, %v329
        %v331 = vrot.slane %v313, %v330
        %vm332 = vcmp.eq.s32.totalorder %v254, %v331
        %vm333 = vcmp.eq.s32.totalorder %v255, %v331
        %v334 = vlaneseq
        %v335 = vshrl.u32 %v334, 7
        %v336 = vsub.s32 0, %v335
        %v337 = vrot.slane %v245, %v336
        %v338 = vsel %vm332, %v337, 0.0
        %v339 = vsel %vm333, %v337, 0.0
        %v340 = vadd.f32 %v311, %v338
        %v341 = vadd.f32 %v312, %v339
        %v342 = vadd.s32 %v256, 3
        %v343 = vlaneseq
        %v344 = vshrl.u32 %v343, 7
        %v345 = vsub.s32 1, %v344
        %v346 = vrot.slane %v342, %v345
        %vm347 = vcmp.eq.s32.totalorder %v254, %v346
        %vm348 = vcmp.eq.s32.totalorder %v255, %v346
        %v349 = vlaneseq
        %v350 = vshrl.u32 %v349, 7
        %v351 = vsub.s32 1, %v350
        %v352 = vrot.slane %v252, %v351
        %v353 = vsel %vm347, %v352, 0.0
        %v354 = vsel %vm348, %v352, 0.0
        %v355 = vadd.f32 %v326, %v353
        %v356 = vadd.f32 %v327, %v354
        %v357 = vlaneseq
        %v358 = vshrl.u32 %v357, 7
        %v359 = vsub.s32 0, %v358
        %v360 = vrot.slane %v342, %v359
        %vm361 = vcmp.eq.s32.totalorder %v254, %v360
        %vm362 = vcmp.eq.s32.totalorder %v255, %v360
        %v363 = vlaneseq
        %v364 = vshrl.u32 %v363, 7
        %v365 = vsub.s32 0, %v364
        %v366 = vrot.slane %v252, %v365
        %v367 = vsel %vm361, %v366, 0.0
        %v368 = vsel %vm362, %v366, 0.0
        %v369 = vadd.f32 %v340, %v367
        %v370 = vadd.f32 %v341, %v368
        %v371 = vld [vmem:[%s190] sm:$0xff]
        %v372 = vld [vmem:[%s190 + $0x8] sm:$0xff]
        %v373 = vld [vmem:[%s190 + $0x10] sm:$0xff]
        %v374 = vld [vmem:[%s190 + $0x18] sm:$0xff]
        %v375 = vld [vmem:[%s190 + $0x20] sm:$0xff]
        %v376 = vld [vmem:[%s190 + $0x28] sm:$0xff]
        %v377 = vld [vmem:[%s190 + $0x30] sm:$0xff]
        %v378 = vld [vmem:[%s190 + $0x38] sm:$0xff]
        %v379 = vld [vmem:[%s190 + $0x40] sm:$0xff]
        %v380 = vld [vmem:[%s190 + $0x48] sm:$0xff]
        %v381 = vld [vmem:[%s190 + $0x50] sm:$0xff]
        %v382 = vld [vmem:[%s190 + $0x58] sm:$0xff]
        %v383 = vld [vmem:[%s190 + $0x60] sm:$0xff]
        %v384 = vld [vmem:[%s190 + $0x68] sm:$0xff]
        %v385 = vld [vmem:[%s190 + $0x70] sm:$0xff]
        %v386 = vld [vmem:[%s190 + $0x78] sm:$0xff]
        %v387 = vld [vmem:[%s190 + $0x80] sm:$0xff]
        %v388 = vld [vmem:[%s190 + $0x88] sm:$0xff]
        %v389 = vld [vmem:[%s190 + $0x90] sm:$0xff]
        %v390 = vld [vmem:[%s190 + $0x98] sm:$0xff]
        %v391 = vld [vmem:[%s190 + $0xa0] sm:$0xff]
        %v392 = vld [vmem:[%s190 + $0xa8] sm:$0xff]
        %v393 = vld [vmem:[%s190 + $0xb0] sm:$0xff]
        %v394 = vld [vmem:[%s190 + $0xb8] sm:$0xff]
        %v395 = vld [vmem:[%s190 + $0xc0] sm:$0xff]
        %v396 = vld [vmem:[%s190 + $0xc8] sm:$0xff]
        %v397 = vld [vmem:[%s190 + $0xd0] sm:$0xff]
        %v398 = vld [vmem:[%s190 + $0xd8] sm:$0xff]
        %v399 = vld [vmem:[%s190 + $0xe0] sm:$0xff]
        %v400 = vld [vmem:[%s190 + $0xe8] sm:$0xff]
        %v401 = vld [vmem:[%s190 + $0xf0] sm:$0xff]
        %v402 = vld [vmem:[%s190 + $0xf8] sm:$0xff]
        %403 = vxpose.xlu0.b32.start [1/16] %v355, 128
        %404 = vxpose.xlu0.b32.cont [2/16] %v356, 128
        %405 = vxpose.xlu0.b32.cont [3/16] 0.0, 128
        %406 = vxpose.xlu0.b32.cont [4/16] 0.0, 128
        %407 = vxpose.xlu0.b32.cont [5/16] 0.0, 128
        %408 = vxpose.xlu0.b32.cont [6/16] 0.0, 128
        %409 = vxpose.xlu0.b32.cont [7/16] 0.0, 128
        %410 = vxpose.xlu0.b32.cont [8/16] 0.0, 128
        %411 = vxpose.xlu0.b32.cont [9/16] 0.0, 128
        %412 = vxpose.xlu0.b32.cont [10/16] 0.0, 128
        %413 = vxpose.xlu0.b32.cont [11/16] 0.0, 128
        %414 = vxpose.xlu0.b32.cont [12/16] 0.0, 128
        %415 = vxpose.xlu0.b32.cont [13/16] 0.0, 128
        %416 = vxpose.xlu0.b32.cont [14/16] 0.0, 128
        %417 = vxpose.xlu0.b32.cont [15/16] 0.0, 128
        %418 = vxpose.xlu0.b32.end [16/16] 0.0, 128
        %v419 = vpop.trf.xlu0
        %v420 = vpop.trf.xlu0
        %v421 = vpop.trf.xlu0
        %v422 = vpop.trf.xlu0
        %v423 = vpop.trf.xlu0
        %v424 = vpop.trf.xlu0
        %v425 = vpop.trf.xlu0
        %v426 = vpop.trf.xlu0
        %v427 = vpop.trf.xlu0
        %v428 = vpop.trf.xlu0
        %v429 = vpop.trf.xlu0
        %v430 = vpop.trf.xlu0
        %v431 = vpop.trf.xlu0
        %v432 = vpop.trf.xlu0
        %v433 = vpop.trf.xlu0
        %v434 = vpop.trf.xlu0
        %vm435 = vcmask 130048
        %v437 = vsel %vm435, %v419, 0
        %v440 = vsel %vm435, %v420, 0
        %v443 = vsel %vm435, %v421, 0
        %v446 = vsel %vm435, %v422, 0
        %v449 = vsel %vm435, %v423, 0
        %v452 = vsel %vm435, %v424, 0
        %v455 = vsel %vm435, %v425, 0
        %v458 = vsel %vm435, %v426, 0
        %v461 = vsel %vm435, %v427, 0
        %v464 = vsel %vm435, %v428, 0
        %v467 = vsel %vm435, %v429, 0
        %v470 = vsel %vm435, %v430, 0
        %v473 = vsel %vm435, %v431, 0
        %v476 = vsel %vm435, %v432, 0
        %v479 = vsel %vm435, %v433, 0
        %v482 = vsel %vm435, %v434, 0
        %484 = vmatprep.subr.mxu0 0.0
        %485 = vmatpush1.msra.mxu0 0.0
        %486 = vmatprep.subr.mxu0 0.0
        %487 = vmatpush1.msra.mxu0 0.0
        %488 = vmatprep.subr.mxu0 0.0
        %489 = vmatpush1.msra.mxu0 0.0
        %490 = vmatprep.subr.mxu0 0.0
        %491 = vmatpush1.msra.mxu0 0.0
        %492 = vmatprep.subr.mxu0 0.0
        %493 = vmatpush1.msra.mxu0 0.0
        %494 = vmatprep.subr.mxu0 0.0
        %495 = vmatpush1.msra.mxu0 0.0
        %496 = vmatprep.subr.mxu0 0.0
        %497 = vmatpush1.msra.mxu0 0.0
        %498 = vmatprep.subr.mxu0 0.0
        %499 = vmatpush1.msra.mxu0 0.0
        %500 = vmatprep.subr.mxu0 0.0
        %501 = vmatpush1.msra.mxu0 0.0
        %502 = vmatprep.subr.mxu0 0.0
        %503 = vmatpush1.msra.mxu0 0.0
        %504 = vmatprep.subr.mxu0 0.0
        %505 = vmatpush1.msra.mxu0 0.0
        %506 = vmatprep.subr.mxu0 0.0
        %507 = vmatpush1.msra.mxu0 0.0
        %508 = vmatprep.subr.mxu0 0.0
        %509 = vmatpush1.msra.mxu0 0.0
        %510 = vmatprep.subr.mxu0 0.0
        %511 = vmatpush1.msra.mxu0 0.0
        %512 = vmatprep.subr.mxu0 %v388
        %513 = vmatpush1.msra.mxu0 %v387
        %514 = vmatprep.subr.mxu0 %v372
        %515 = vmatpush1.msra.mxu0 %v371
        %516 = vmatprep.subr.mxu0 0.0
        %517 = vmatpush2.msra.mxu0 0.0
        %518 = vmatprep.subr.mxu0 0.0
        %519 = vmatpush2.msra.mxu0 0.0
        %520 = vmatprep.subr.mxu0 0.0
        %521 = vmatpush2.msra.mxu0 0.0
        %522 = vmatprep.subr.mxu0 0.0
        %523 = vmatpush2.msra.mxu0 0.0
        %524 = vmatprep.subr.mxu0 0.0
        %525 = vmatpush2.msra.mxu0 0.0
        %526 = vmatprep.subr.mxu0 0.0
        %527 = vmatpush2.msra.mxu0 0.0
        %528 = vmatprep.subr.mxu0 0.0
        %529 = vmatpush2.msra.mxu0 0.0
        %530 = vmatprep.subr.mxu0 0.0
        %531 = vmatpush2.msra.mxu0 0.0
        %532 = vmatprep.subr.mxu0 0.0
        %533 = vmatpush2.msra.mxu0 0.0
        %534 = vmatprep.subr.mxu0 0.0
        %535 = vmatpush2.msra.mxu0 0.0
        %536 = vmatprep.subr.mxu0 0.0
        %537 = vmatpush2.msra.mxu0 0.0
        %538 = vmatprep.subr.mxu0 0.0
        %539 = vmatpush2.msra.mxu0 0.0
        %540 = vmatprep.subr.mxu0 0.0
        %541 = vmatpush2.msra.mxu0 0.0
        %542 = vmatprep.subr.mxu0 0.0
        %543 = vmatpush2.msra.mxu0 0.0
        %544 = vmatprep.subr.mxu0 0.0
        %545 = vmatpush2.msra.mxu0 0.0
        %546 = vmatprep.subr.mxu0 0.0
        %547 = vmatpush2.msra.mxu0 0.0
        %548 = vmatprep.mubr.f32.mxu0 0.0
        %549 = vmatmul.mubr.f32.gmra.mxu0 %v437
        %v550 = vpop.f32.mrf.mxu0
        %v551 = vadd.f32 0.0, %v550
        %v552 = vpop.f32.mrf.mxu0
        %v553 = vadd.f32 0.0, %v552
        %554 = vmatprep.mubr.f32.mxu0 0.0
        %555 = vmatmul.mubr.f32.gmra.mxu0 %v440
        %v556 = vpop.f32.mrf.mxu0
        %v557 = vadd.f32 0.0, %v556
        %v558 = vpop.f32.mrf.mxu0
        %v559 = vadd.f32 0.0, %v558
        %560 = vmatprep.mubr.f32.mxu0 0.0
        %561 = vmatmul.mubr.f32.gmra.mxu0 %v443
        %v562 = vpop.f32.mrf.mxu0
        %v563 = vadd.f32 0.0, %v562
        %v564 = vpop.f32.mrf.mxu0
        %v565 = vadd.f32 0.0, %v564
        %566 = vmatprep.mubr.f32.mxu0 0.0
        %567 = vmatmul.mubr.f32.gmra.mxu0 %v446
        %v568 = vpop.f32.mrf.mxu0
        %v569 = vadd.f32 0.0, %v568
        %v570 = vpop.f32.mrf.mxu0
        %v571 = vadd.f32 0.0, %v570
        %572 = vmatprep.mubr.f32.mxu0 0.0
        %573 = vmatmul.mubr.f32.gmra.mxu0 %v449
        %v574 = vpop.f32.mrf.mxu0
        %v575 = vadd.f32 0.0, %v574
        %v576 = vpop.f32.mrf.mxu0
        %v577 = vadd.f32 0.0, %v576
        %578 = vmatprep.mubr.f32.mxu0 0.0
        %579 = vmatmul.mubr.f32.gmra.mxu0 %v452
        %v580 = vpop.f32.mrf.mxu0
        %v581 = vadd.f32 0.0, %v580
        %v582 = vpop.f32.mrf.mxu0
        %v583 = vadd.f32 0.0, %v582
        %584 = vmatprep.mubr.f32.mxu0 0.0
        %585 = vmatmul.mubr.f32.gmra.mxu0 %v455
        %v586 = vpop.f32.mrf.mxu0
        %v587 = vadd.f32 0.0, %v586
        %v588 = vpop.f32.mrf.mxu0
        %v589 = vadd.f32 0.0, %v588
        %590 = vmatprep.mubr.f32.mxu0 0.0
        %591 = vmatmul.mubr.f32.gmra.mxu0 %v458
        %v592 = vpop.f32.mrf.mxu0
        %v593 = vadd.f32 0.0, %v592
        %v594 = vpop.f32.mrf.mxu0
        %v595 = vadd.f32 0.0, %v594
        %596 = vmatprep.mubr.f32.mxu0 0.0
        %597 = vmatmul.mubr.f32.gmra.mxu0 %v461
        %v598 = vpop.f32.mrf.mxu0
        %v599 = vadd.f32 0.0, %v598
        %v600 = vpop.f32.mrf.mxu0
        %v601 = vadd.f32 0.0, %v600
        %602 = vmatprep.mubr.f32.mxu0 0.0
        %603 = vmatmul.mubr.f32.gmra.mxu0 %v464
        %v604 = vpop.f32.mrf.mxu0
        %v605 = vadd.f32 0.0, %v604
        %v606 = vpop.f32.mrf.mxu0
        %v607 = vadd.f32 0.0, %v606
        %608 = vmatprep.mubr.f32.mxu0 0.0
        %609 = vmatmul.mubr.f32.gmra.mxu0 %v467
        %v610 = vpop.f32.mrf.mxu0
        %v611 = vadd.f32 0.0, %v610
        %v612 = vpop.f32.mrf.mxu0
        %v613 = vadd.f32 0.0, %v612
        %614 = vmatprep.mubr.f32.mxu0 0.0
        %615 = vmatmul.mubr.f32.gmra.mxu0 %v470
        %v616 = vpop.f32.mrf.mxu0
        %v617 = vadd.f32 0.0, %v616
        %v618 = vpop.f32.mrf.mxu0
        %v619 = vadd.f32 0.0, %v618
        %620 = vmatprep.mubr.f32.mxu0 0.0
        %621 = vmatmul.mubr.f32.gmra.mxu0 %v473
        %v622 = vpop.f32.mrf.mxu0
        %v623 = vadd.f32 0.0, %v622
        %v624 = vpop.f32.mrf.mxu0
        %v625 = vadd.f32 0.0, %v624
        %626 = vmatprep.mubr.f32.mxu0 0.0
        %627 = vmatmul.mubr.f32.gmra.mxu0 %v476
        %v628 = vpop.f32.mrf.mxu0
        %v629 = vadd.f32 0.0, %v628
        %v630 = vpop.f32.mrf.mxu0
        %v631 = vadd.f32 0.0, %v630
        %632 = vmatprep.mubr.f32.mxu0 0.0
        %633 = vmatmul.mubr.f32.gmra.mxu0 %v479
        %v634 = vpop.f32.mrf.mxu0
        %v635 = vadd.f32 0.0, %v634
        %v636 = vpop.f32.mrf.mxu0
        %v637 = vadd.f32 0.0, %v636
        %638 = vmatprep.mubr.f32.mxu0 0.0
        %639 = vmatmul.mubr.f32.gmra.mxu0 %v482
        %v640 = vpop.f32.mrf.mxu0
        %v641 = vadd.f32 0.0, %v640
        %v642 = vpop.f32.mrf.mxu0
        %v643 = vadd.f32 0.0, %v642
        %644 = vdwg.mxu0
        %645 = vmatprep.subr.mxu0 0.0
        %646 = vmatpush1.msra.mxu0 0.0
        %647 = vmatprep.subr.mxu0 0.0
        %648 = vmatpush1.msra.mxu0 0.0
        %649 = vmatprep.subr.mxu0 0.0
        %650 = vmatpush1.msra.mxu0 0.0
        %651 = vmatprep.subr.mxu0 0.0
        %652 = vmatpush1.msra.mxu0 0.0
        %653 = vmatprep.subr.mxu0 0.0
        %654 = vmatpush1.msra.mxu0 0.0
        %655 = vmatprep.subr.mxu0 0.0
        %656 = vmatpush1.msra.mxu0 0.0
        %657 = vmatprep.subr.mxu0 0.0
        %658 = vmatpush1.msra.mxu0 0.0
        %659 = vmatprep.subr.mxu0 0.0
        %660 = vmatpush1.msra.mxu0 0.0
        %661 = vmatprep.subr.mxu0 0.0
        %662 = vmatpush1.msra.mxu0 0.0
        %663 = vmatprep.subr.mxu0 0.0
        %664 = vmatpush1.msra.mxu0 0.0
        %665 = vmatprep.subr.mxu0 0.0
        %666 = vmatpush1.msra.mxu0 0.0
        %667 = vmatprep.subr.mxu0 0.0
        %668 = vmatpush1.msra.mxu0 0.0
        %669 = vmatprep.subr.mxu0 0.0
        %670 = vmatpush1.msra.mxu0 0.0
        %671 = vmatprep.subr.mxu0 0.0
        %672 = vmatpush1.msra.mxu0 0.0
        %673 = vmatprep.subr.mxu0 %v390
        %674 = vmatpush1.msra.mxu0 %v389
        %675 = vmatprep.subr.mxu0 %v374
        %676 = vmatpush1.msra.mxu0 %v373
        %677 = vmatprep.subr.mxu0 0.0
        %678 = vmatpush2.msra.mxu0 0.0
        %679 = vmatprep.subr.mxu0 0.0
        %680 = vmatpush2.msra.mxu0 0.0
        %681 = vmatprep.subr.mxu0 0.0
        %682 = vmatpush2.msra.mxu0 0.0
        %683 = vmatprep.subr.mxu0 0.0
        %684 = vmatpush2.msra.mxu0 0.0
        %685 = vmatprep.subr.mxu0 0.0
        %686 = vmatpush2.msra.mxu0 0.0
        %687 = vmatprep.subr.mxu0 0.0
        %688 = vmatpush2.msra.mxu0 0.0
        %689 = vmatprep.subr.mxu0 0.0
        %690 = vmatpush2.msra.mxu0 0.0
        %691 = vmatprep.subr.mxu0 0.0
        %692 = vmatpush2.msra.mxu0 0.0
        %693 = vmatprep.subr.mxu0 0.0
        %694 = vmatpush2.msra.mxu0 0.0
        %695 = vmatprep.subr.mxu0 0.0
        %696 = vmatpush2.msra.mxu0 0.0
        %697 = vmatprep.subr.mxu0 0.0
        %698 = vmatpush2.msra.mxu0 0.0
        %699 = vmatprep.subr.mxu0 0.0
        %700 = vmatpush2.msra.mxu0 0.0
        %701 = vmatprep.subr.mxu0 0.0
        %702 = vmatpush2.msra.mxu0 0.0
        %703 = vmatprep.subr.mxu0 0.0
        %704 = vmatpush2.msra.mxu0 0.0
        %705 = vmatprep.subr.mxu0 0.0
        %706 = vmatpush2.msra.mxu0 0.0
        %707 = vmatprep.subr.mxu0 0.0
        %708 = vmatpush2.msra.mxu0 0.0
        %709 = vmatprep.mubr.f32.mxu0 0.0
        %710 = vmatmul.mubr.f32.gmra.mxu0 %v437
        %v711 = vpop.f32.mrf.mxu0
        %v712 = vadd.f32 0.0, %v711
        %v713 = vpop.f32.mrf.mxu0
        %v714 = vadd.f32 0.0, %v713
        %715 = vmatprep.mubr.f32.mxu0 0.0
        %716 = vmatmul.mubr.f32.gmra.mxu0 %v440
        %v717 = vpop.f32.mrf.mxu0
        %v718 = vadd.f32 0.0, %v717
        %v719 = vpop.f32.mrf.mxu0
        %v720 = vadd.f32 0.0, %v719
        %721 = vmatprep.mubr.f32.mxu0 0.0
        %722 = vmatmul.mubr.f32.gmra.mxu0 %v443
        %v723 = vpop.f32.mrf.mxu0
        %v724 = vadd.f32 0.0, %v723
        %v725 = vpop.f32.mrf.mxu0
        %v726 = vadd.f32 0.0, %v725
        %727 = vmatprep.mubr.f32.mxu0 0.0
        %728 = vmatmul.mubr.f32.gmra.mxu0 %v446
        %v729 = vpop.f32.mrf.mxu0
        %v730 = vadd.f32 0.0, %v729
        %v731 = vpop.f32.mrf.mxu0
        %v732 = vadd.f32 0.0, %v731
        %733 = vmatprep.mubr.f32.mxu0 0.0
        %734 = vmatmul.mubr.f32.gmra.mxu0 %v449
        %v735 = vpop.f32.mrf.mxu0
        %v736 = vadd.f32 0.0, %v735
        %v737 = vpop.f32.mrf.mxu0
        %v738 = vadd.f32 0.0, %v737
        %739 = vmatprep.mubr.f32.mxu0 0.0
        %740 = vmatmul.mubr.f32.gmra.mxu0 %v452
        %v741 = vpop.f32.mrf.mxu0
        %v742 = vadd.f32 0.0, %v741
        %v743 = vpop.f32.mrf.mxu0
        %v744 = vadd.f32 0.0, %v743
        %745 = vmatprep.mubr.f32.mxu0 0.0
        %746 = vmatmul.mubr.f32.gmra.mxu0 %v455
        %v747 = vpop.f32.mrf.mxu0
        %v748 = vadd.f32 0.0, %v747
        %v749 = vpop.f32.mrf.mxu0
        %v750 = vadd.f32 0.0, %v749
        %751 = vmatprep.mubr.f32.mxu0 0.0
        %752 = vmatmul.mubr.f32.gmra.mxu0 %v458
        %v753 = vpop.f32.mrf.mxu0
        %v754 = vadd.f32 0.0, %v753
        %v755 = vpop.f32.mrf.mxu0
        %v756 = vadd.f32 0.0, %v755
        %757 = vmatprep.mubr.f32.mxu0 0.0
        %758 = vmatmul.mubr.f32.gmra.mxu0 %v461
        %v759 = vpop.f32.mrf.mxu0
        %v760 = vadd.f32 0.0, %v759
        %v761 = vpop.f32.mrf.mxu0
        %v762 = vadd.f32 0.0, %v761
        %763 = vmatprep.mubr.f32.mxu0 0.0
        %764 = vmatmul.mubr.f32.gmra.mxu0 %v464
        %v765 = vpop.f32.mrf.mxu0
        %v766 = vadd.f32 0.0, %v765
        %v767 = vpop.f32.mrf.mxu0
        %v768 = vadd.f32 0.0, %v767
        %769 = vmatprep.mubr.f32.mxu0 0.0
        %770 = vmatmul.mubr.f32.gmra.mxu0 %v467
        %v771 = vpop.f32.mrf.mxu0
        %v772 = vadd.f32 0.0, %v771
        %v773 = vpop.f32.mrf.mxu0
        %v774 = vadd.f32 0.0, %v773
        %775 = vmatprep.mubr.f32.mxu0 0.0
        %776 = vmatmul.mubr.f32.gmra.mxu0 %v470
        %v777 = vpop.f32.mrf.mxu0
        %v778 = vadd.f32 0.0, %v777
        %v779 = vpop.f32.mrf.mxu0
        %v780 = vadd.f32 0.0, %v779
        %781 = vmatprep.mubr.f32.mxu0 0.0
        %782 = vmatmul.mubr.f32.gmra.mxu0 %v473
        %v783 = vpop.f32.mrf.mxu0
        %v784 = vadd.f32 0.0, %v783
        %v785 = vpop.f32.mrf.mxu0
        %v786 = vadd.f32 0.0, %v785
        %787 = vmatprep.mubr.f32.mxu0 0.0
        %788 = vmatmul.mubr.f32.gmra.mxu0 %v476
        %v789 = vpop.f32.mrf.mxu0
        %v790 = vadd.f32 0.0, %v789
        %v791 = vpop.f32.mrf.mxu0
        %v792 = vadd.f32 0.0, %v791
        %793 = vmatprep.mubr.f32.mxu0 0.0
        %794 = vmatmul.mubr.f32.gmra.mxu0 %v479
        %v795 = vpop.f32.mrf.mxu0
        %v796 = vadd.f32 0.0, %v795
        %v797 = vpop.f32.mrf.mxu0
        %v798 = vadd.f32 0.0, %v797
        %799 = vmatprep.mubr.f32.mxu0 0.0
        %800 = vmatmul.mubr.f32.gmra.mxu0 %v482
        %v801 = vpop.f32.mrf.mxu0
        %v802 = vadd.f32 0.0, %v801
        %v803 = vpop.f32.mrf.mxu0
        %v804 = vadd.f32 0.0, %v803
        %805 = vdwg.mxu0
        %806 = vmatprep.subr.mxu0 0.0
        %807 = vmatpush1.msra.mxu0 0.0
        %808 = vmatprep.subr.mxu0 0.0
        %809 = vmatpush1.msra.mxu0 0.0
        %810 = vmatprep.subr.mxu0 0.0
        %811 = vmatpush1.msra.mxu0 0.0
        %812 = vmatprep.subr.mxu0 0.0
        %813 = vmatpush1.msra.mxu0 0.0
        %814 = vmatprep.subr.mxu0 0.0
        %815 = vmatpush1.msra.mxu0 0.0
        %816 = vmatprep.subr.mxu0 0.0
        %817 = vmatpush1.msra.mxu0 0.0
        %818 = vmatprep.subr.mxu0 0.0
        %819 = vmatpush1.msra.mxu0 0.0
        %820 = vmatprep.subr.mxu0 0.0
        %821 = vmatpush1.msra.mxu0 0.0
        %822 = vmatprep.subr.mxu0 0.0
        %823 = vmatpush1.msra.mxu0 0.0
        %824 = vmatprep.subr.mxu0 0.0
        %825 = vmatpush1.msra.mxu0 0.0
        %826 = vmatprep.subr.mxu0 0.0
        %827 = vmatpush1.msra.mxu0 0.0
        %828 = vmatprep.subr.mxu0 0.0
        %829 = vmatpush1.msra.mxu0 0.0
        %830 = vmatprep.subr.mxu0 0.0
        %831 = vmatpush1.msra.mxu0 0.0
        %832 = vmatprep.subr.mxu0 0.0
        %833 = vmatpush1.msra.mxu0 0.0
        %834 = vmatprep.subr.mxu0 %v392
        %835 = vmatpush1.msra.mxu0 %v391
        %836 = vmatprep.subr.mxu0 %v376
        %837 = vmatpush1.msra.mxu0 %v375
        %838 = vmatprep.subr.mxu0 0.0
        %839 = vmatpush2.msra.mxu0 0.0
        %840 = vmatprep.subr.mxu0 0.0
        %841 = vmatpush2.msra.mxu0 0.0
        %842 = vmatprep.subr.mxu0 0.0
        %843 = vmatpush2.msra.mxu0 0.0
        %844 = vmatprep.subr.mxu0 0.0
        %845 = vmatpush2.msra.mxu0 0.0
        %846 = vmatprep.subr.mxu0 0.0
        %847 = vmatpush2.msra.mxu0 0.0
        %848 = vmatprep.subr.mxu0 0.0
        %849 = vmatpush2.msra.mxu0 0.0
        %850 = vmatprep.subr.mxu0 0.0
        %851 = vmatpush2.msra.mxu0 0.0
        %852 = vmatprep.subr.mxu0 0.0
        %853 = vmatpush2.msra.mxu0 0.0
        %854 = vmatprep.subr.mxu0 0.0
        %855 = vmatpush2.msra.mxu0 0.0
        %856 = vmatprep.subr.mxu0 0.0
        %857 = vmatpush2.msra.mxu0 0.0
        %858 = vmatprep.subr.mxu0 0.0
        %859 = vmatpush2.msra.mxu0 0.0
        %860 = vmatprep.subr.mxu0 0.0
        %861 = vmatpush2.msra.mxu0 0.0
        %862 = vmatprep.subr.mxu0 0.0
        %863 = vmatpush2.msra.mxu0 0.0
        %864 = vmatprep.subr.mxu0 0.0
        %865 = vmatpush2.msra.mxu0 0.0
        %866 = vmatprep.subr.mxu0 0.0
        %867 = vmatpush2.msra.mxu0 0.0
        %868 = vmatprep.subr.mxu0 0.0
        %869 = vmatpush2.msra.mxu0 0.0
        %870 = vmatprep.mubr.f32.mxu0 0.0
        %871 = vmatmul.mubr.f32.gmra.mxu0 %v437
        %v872 = vpop.f32.mrf.mxu0
        %v873 = vadd.f32 0.0, %v872
        %v874 = vpop.f32.mrf.mxu0
        %v875 = vadd.f32 0.0, %v874
        %876 = vmatprep.mubr.f32.mxu0 0.0
        %877 = vmatmul.mubr.f32.gmra.mxu0 %v440
        %v878 = vpop.f32.mrf.mxu0
        %v879 = vadd.f32 0.0, %v878
        %v880 = vpop.f32.mrf.mxu0
        %v881 = vadd.f32 0.0, %v880
        %882 = vmatprep.mubr.f32.mxu0 0.0
        %883 = vmatmul.mubr.f32.gmra.mxu0 %v443
        %v884 = vpop.f32.mrf.mxu0
        %v885 = vadd.f32 0.0, %v884
        %v886 = vpop.f32.mrf.mxu0
        %v887 = vadd.f32 0.0, %v886
        %888 = vmatprep.mubr.f32.mxu0 0.0
        %889 = vmatmul.mubr.f32.gmra.mxu0 %v446
        %v890 = vpop.f32.mrf.mxu0
        %v891 = vadd.f32 0.0, %v890
        %v892 = vpop.f32.mrf.mxu0
        %v893 = vadd.f32 0.0, %v892
        %894 = vmatprep.mubr.f32.mxu0 0.0
        %895 = vmatmul.mubr.f32.gmra.mxu0 %v449
        %v896 = vpop.f32.mrf.mxu0
        %v897 = vadd.f32 0.0, %v896
        %v898 = vpop.f32.mrf.mxu0
        %v899 = vadd.f32 0.0, %v898
        %900 = vmatprep.mubr.f32.mxu0 0.0
        %901 = vmatmul.mubr.f32.gmra.mxu0 %v452
        %v902 = vpop.f32.mrf.mxu0
        %v903 = vadd.f32 0.0, %v902
        %v904 = vpop.f32.mrf.mxu0
        %v905 = vadd.f32 0.0, %v904
        %906 = vmatprep.mubr.f32.mxu0 0.0
        %907 = vmatmul.mubr.f32.gmra.mxu0 %v455
        %v908 = vpop.f32.mrf.mxu0
        %v909 = vadd.f32 0.0, %v908
        %v910 = vpop.f32.mrf.mxu0
        %v911 = vadd.f32 0.0, %v910
        %912 = vmatprep.mubr.f32.mxu0 0.0
        %913 = vmatmul.mubr.f32.gmra.mxu0 %v458
        %v914 = vpop.f32.mrf.mxu0
        %v915 = vadd.f32 0.0, %v914
        %v916 = vpop.f32.mrf.mxu0
        %v917 = vadd.f32 0.0, %v916
        %918 = vmatprep.mubr.f32.mxu0 0.0
        %919 = vmatmul.mubr.f32.gmra.mxu0 %v461
        %v920 = vpop.f32.mrf.mxu0
        %v921 = vadd.f32 0.0, %v920
        %v922 = vpop.f32.mrf.mxu0
        %v923 = vadd.f32 0.0, %v922
        %924 = vmatprep.mubr.f32.mxu0 0.0
        %925 = vmatmul.mubr.f32.gmra.mxu0 %v464
        %v926 = vpop.f32.mrf.mxu0
        %v927 = vadd.f32 0.0, %v926
        %v928 = vpop.f32.mrf.mxu0
        %v929 = vadd.f32 0.0, %v928
        %930 = vmatprep.mubr.f32.mxu0 0.0
        %931 = vmatmul.mubr.f32.gmra.mxu0 %v467
        %v932 = vpop.f32.mrf.mxu0
        %v933 = vadd.f32 0.0, %v932
        %v934 = vpop.f32.mrf.mxu0
        %v935 = vadd.f32 0.0, %v934
        %936 = vmatprep.mubr.f32.mxu0 0.0
        %937 = vmatmul.mubr.f32.gmra.mxu0 %v470
        %v938 = vpop.f32.mrf.mxu0
        %v939 = vadd.f32 0.0, %v938
        %v940 = vpop.f32.mrf.mxu0
        %v941 = vadd.f32 0.0, %v940
        %942 = vmatprep.mubr.f32.mxu0 0.0
        %943 = vmatmul.mubr.f32.gmra.mxu0 %v473
        %v944 = vpop.f32.mrf.mxu0
        %v945 = vadd.f32 0.0, %v944
        %v946 = vpop.f32.mrf.mxu0
        %v947 = vadd.f32 0.0, %v946
        %948 = vmatprep.mubr.f32.mxu0 0.0
        %949 = vmatmul.mubr.f32.gmra.mxu0 %v476
        %v950 = vpop.f32.mrf.mxu0
        %v951 = vadd.f32 0.0, %v950
        %v952 = vpop.f32.mrf.mxu0
        %v953 = vadd.f32 0.0, %v952
        %954 = vmatprep.mubr.f32.mxu0 0.0
        %955 = vmatmul.mubr.f32.gmra.mxu0 %v479
        %v956 = vpop.f32.mrf.mxu0
        %v957 = vadd.f32 0.0, %v956
        %v958 = vpop.f32.mrf.mxu0
        %v959 = vadd.f32 0.0, %v958
        %960 = vmatprep.mubr.f32.mxu0 0.0
        %961 = vmatmul.mubr.f32.gmra.mxu0 %v482
        %v962 = vpop.f32.mrf.mxu0
        %v963 = vadd.f32 0.0, %v962
        %v964 = vpop.f32.mrf.mxu0
        %v965 = vadd.f32 0.0, %v964
        %966 = vdwg.mxu0
        %967 = vmatprep.subr.mxu0 0.0
        %968 = vmatpush1.msra.mxu0 0.0
        %969 = vmatprep.subr.mxu0 0.0
        %970 = vmatpush1.msra.mxu0 0.0
        %971 = vmatprep.subr.mxu0 0.0
        %972 = vmatpush1.msra.mxu0 0.0
        %973 = vmatprep.subr.mxu0 0.0
        %974 = vmatpush1.msra.mxu0 0.0
        %975 = vmatprep.subr.mxu0 0.0
        %976 = vmatpush1.msra.mxu0 0.0
        %977 = vmatprep.subr.mxu0 0.0
        %978 = vmatpush1.msra.mxu0 0.0
        %979 = vmatprep.subr.mxu0 0.0
        %980 = vmatpush1.msra.mxu0 0.0
        %981 = vmatprep.subr.mxu0 0.0
        %982 = vmatpush1.msra.mxu0 0.0
        %983 = vmatprep.subr.mxu0 0.0
        %984 = vmatpush1.msra.mxu0 0.0
        %985 = vmatprep.subr.mxu0 0.0
        %986 = vmatpush1.msra.mxu0 0.0
        %987 = vmatprep.subr.mxu0 0.0
        %988 = vmatpush1.msra.mxu0 0.0
        %989 = vmatprep.subr.mxu0 0.0
        %990 = vmatpush1.msra.mxu0 0.0
        %991 = vmatprep.subr.mxu0 0.0
        %992 = vmatpush1.msra.mxu0 0.0
        %993 = vmatprep.subr.mxu0 0.0
        %994 = vmatpush1.msra.mxu0 0.0
        %995 = vmatprep.subr.mxu0 %v394
        %996 = vmatpush1.msra.mxu0 %v393
        %997 = vmatprep.subr.mxu0 %v378
        %998 = vmatpush1.msra.mxu0 %v377
        %999 = vmatprep.subr.mxu0 0.0
        %1000 = vmatpush2.msra.mxu0 0.0
        %1001 = vmatprep.subr.mxu0 0.0
        %1002 = vmatpush2.msra.mxu0 0.0
        %1003 = vmatprep.subr.mxu0 0.0
        %1004 = vmatpush2.msra.mxu0 0.0
        %1005 = vmatprep.subr.mxu0 0.0
        %1006 = vmatpush2.msra.mxu0 0.0
        %1007 = vmatprep.subr.mxu0 0.0
        %1008 = vmatpush2.msra.mxu0 0.0
        %1009 = vmatprep.subr.mxu0 0.0
        %1010 = vmatpush2.msra.mxu0 0.0
        %1011 = vmatprep.subr.mxu0 0.0
        %1012 = vmatpush2.msra.mxu0 0.0
        %1013 = vmatprep.subr.mxu0 0.0
        %1014 = vmatpush2.msra.mxu0 0.0
        %1015 = vmatprep.subr.mxu0 0.0
        %1016 = vmatpush2.msra.mxu0 0.0
        %1017 = vmatprep.subr.mxu0 0.0
        %1018 = vmatpush2.msra.mxu0 0.0
        %1019 = vmatprep.subr.mxu0 0.0
        %1020 = vmatpush2.msra.mxu0 0.0
        %1021 = vmatprep.subr.mxu0 0.0
        %1022 = vmatpush2.msra.mxu0 0.0
        %1023 = vmatprep.subr.mxu0 0.0
        %1024 = vmatpush2.msra.mxu0 0.0
        %1025 = vmatprep.subr.mxu0 0.0
        %1026 = vmatpush2.msra.mxu0 0.0
        %1027 = vmatprep.subr.mxu0 0.0
        %1028 = vmatpush2.msra.mxu0 0.0
        %1029 = vmatprep.subr.mxu0 0.0
        %1030 = vmatpush2.msra.mxu0 0.0
        %1031 = vmatprep.mubr.f32.mxu0 0.0
        %1032 = vmatmul.mubr.f32.gmra.mxu0 %v437
        %v1033 = vpop.f32.mrf.mxu0
        %v1034 = vadd.f32 0.0, %v1033
        %v1035 = vpop.f32.mrf.mxu0
        %v1036 = vadd.f32 0.0, %v1035
        %1037 = vmatprep.mubr.f32.mxu0 0.0
        %1038 = vmatmul.mubr.f32.gmra.mxu0 %v440
        %v1039 = vpop.f32.mrf.mxu0
        %v1040 = vadd.f32 0.0, %v1039
        %v1041 = vpop.f32.mrf.mxu0
        %v1042 = vadd.f32 0.0, %v1041
        %1043 = vmatprep.mubr.f32.mxu0 0.0
        %1044 = vmatmul.mubr.f32.gmra.mxu0 %v443
        %v1045 = vpop.f32.mrf.mxu0
        %v1046 = vadd.f32 0.0, %v1045
        %v1047 = vpop.f32.mrf.mxu0
        %v1048 = vadd.f32 0.0, %v1047
        %1049 = vmatprep.mubr.f32.mxu0 0.0
        %1050 = vmatmul.mubr.f32.gmra.mxu0 %v446
        %v1051 = vpop.f32.mrf.mxu0
        %v1052 = vadd.f32 0.0, %v1051
        %v1053 = vpop.f32.mrf.mxu0
        %v1054 = vadd.f32 0.0, %v1053
        %1055 = vmatprep.mubr.f32.mxu0 0.0
        %1056 = vmatmul.mubr.f32.gmra.mxu0 %v449
        %v1057 = vpop.f32.mrf.mxu0
        %v1058 = vadd.f32 0.0, %v1057
        %v1059 = vpop.f32.mrf.mxu0
        %v1060 = vadd.f32 0.0, %v1059
        %1061 = vmatprep.mubr.f32.mxu0 0.0
        %1062 = vmatmul.mubr.f32.gmra.mxu0 %v452
        %v1063 = vpop.f32.mrf.mxu0
        %v1064 = vadd.f32 0.0, %v1063
        %v1065 = vpop.f32.mrf.mxu0
        %v1066 = vadd.f32 0.0, %v1065
        %1067 = vmatprep.mubr.f32.mxu0 0.0
        %1068 = vmatmul.mubr.f32.gmra.mxu0 %v455
        %v1069 = vpop.f32.mrf.mxu0
        %v1070 = vadd.f32 0.0, %v1069
        %v1071 = vpop.f32.mrf.mxu0
        %v1072 = vadd.f32 0.0, %v1071
        %1073 = vmatprep.mubr.f32.mxu0 0.0
        %1074 = vmatmul.mubr.f32.gmra.mxu0 %v458
        %v1075 = vpop.f32.mrf.mxu0
        %v1076 = vadd.f32 0.0, %v1075
        %v1077 = vpop.f32.mrf.mxu0
        %v1078 = vadd.f32 0.0, %v1077
        %1079 = vmatprep.mubr.f32.mxu0 0.0
        %1080 = vmatmul.mubr.f32.gmra.mxu0 %v461
        %v1081 = vpop.f32.mrf.mxu0
        %v1082 = vadd.f32 0.0, %v1081
        %v1083 = vpop.f32.mrf.mxu0
        %v1084 = vadd.f32 0.0, %v1083
        %1085 = vmatprep.mubr.f32.mxu0 0.0
        %1086 = vmatmul.mubr.f32.gmra.mxu0 %v464
        %v1087 = vpop.f32.mrf.mxu0
        %v1088 = vadd.f32 0.0, %v1087
        %v1089 = vpop.f32.mrf.mxu0
        %v1090 = vadd.f32 0.0, %v1089
        %1091 = vmatprep.mubr.f32.mxu0 0.0
        %1092 = vmatmul.mubr.f32.gmra.mxu0 %v467
        %v1093 = vpop.f32.mrf.mxu0
        %v1094 = vadd.f32 0.0, %v1093
        %v1095 = vpop.f32.mrf.mxu0
        %v1096 = vadd.f32 0.0, %v1095
        %1097 = vmatprep.mubr.f32.mxu0 0.0
        %1098 = vmatmul.mubr.f32.gmra.mxu0 %v470
        %v1099 = vpop.f32.mrf.mxu0
        %v1100 = vadd.f32 0.0, %v1099
        %v1101 = vpop.f32.mrf.mxu0
        %v1102 = vadd.f32 0.0, %v1101
        %1103 = vmatprep.mubr.f32.mxu0 0.0
        %1104 = vmatmul.mubr.f32.gmra.mxu0 %v473
        %v1105 = vpop.f32.mrf.mxu0
        %v1106 = vadd.f32 0.0, %v1105
        %v1107 = vpop.f32.mrf.mxu0
        %v1108 = vadd.f32 0.0, %v1107
        %1109 = vmatprep.mubr.f32.mxu0 0.0
        %1110 = vmatmul.mubr.f32.gmra.mxu0 %v476
        %v1111 = vpop.f32.mrf.mxu0
        %v1112 = vadd.f32 0.0, %v1111
        %v1113 = vpop.f32.mrf.mxu0
        %v1114 = vadd.f32 0.0, %v1113
        %1115 = vmatprep.mubr.f32.mxu0 0.0
        %1116 = vmatmul.mubr.f32.gmra.mxu0 %v479
        %v1117 = vpop.f32.mrf.mxu0
        %v1118 = vadd.f32 0.0, %v1117
        %v1119 = vpop.f32.mrf.mxu0
        %v1120 = vadd.f32 0.0, %v1119
        %1121 = vmatprep.mubr.f32.mxu0 0.0
        %1122 = vmatmul.mubr.f32.gmra.mxu0 %v482
        %v1123 = vpop.f32.mrf.mxu0
        %v1124 = vadd.f32 0.0, %v1123
        %v1125 = vpop.f32.mrf.mxu0
        %v1126 = vadd.f32 0.0, %v1125
        %1127 = vdwg.mxu0
        %1128 = vmatprep.subr.mxu0 0.0
        %1129 = vmatpush1.msra.mxu0 0.0
        %1130 = vmatprep.subr.mxu0 0.0
        %1131 = vmatpush1.msra.mxu0 0.0
        %1132 = vmatprep.subr.mxu0 0.0
        %1133 = vmatpush1.msra.mxu0 0.0
        %1134 = vmatprep.subr.mxu0 0.0
        %1135 = vmatpush1.msra.mxu0 0.0
        %1136 = vmatprep.subr.mxu0 0.0
        %1137 = vmatpush1.msra.mxu0 0.0
        %1138 = vmatprep.subr.mxu0 0.0
        %1139 = vmatpush1.msra.mxu0 0.0
        %1140 = vmatprep.subr.mxu0 0.0
        %1141 = vmatpush1.msra.mxu0 0.0
        %1142 = vmatprep.subr.mxu0 0.0
        %1143 = vmatpush1.msra.mxu0 0.0
        %1144 = vmatprep.subr.mxu0 0.0
        %1145 = vmatpush1.msra.mxu0 0.0
        %1146 = vmatprep.subr.mxu0 0.0
        %1147 = vmatpush1.msra.mxu0 0.0
        %1148 = vmatprep.subr.mxu0 0.0
        %1149 = vmatpush1.msra.mxu0 0.0
        %1150 = vmatprep.subr.mxu0 0.0
        %1151 = vmatpush1.msra.mxu0 0.0
        %1152 = vmatprep.subr.mxu0 0.0
        %1153 = vmatpush1.msra.mxu0 0.0
        %1154 = vmatprep.subr.mxu0 0.0
        %1155 = vmatpush1.msra.mxu0 0.0
        %1156 = vmatprep.subr.mxu0 %v396
        %1157 = vmatpush1.msra.mxu0 %v395
        %1158 = vmatprep.subr.mxu0 %v380
        %1159 = vmatpush1.msra.mxu0 %v379
        %1160 = vmatprep.subr.mxu0 0.0
        %1161 = vmatpush2.msra.mxu0 0.0
        %1162 = vmatprep.subr.mxu0 0.0
        %1163 = vmatpush2.msra.mxu0 0.0
        %1164 = vmatprep.subr.mxu0 0.0
        %1165 = vmatpush2.msra.mxu0 0.0
        %1166 = vmatprep.subr.mxu0 0.0
        %1167 = vmatpush2.msra.mxu0 0.0
        %1168 = vmatprep.subr.mxu0 0.0
        %1169 = vmatpush2.msra.mxu0 0.0
        %1170 = vmatprep.subr.mxu0 0.0
        %1171 = vmatpush2.msra.mxu0 0.0
        %1172 = vmatprep.subr.mxu0 0.0
        %1173 = vmatpush2.msra.mxu0 0.0
        %1174 = vmatprep.subr.mxu0 0.0
        %1175 = vmatpush2.msra.mxu0 0.0
        %1176 = vmatprep.subr.mxu0 0.0
        %1177 = vmatpush2.msra.mxu0 0.0
        %1178 = vmatprep.subr.mxu0 0.0
        %1179 = vmatpush2.msra.mxu0 0.0
        %1180 = vmatprep.subr.mxu0 0.0
        %1181 = vmatpush2.msra.mxu0 0.0
        %1182 = vmatprep.subr.mxu0 0.0
        %1183 = vmatpush2.msra.mxu0 0.0
        %1184 = vmatprep.subr.mxu0 0.0
        %1185 = vmatpush2.msra.mxu0 0.0
        %1186 = vmatprep.subr.mxu0 0.0
        %1187 = vmatpush2.msra.mxu0 0.0
        %1188 = vmatprep.subr.mxu0 0.0
        %1189 = vmatpush2.msra.mxu0 0.0
        %1190 = vmatprep.subr.mxu0 0.0
        %1191 = vmatpush2.msra.mxu0 0.0
        %1192 = vmatprep.mubr.f32.mxu0 0.0
        %1193 = vmatmul.mubr.f32.gmra.mxu0 %v437
        %v1194 = vpop.f32.mrf.mxu0
        %v1195 = vadd.f32 0.0, %v1194
        %v1196 = vpop.f32.mrf.mxu0
        %v1197 = vadd.f32 0.0, %v1196
        %1198 = vmatprep.mubr.f32.mxu0 0.0
        %1199 = vmatmul.mubr.f32.gmra.mxu0 %v440
        %v1200 = vpop.f32.mrf.mxu0
        %v1201 = vadd.f32 0.0, %v1200
        %v1202 = vpop.f32.mrf.mxu0
        %v1203 = vadd.f32 0.0, %v1202
        %1204 = vmatprep.mubr.f32.mxu0 0.0
        %1205 = vmatmul.mubr.f32.gmra.mxu0 %v443
        %v1206 = vpop.f32.mrf.mxu0
        %v1207 = vadd.f32 0.0, %v1206
        %v1208 = vpop.f32.mrf.mxu0
        %v1209 = vadd.f32 0.0, %v1208
        %1210 = vmatprep.mubr.f32.mxu0 0.0
        %1211 = vmatmul.mubr.f32.gmra.mxu0 %v446
        %v1212 = vpop.f32.mrf.mxu0
        %v1213 = vadd.f32 0.0, %v1212
        %v1214 = vpop.f32.mrf.mxu0
        %v1215 = vadd.f32 0.0, %v1214
        %1216 = vmatprep.mubr.f32.mxu0 0.0
        %1217 = vmatmul.mubr.f32.gmra.mxu0 %v449
        %v1218 = vpop.f32.mrf.mxu0
        %v1219 = vadd.f32 0.0, %v1218
        %v1220 = vpop.f32.mrf.mxu0
        %v1221 = vadd.f32 0.0, %v1220
        %1222 = vmatprep.mubr.f32.mxu0 0.0
        %1223 = vmatmul.mubr.f32.gmra.mxu0 %v452
        %v1224 = vpop.f32.mrf.mxu0
        %v1225 = vadd.f32 0.0, %v1224
        %v1226 = vpop.f32.mrf.mxu0
        %v1227 = vadd.f32 0.0, %v1226
        %1228 = vmatprep.mubr.f32.mxu0 0.0
        %1229 = vmatmul.mubr.f32.gmra.mxu0 %v455
        %v1230 = vpop.f32.mrf.mxu0
        %v1231 = vadd.f32 0.0, %v1230
        %v1232 = vpop.f32.mrf.mxu0
        %v1233 = vadd.f32 0.0, %v1232
        %1234 = vmatprep.mubr.f32.mxu0 0.0
        %1235 = vmatmul.mubr.f32.gmra.mxu0 %v458
        %v1236 = vpop.f32.mrf.mxu0
        %v1237 = vadd.f32 0.0, %v1236
        %v1238 = vpop.f32.mrf.mxu0
        %v1239 = vadd.f32 0.0, %v1238
        %1240 = vmatprep.mubr.f32.mxu0 0.0
        %1241 = vmatmul.mubr.f32.gmra.mxu0 %v461
        %v1242 = vpop.f32.mrf.mxu0
        %v1243 = vadd.f32 0.0, %v1242
        %v1244 = vpop.f32.mrf.mxu0
        %v1245 = vadd.f32 0.0, %v1244
        %1246 = vmatprep.mubr.f32.mxu0 0.0
        %1247 = vmatmul.mubr.f32.gmra.mxu0 %v464
        %v1248 = vpop.f32.mrf.mxu0
        %v1249 = vadd.f32 0.0, %v1248
        %v1250 = vpop.f32.mrf.mxu0
        %v1251 = vadd.f32 0.0, %v1250
        %1252 = vmatprep.mubr.f32.mxu0 0.0
        %1253 = vmatmul.mubr.f32.gmra.mxu0 %v467
        %v1254 = vpop.f32.mrf.mxu0
        %v1255 = vadd.f32 0.0, %v1254
        %v1256 = vpop.f32.mrf.mxu0
        %v1257 = vadd.f32 0.0, %v1256
        %1258 = vmatprep.mubr.f32.mxu0 0.0
        %1259 = vmatmul.mubr.f32.gmra.mxu0 %v470
        %v1260 = vpop.f32.mrf.mxu0
        %v1261 = vadd.f32 0.0, %v1260
        %v1262 = vpop.f32.mrf.mxu0
        %v1263 = vadd.f32 0.0, %v1262
        %1264 = vmatprep.mubr.f32.mxu0 0.0
        %1265 = vmatmul.mubr.f32.gmra.mxu0 %v473
        %v1266 = vpop.f32.mrf.mxu0
        %v1267 = vadd.f32 0.0, %v1266
        %v1268 = vpop.f32.mrf.mxu0
        %v1269 = vadd.f32 0.0, %v1268
        %1270 = vmatprep.mubr.f32.mxu0 0.0
        %1271 = vmatmul.mubr.f32.gmra.mxu0 %v476
        %v1272 = vpop.f32.mrf.mxu0
        %v1273 = vadd.f32 0.0, %v1272
        %v1274 = vpop.f32.mrf.mxu0
        %v1275 = vadd.f32 0.0, %v1274
        %1276 = vmatprep.mubr.f32.mxu0 0.0
        %1277 = vmatmul.mubr.f32.gmra.mxu0 %v479
        %v1278 = vpop.f32.mrf.mxu0
        %v1279 = vadd.f32 0.0, %v1278
        %v1280 = vpop.f32.mrf.mxu0
        %v1281 = vadd.f32 0.0, %v1280
        %1282 = vmatprep.mubr.f32.mxu0 0.0
        %1283 = vmatmul.mubr.f32.gmra.mxu0 %v482
        %v1284 = vpop.f32.mrf.mxu0
        %v1285 = vadd.f32 0.0, %v1284
        %v1286 = vpop.f32.mrf.mxu0
        %v1287 = vadd.f32 0.0, %v1286
        %1288 = vdwg.mxu0
        %1289 = vmatprep.subr.mxu0 0.0
        %1290 = vmatpush1.msra.mxu0 0.0
        %1291 = vmatprep.subr.mxu0 0.0
        %1292 = vmatpush1.msra.mxu0 0.0
        %1293 = vmatprep.subr.mxu0 0.0
        %1294 = vmatpush1.msra.mxu0 0.0
        %1295 = vmatprep.subr.mxu0 0.0
        %1296 = vmatpush1.msra.mxu0 0.0
        %1297 = vmatprep.subr.mxu0 0.0
        %1298 = vmatpush1.msra.mxu0 0.0
        %1299 = vmatprep.subr.mxu0 0.0
        %1300 = vmatpush1.msra.mxu0 0.0
        %1301 = vmatprep.subr.mxu0 0.0
        %1302 = vmatpush1.msra.mxu0 0.0
        %1303 = vmatprep.subr.mxu0 0.0
        %1304 = vmatpush1.msra.mxu0 0.0
        %1305 = vmatprep.subr.mxu0 0.0
        %1306 = vmatpush1.msra.mxu0 0.0
        %1307 = vmatprep.subr.mxu0 0.0
        %1308 = vmatpush1.msra.mxu0 0.0
        %1309 = vmatprep.subr.mxu0 0.0
        %1310 = vmatpush1.msra.mxu0 0.0
        %1311 = vmatprep.subr.mxu0 0.0
        %1312 = vmatpush1.msra.mxu0 0.0
        %1313 = vmatprep.subr.mxu0 0.0
        %1314 = vmatpush1.msra.mxu0 0.0
        %1315 = vmatprep.subr.mxu0 0.0
        %1316 = vmatpush1.msra.mxu0 0.0
        %1317 = vmatprep.subr.mxu0 %v398
        %1318 = vmatpush1.msra.mxu0 %v397
        %1319 = vmatprep.subr.mxu0 %v382
        %1320 = vmatpush1.msra.mxu0 %v381
        %1321 = vmatprep.subr.mxu0 0.0
        %1322 = vmatpush2.msra.mxu0 0.0
        %1323 = vmatprep.subr.mxu0 0.0
        %1324 = vmatpush2.msra.mxu0 0.0
        %1325 = vmatprep.subr.mxu0 0.0
        %1326 = vmatpush2.msra.mxu0 0.0
        %1327 = vmatprep.subr.mxu0 0.0
        %1328 = vmatpush2.msra.mxu0 0.0
        %1329 = vmatprep.subr.mxu0 0.0
        %1330 = vmatpush2.msra.mxu0 0.0
        %1331 = vmatprep.subr.mxu0 0.0
        %1332 = vmatpush2.msra.mxu0 0.0
        %1333 = vmatprep.subr.mxu0 0.0
        %1334 = vmatpush2.msra.mxu0 0.0
        %1335 = vmatprep.subr.mxu0 0.0
        %1336 = vmatpush2.msra.mxu0 0.0
        %1337 = vmatprep.subr.mxu0 0.0
        %1338 = vmatpush2.msra.mxu0 0.0
        %1339 = vmatprep.subr.mxu0 0.0
        %1340 = vmatpush2.msra.mxu0 0.0
        %1341 = vmatprep.subr.mxu0 0.0
        %1342 = vmatpush2.msra.mxu0 0.0
        %1343 = vmatprep.subr.mxu0 0.0
        %1344 = vmatpush2.msra.mxu0 0.0
        %1345 = vmatprep.subr.mxu0 0.0
        %1346 = vmatpush2.msra.mxu0 0.0
        %1347 = vmatprep.subr.mxu0 0.0
        %1348 = vmatpush2.msra.mxu0 0.0
        %1349 = vmatprep.subr.mxu0 0.0
        %1350 = vmatpush2.msra.mxu0 0.0
        %1351 = vmatprep.subr.mxu0 0.0
        %1352 = vmatpush2.msra.mxu0 0.0
        %1353 = vmatprep.mubr.f32.mxu0 0.0
        %1354 = vmatmul.mubr.f32.gmra.mxu0 %v437
        %v1355 = vpop.f32.mrf.mxu0
        %v1356 = vadd.f32 0.0, %v1355
        %v1357 = vpop.f32.mrf.mxu0
        %v1358 = vadd.f32 0.0, %v1357
        %1359 = vmatprep.mubr.f32.mxu0 0.0
        %1360 = vmatmul.mubr.f32.gmra.mxu0 %v440
        %v1361 = vpop.f32.mrf.mxu0
        %v1362 = vadd.f32 0.0, %v1361
        %v1363 = vpop.f32.mrf.mxu0
        %v1364 = vadd.f32 0.0, %v1363
        %1365 = vmatprep.mubr.f32.mxu0 0.0
        %1366 = vmatmul.mubr.f32.gmra.mxu0 %v443
        %v1367 = vpop.f32.mrf.mxu0
        %v1368 = vadd.f32 0.0, %v1367
        %v1369 = vpop.f32.mrf.mxu0
        %v1370 = vadd.f32 0.0, %v1369
        %1371 = vmatprep.mubr.f32.mxu0 0.0
        %1372 = vmatmul.mubr.f32.gmra.mxu0 %v446
        %v1373 = vpop.f32.mrf.mxu0
        %v1374 = vadd.f32 0.0, %v1373
        %v1375 = vpop.f32.mrf.mxu0
        %v1376 = vadd.f32 0.0, %v1375
        %1377 = vmatprep.mubr.f32.mxu0 0.0
        %1378 = vmatmul.mubr.f32.gmra.mxu0 %v449
        %v1379 = vpop.f32.mrf.mxu0
        %v1380 = vadd.f32 0.0, %v1379
        %v1381 = vpop.f32.mrf.mxu0
        %v1382 = vadd.f32 0.0, %v1381
        %1383 = vmatprep.mubr.f32.mxu0 0.0
        %1384 = vmatmul.mubr.f32.gmra.mxu0 %v452
        %v1385 = vpop.f32.mrf.mxu0
        %v1386 = vadd.f32 0.0, %v1385
        %v1387 = vpop.f32.mrf.mxu0
        %v1388 = vadd.f32 0.0, %v1387
        %1389 = vmatprep.mubr.f32.mxu0 0.0
        %1390 = vmatmul.mubr.f32.gmra.mxu0 %v455
        %v1391 = vpop.f32.mrf.mxu0
        %v1392 = vadd.f32 0.0, %v1391
        %v1393 = vpop.f32.mrf.mxu0
        %v1394 = vadd.f32 0.0, %v1393
        %1395 = vmatprep.mubr.f32.mxu0 0.0
        %1396 = vmatmul.mubr.f32.gmra.mxu0 %v458
        %v1397 = vpop.f32.mrf.mxu0
        %v1398 = vadd.f32 0.0, %v1397
        %v1399 = vpop.f32.mrf.mxu0
        %v1400 = vadd.f32 0.0, %v1399
        %1401 = vmatprep.mubr.f32.mxu0 0.0
        %1402 = vmatmul.mubr.f32.gmra.mxu0 %v461
        %v1403 = vpop.f32.mrf.mxu0
        %v1404 = vadd.f32 0.0, %v1403
        %v1405 = vpop.f32.mrf.mxu0
        %v1406 = vadd.f32 0.0, %v1405
        %1407 = vmatprep.mubr.f32.mxu0 0.0
        %1408 = vmatmul.mubr.f32.gmra.mxu0 %v464
        %v1409 = vpop.f32.mrf.mxu0
        %v1410 = vadd.f32 0.0, %v1409
        %v1411 = vpop.f32.mrf.mxu0
        %v1412 = vadd.f32 0.0, %v1411
        %1413 = vmatprep.mubr.f32.mxu0 0.0
        %1414 = vmatmul.mubr.f32.gmra.mxu0 %v467
        %v1415 = vpop.f32.mrf.mxu0
        %v1416 = vadd.f32 0.0, %v1415
        %v1417 = vpop.f32.mrf.mxu0
        %v1418 = vadd.f32 0.0, %v1417
        %1419 = vmatprep.mubr.f32.mxu0 0.0
        %1420 = vmatmul.mubr.f32.gmra.mxu0 %v470
        %v1421 = vpop.f32.mrf.mxu0
        %v1422 = vadd.f32 0.0, %v1421
        %v1423 = vpop.f32.mrf.mxu0
        %v1424 = vadd.f32 0.0, %v1423
        %1425 = vmatprep.mubr.f32.mxu0 0.0
        %1426 = vmatmul.mubr.f32.gmra.mxu0 %v473
        %v1427 = vpop.f32.mrf.mxu0
        %v1428 = vadd.f32 0.0, %v1427
        %v1429 = vpop.f32.mrf.mxu0
        %v1430 = vadd.f32 0.0, %v1429
        %1431 = vmatprep.mubr.f32.mxu0 0.0
        %1432 = vmatmul.mubr.f32.gmra.mxu0 %v476
        %v1433 = vpop.f32.mrf.mxu0
        %v1434 = vadd.f32 0.0, %v1433
        %v1435 = vpop.f32.mrf.mxu0
        %v1436 = vadd.f32 0.0, %v1435
        %1437 = vmatprep.mubr.f32.mxu0 0.0
        %1438 = vmatmul.mubr.f32.gmra.mxu0 %v479
        %v1439 = vpop.f32.mrf.mxu0
        %v1440 = vadd.f32 0.0, %v1439
        %v1441 = vpop.f32.mrf.mxu0
        %v1442 = vadd.f32 0.0, %v1441
        %1443 = vmatprep.mubr.f32.mxu0 0.0
        %1444 = vmatmul.mubr.f32.gmra.mxu0 %v482
        %v1445 = vpop.f32.mrf.mxu0
        %v1446 = vadd.f32 0.0, %v1445
        %v1447 = vpop.f32.mrf.mxu0
        %v1448 = vadd.f32 0.0, %v1447
        %1449 = vdwg.mxu0
        %1450 = vmatprep.subr.mxu0 0.0
        %1451 = vmatpush1.msra.mxu0 0.0
        %1452 = vmatprep.subr.mxu0 0.0
        %1453 = vmatpush1.msra.mxu0 0.0
        %1454 = vmatprep.subr.mxu0 0.0
        %1455 = vmatpush1.msra.mxu0 0.0
        %1456 = vmatprep.subr.mxu0 0.0
        %1457 = vmatpush1.msra.mxu0 0.0
        %1458 = vmatprep.subr.mxu0 0.0
        %1459 = vmatpush1.msra.mxu0 0.0
        %1460 = vmatprep.subr.mxu0 0.0
        %1461 = vmatpush1.msra.mxu0 0.0
        %1462 = vmatprep.subr.mxu0 0.0
        %1463 = vmatpush1.msra.mxu0 0.0
        %1464 = vmatprep.subr.mxu0 0.0
        %1465 = vmatpush1.msra.mxu0 0.0
        %1466 = vmatprep.subr.mxu0 0.0
        %1467 = vmatpush1.msra.mxu0 0.0
        %1468 = vmatprep.subr.mxu0 0.0
        %1469 = vmatpush1.msra.mxu0 0.0
        %1470 = vmatprep.subr.mxu0 0.0
        %1471 = vmatpush1.msra.mxu0 0.0
        %1472 = vmatprep.subr.mxu0 0.0
        %1473 = vmatpush1.msra.mxu0 0.0
        %1474 = vmatprep.subr.mxu0 0.0
        %1475 = vmatpush1.msra.mxu0 0.0
        %1476 = vmatprep.subr.mxu0 0.0
        %1477 = vmatpush1.msra.mxu0 0.0
        %1478 = vmatprep.subr.mxu0 %v400
        %1479 = vmatpush1.msra.mxu0 %v399
        %1480 = vmatprep.subr.mxu0 %v384
        %1481 = vmatpush1.msra.mxu0 %v383
        %1482 = vmatprep.subr.mxu0 0.0
        %1483 = vmatpush2.msra.mxu0 0.0
        %1484 = vmatprep.subr.mxu0 0.0
        %1485 = vmatpush2.msra.mxu0 0.0
        %1486 = vmatprep.subr.mxu0 0.0
        %1487 = vmatpush2.msra.mxu0 0.0
        %1488 = vmatprep.subr.mxu0 0.0
        %1489 = vmatpush2.msra.mxu0 0.0
        %1490 = vmatprep.subr.mxu0 0.0
        %1491 = vmatpush2.msra.mxu0 0.0
        %1492 = vmatprep.subr.mxu0 0.0
        %1493 = vmatpush2.msra.mxu0 0.0
        %1494 = vmatprep.subr.mxu0 0.0
        %1495 = vmatpush2.msra.mxu0 0.0
        %1496 = vmatprep.subr.mxu0 0.0
        %1497 = vmatpush2.msra.mxu0 0.0
        %1498 = vmatprep.subr.mxu0 0.0
        %1499 = vmatpush2.msra.mxu0 0.0
        %1500 = vmatprep.subr.mxu0 0.0
        %1501 = vmatpush2.msra.mxu0 0.0
        %1502 = vmatprep.subr.mxu0 0.0
        %1503 = vmatpush2.msra.mxu0 0.0
        %1504 = vmatprep.subr.mxu0 0.0
        %1505 = vmatpush2.msra.mxu0 0.0
        %1506 = vmatprep.subr.mxu0 0.0
        %1507 = vmatpush2.msra.mxu0 0.0
        %1508 = vmatprep.subr.mxu0 0.0
        %1509 = vmatpush2.msra.mxu0 0.0
        %1510 = vmatprep.subr.mxu0 0.0
        %1511 = vmatpush2.msra.mxu0 0.0
        %1512 = vmatprep.subr.mxu0 0.0
        %1513 = vmatpush2.msra.mxu0 0.0
        %1514 = vmatprep.mubr.f32.mxu0 0.0
        %1515 = vmatmul.mubr.f32.gmra.mxu0 %v437
        %v1516 = vpop.f32.mrf.mxu0
        %v1517 = vadd.f32 0.0, %v1516
        %v1518 = vpop.f32.mrf.mxu0
        %v1519 = vadd.f32 0.0, %v1518
        %1520 = vmatprep.mubr.f32.mxu0 0.0
        %1521 = vmatmul.mubr.f32.gmra.mxu0 %v440
        %v1522 = vpop.f32.mrf.mxu0
        %v1523 = vadd.f32 0.0, %v1522
        %v1524 = vpop.f32.mrf.mxu0
        %v1525 = vadd.f32 0.0, %v1524
        %1526 = vmatprep.mubr.f32.mxu0 0.0
        %1527 = vmatmul.mubr.f32.gmra.mxu0 %v443
        %v1528 = vpop.f32.mrf.mxu0
        %v1529 = vadd.f32 0.0, %v1528
        %v1530 = vpop.f32.mrf.mxu0
        %v1531 = vadd.f32 0.0, %v1530
        %1532 = vmatprep.mubr.f32.mxu0 0.0
        %1533 = vmatmul.mubr.f32.gmra.mxu0 %v446
        %v1534 = vpop.f32.mrf.mxu0
        %v1535 = vadd.f32 0.0, %v1534
        %v1536 = vpop.f32.mrf.mxu0
        %v1537 = vadd.f32 0.0, %v1536
        %1538 = vmatprep.mubr.f32.mxu0 0.0
        %1539 = vmatmul.mubr.f32.gmra.mxu0 %v449
        %v1540 = vpop.f32.mrf.mxu0
        %v1541 = vadd.f32 0.0, %v1540
        %v1542 = vpop.f32.mrf.mxu0
        %v1543 = vadd.f32 0.0, %v1542
        %1544 = vmatprep.mubr.f32.mxu0 0.0
        %1545 = vmatmul.mubr.f32.gmra.mxu0 %v452
        %v1546 = vpop.f32.mrf.mxu0
        %v1547 = vadd.f32 0.0, %v1546
        %v1548 = vpop.f32.mrf.mxu0
        %v1549 = vadd.f32 0.0, %v1548
        %1550 = vmatprep.mubr.f32.mxu0 0.0
        %1551 = vmatmul.mubr.f32.gmra.mxu0 %v455
        %v1552 = vpop.f32.mrf.mxu0
        %v1553 = vadd.f32 0.0, %v1552
        %v1554 = vpop.f32.mrf.mxu0
        %v1555 = vadd.f32 0.0, %v1554
        %1556 = vmatprep.mubr.f32.mxu0 0.0
        %1557 = vmatmul.mubr.f32.gmra.mxu0 %v458
        %v1558 = vpop.f32.mrf.mxu0
        %v1559 = vadd.f32 0.0, %v1558
        %v1560 = vpop.f32.mrf.mxu0
        %v1561 = vadd.f32 0.0, %v1560
        %1562 = vmatprep.mubr.f32.mxu0 0.0
        %1563 = vmatmul.mubr.f32.gmra.mxu0 %v461
        %v1564 = vpop.f32.mrf.mxu0
        %v1565 = vadd.f32 0.0, %v1564
        %v1566 = vpop.f32.mrf.mxu0
        %v1567 = vadd.f32 0.0, %v1566
        %1568 = vmatprep.mubr.f32.mxu0 0.0
        %1569 = vmatmul.mubr.f32.gmra.mxu0 %v464
        %v1570 = vpop.f32.mrf.mxu0
        %v1571 = vadd.f32 0.0, %v1570
        %v1572 = vpop.f32.mrf.mxu0
        %v1573 = vadd.f32 0.0, %v1572
        %1574 = vmatprep.mubr.f32.mxu0 0.0
        %1575 = vmatmul.mubr.f32.gmra.mxu0 %v467
        %v1576 = vpop.f32.mrf.mxu0
        %v1577 = vadd.f32 0.0, %v1576
        %v1578 = vpop.f32.mrf.mxu0
        %v1579 = vadd.f32 0.0, %v1578
        %1580 = vmatprep.mubr.f32.mxu0 0.0
        %1581 = vmatmul.mubr.f32.gmra.mxu0 %v470
        %v1582 = vpop.f32.mrf.mxu0
        %v1583 = vadd.f32 0.0, %v1582
        %v1584 = vpop.f32.mrf.mxu0
        %v1585 = vadd.f32 0.0, %v1584
        %1586 = vmatprep.mubr.f32.mxu0 0.0
        %1587 = vmatmul.mubr.f32.gmra.mxu0 %v473
        %v1588 = vpop.f32.mrf.mxu0
        %v1589 = vadd.f32 0.0, %v1588
        %v1590 = vpop.f32.mrf.mxu0
        %v1591 = vadd.f32 0.0, %v1590
        %1592 = vmatprep.mubr.f32.mxu0 0.0
        %1593 = vmatmul.mubr.f32.gmra.mxu0 %v476
        %v1594 = vpop.f32.mrf.mxu0
        %v1595 = vadd.f32 0.0, %v1594
        %v1596 = vpop.f32.mrf.mxu0
        %v1597 = vadd.f32 0.0, %v1596
        %1598 = vmatprep.mubr.f32.mxu0 0.0
        %1599 = vmatmul.mubr.f32.gmra.mxu0 %v479
        %v1600 = vpop.f32.mrf.mxu0
        %v1601 = vadd.f32 0.0, %v1600
        %v1602 = vpop.f32.mrf.mxu0
        %v1603 = vadd.f32 0.0, %v1602
        %1604 = vmatprep.mubr.f32.mxu0 0.0
        %1605 = vmatmul.mubr.f32.gmra.mxu0 %v482
        %v1606 = vpop.f32.mrf.mxu0
        %v1607 = vadd.f32 0.0, %v1606
        %v1608 = vpop.f32.mrf.mxu0
        %v1609 = vadd.f32 0.0, %v1608
        %1610 = vdwg.mxu0
        %1611 = vmatprep.subr.mxu0 0.0
        %1612 = vmatpush1.msra.mxu0 0.0
        %1613 = vmatprep.subr.mxu0 0.0
        %1614 = vmatpush1.msra.mxu0 0.0
        %1615 = vmatprep.subr.mxu0 0.0
        %1616 = vmatpush1.msra.mxu0 0.0
        %1617 = vmatprep.subr.mxu0 0.0
        %1618 = vmatpush1.msra.mxu0 0.0
        %1619 = vmatprep.subr.mxu0 0.0
        %1620 = vmatpush1.msra.mxu0 0.0
        %1621 = vmatprep.subr.mxu0 0.0
        %1622 = vmatpush1.msra.mxu0 0.0
        %1623 = vmatprep.subr.mxu0 0.0
        %1624 = vmatpush1.msra.mxu0 0.0
        %1625 = vmatprep.subr.mxu0 0.0
        %1626 = vmatpush1.msra.mxu0 0.0
        %1627 = vmatprep.subr.mxu0 0.0
        %1628 = vmatpush1.msra.mxu0 0.0
        %1629 = vmatprep.subr.mxu0 0.0
        %1630 = vmatpush1.msra.mxu0 0.0
        %1631 = vmatprep.subr.mxu0 0.0
        %1632 = vmatpush1.msra.mxu0 0.0
        %1633 = vmatprep.subr.mxu0 0.0
        %1634 = vmatpush1.msra.mxu0 0.0
        %1635 = vmatprep.subr.mxu0 0.0
        %1636 = vmatpush1.msra.mxu0 0.0
        %1637 = vmatprep.subr.mxu0 0.0
        %1638 = vmatpush1.msra.mxu0 0.0
        %1639 = vmatprep.subr.mxu0 %v402
        %1640 = vmatpush1.msra.mxu0 %v401
        %1641 = vmatprep.subr.mxu0 %v386
        %1642 = vmatpush1.msra.mxu0 %v385
        %1643 = vmatprep.subr.mxu0 0.0
        %1644 = vmatpush2.msra.mxu0 0.0
        %1645 = vmatprep.subr.mxu0 0.0
        %1646 = vmatpush2.msra.mxu0 0.0
        %1647 = vmatprep.subr.mxu0 0.0
        %1648 = vmatpush2.msra.mxu0 0.0
        %1649 = vmatprep.subr.mxu0 0.0
        %1650 = vmatpush2.msra.mxu0 0.0
        %1651 = vmatprep.subr.mxu0 0.0
        %1652 = vmatpush2.msra.mxu0 0.0
        %1653 = vmatprep.subr.mxu0 0.0
        %1654 = vmatpush2.msra.mxu0 0.0
        %1655 = vmatprep.subr.mxu0 0.0
        %1656 = vmatpush2.msra.mxu0 0.0
        %1657 = vmatprep.subr.mxu0 0.0
        %1658 = vmatpush2.msra.mxu0 0.0
        %1659 = vmatprep.subr.mxu0 0.0
        %1660 = vmatpush2.msra.mxu0 0.0
        %1661 = vmatprep.subr.mxu0 0.0
        %1662 = vmatpush2.msra.mxu0 0.0
        %1663 = vmatprep.subr.mxu0 0.0
        %1664 = vmatpush2.msra.mxu0 0.0
        %1665 = vmatprep.subr.mxu0 0.0
        %1666 = vmatpush2.msra.mxu0 0.0
        %1667 = vmatprep.subr.mxu0 0.0
        %1668 = vmatpush2.msra.mxu0 0.0
        %1669 = vmatprep.subr.mxu0 0.0
        %1670 = vmatpush2.msra.mxu0 0.0
        %1671 = vmatprep.subr.mxu0 0.0
        %1672 = vmatpush2.msra.mxu0 0.0
        %1673 = vmatprep.subr.mxu0 0.0
        %1674 = vmatpush2.msra.mxu0 0.0
        %1675 = vmatprep.mubr.f32.mxu0 0.0
        %1676 = vmatmul.mubr.f32.gmra.mxu0 %v437
        %v1677 = vpop.f32.mrf.mxu0
        %v1678 = vadd.f32 0.0, %v1677
        %v1679 = vpop.f32.mrf.mxu0
        %v1680 = vadd.f32 0.0, %v1679
        %1681 = vmatprep.mubr.f32.mxu0 0.0
        %1682 = vmatmul.mubr.f32.gmra.mxu0 %v440
        %v1683 = vpop.f32.mrf.mxu0
        %v1684 = vadd.f32 0.0, %v1683
        %v1685 = vpop.f32.mrf.mxu0
        %v1686 = vadd.f32 0.0, %v1685
        %1687 = vmatprep.mubr.f32.mxu0 0.0
        %1688 = vmatmul.mubr.f32.gmra.mxu0 %v443
        %v1689 = vpop.f32.mrf.mxu0
        %v1690 = vadd.f32 0.0, %v1689
        %v1691 = vpop.f32.mrf.mxu0
        %v1692 = vadd.f32 0.0, %v1691
        %1693 = vmatprep.mubr.f32.mxu0 0.0
        %1694 = vmatmul.mubr.f32.gmra.mxu0 %v446
        %v1695 = vpop.f32.mrf.mxu0
        %v1696 = vadd.f32 0.0, %v1695
        %v1697 = vpop.f32.mrf.mxu0
        %v1698 = vadd.f32 0.0, %v1697
        %1699 = vmatprep.mubr.f32.mxu0 0.0
        %1700 = vmatmul.mubr.f32.gmra.mxu0 %v449
        %v1701 = vpop.f32.mrf.mxu0
        %v1702 = vadd.f32 0.0, %v1701
        %v1703 = vpop.f32.mrf.mxu0
        %v1704 = vadd.f32 0.0, %v1703
        %1705 = vmatprep.mubr.f32.mxu0 0.0
        %1706 = vmatmul.mubr.f32.gmra.mxu0 %v452
        %v1707 = vpop.f32.mrf.mxu0
        %v1708 = vadd.f32 0.0, %v1707
        %v1709 = vpop.f32.mrf.mxu0
        %v1710 = vadd.f32 0.0, %v1709
        %1711 = vmatprep.mubr.f32.mxu0 0.0
        %1712 = vmatmul.mubr.f32.gmra.mxu0 %v455
        %v1713 = vpop.f32.mrf.mxu0
        %v1714 = vadd.f32 0.0, %v1713
        %v1715 = vpop.f32.mrf.mxu0
        %v1716 = vadd.f32 0.0, %v1715
        %1717 = vmatprep.mubr.f32.mxu0 0.0
        %1718 = vmatmul.mubr.f32.gmra.mxu0 %v458
        %v1719 = vpop.f32.mrf.mxu0
        %v1720 = vadd.f32 0.0, %v1719
        %v1721 = vpop.f32.mrf.mxu0
        %v1722 = vadd.f32 0.0, %v1721
        %1723 = vmatprep.mubr.f32.mxu0 0.0
        %1724 = vmatmul.mubr.f32.gmra.mxu0 %v461
        %v1725 = vpop.f32.mrf.mxu0
        %v1726 = vadd.f32 0.0, %v1725
        %v1727 = vpop.f32.mrf.mxu0
        %v1728 = vadd.f32 0.0, %v1727
        %1729 = vmatprep.mubr.f32.mxu0 0.0
        %1730 = vmatmul.mubr.f32.gmra.mxu0 %v464
        %v1731 = vpop.f32.mrf.mxu0
        %v1732 = vadd.f32 0.0, %v1731
        %v1733 = vpop.f32.mrf.mxu0
        %v1734 = vadd.f32 0.0, %v1733
        %1735 = vmatprep.mubr.f32.mxu0 0.0
        %1736 = vmatmul.mubr.f32.gmra.mxu0 %v467
        %v1737 = vpop.f32.mrf.mxu0
        %v1738 = vadd.f32 0.0, %v1737
        %v1739 = vpop.f32.mrf.mxu0
        %v1740 = vadd.f32 0.0, %v1739
        %1741 = vmatprep.mubr.f32.mxu0 0.0
        %1742 = vmatmul.mubr.f32.gmra.mxu0 %v470
        %v1743 = vpop.f32.mrf.mxu0
        %v1744 = vadd.f32 0.0, %v1743
        %v1745 = vpop.f32.mrf.mxu0
        %v1746 = vadd.f32 0.0, %v1745
        %1747 = vmatprep.mubr.f32.mxu0 0.0
        %1748 = vmatmul.mubr.f32.gmra.mxu0 %v473
        %v1749 = vpop.f32.mrf.mxu0
        %v1750 = vadd.f32 0.0, %v1749
        %v1751 = vpop.f32.mrf.mxu0
        %v1752 = vadd.f32 0.0, %v1751
        %1753 = vmatprep.mubr.f32.mxu0 0.0
        %1754 = vmatmul.mubr.f32.gmra.mxu0 %v476
        %v1755 = vpop.f32.mrf.mxu0
        %v1756 = vadd.f32 0.0, %v1755
        %v1757 = vpop.f32.mrf.mxu0
        %v1758 = vadd.f32 0.0, %v1757
        %1759 = vmatprep.mubr.f32.mxu0 0.0
        %1760 = vmatmul.mubr.f32.gmra.mxu0 %v479
        %v1761 = vpop.f32.mrf.mxu0
        %v1762 = vadd.f32 0.0, %v1761
        %v1763 = vpop.f32.mrf.mxu0
        %v1764 = vadd.f32 0.0, %v1763
        %1765 = vmatprep.mubr.f32.mxu0 0.0
        %1766 = vmatmul.mubr.f32.gmra.mxu0 %v482
        %v1767 = vpop.f32.mrf.mxu0
        %v1768 = vadd.f32 0.0, %v1767
        %v1769 = vpop.f32.mrf.mxu0
        %v1770 = vadd.f32 0.0, %v1769
        %1771 = vdwg.mxu0
        %1772 = vxpose.xlu0.b32.start [1/16] %v369, 128
        %1773 = vxpose.xlu0.b32.cont [2/16] %v370, 128
        %1774 = vxpose.xlu0.b32.cont [3/16] 0.0, 128
        %1775 = vxpose.xlu0.b32.cont [4/16] 0.0, 128
        %1776 = vxpose.xlu0.b32.cont [5/16] 0.0, 128
        %1777 = vxpose.xlu0.b32.cont [6/16] 0.0, 128
        %1778 = vxpose.xlu0.b32.cont [7/16] 0.0, 128
        %1779 = vxpose.xlu0.b32.cont [8/16] 0.0, 128
        %1780 = vxpose.xlu0.b32.cont [9/16] 0.0, 128
        %1781 = vxpose.xlu0.b32.cont [10/16] 0.0, 128
        %1782 = vxpose.xlu0.b32.cont [11/16] 0.0, 128
        %1783 = vxpose.xlu0.b32.cont [12/16] 0.0, 128
        %1784 = vxpose.xlu0.b32.cont [13/16] 0.0, 128
        %1785 = vxpose.xlu0.b32.cont [14/16] 0.0, 128
        %1786 = vxpose.xlu0.b32.cont [15/16] 0.0, 128
        %1787 = vxpose.xlu0.b32.end [16/16] 0.0, 128
        %v1788 = vpop.trf.xlu0
        %v1789 = vpop.trf.xlu0
        %v1790 = vpop.trf.xlu0
        %v1791 = vpop.trf.xlu0
        %v1792 = vpop.trf.xlu0
        %v1793 = vpop.trf.xlu0
        %v1794 = vpop.trf.xlu0
        %v1795 = vpop.trf.xlu0
        %v1796 = vpop.trf.xlu0
        %v1797 = vpop.trf.xlu0
        %v1798 = vpop.trf.xlu0
        %v1799 = vpop.trf.xlu0
        %v1800 = vpop.trf.xlu0
        %v1801 = vpop.trf.xlu0
        %v1802 = vpop.trf.xlu0
        %v1803 = vpop.trf.xlu0
        %1805 = vset.pattern.permute.xlu0 0
        %1806 = vperm.xlu0 %1805, %v1788
        %v1807 = vpop.permute.xlu0 %1806
        %1810 = vset.pattern.permute.xlu0 0
        %1811 = vperm.xlu0 %1810, %v1789
        %v1812 = vpop.permute.xlu0 %1811
        %1815 = vset.pattern.permute.xlu0 0
        %1816 = vperm.xlu0 %1815, %v1790
        %v1817 = vpop.permute.xlu0 %1816
        %1820 = vset.pattern.permute.xlu0 0
        %1821 = vperm.xlu0 %1820, %v1791
        %v1822 = vpop.permute.xlu0 %1821
        %1825 = vset.pattern.permute.xlu0 0
        %1826 = vperm.xlu0 %1825, %v1792
        %v1827 = vpop.permute.xlu0 %1826
        %1830 = vset.pattern.permute.xlu0 0
        %1831 = vperm.xlu0 %1830, %v1793
        %v1832 = vpop.permute.xlu0 %1831
        %1835 = vset.pattern.permute.xlu0 0
        %1836 = vperm.xlu0 %1835, %v1794
        %v1837 = vpop.permute.xlu0 %1836
        %1840 = vset.pattern.permute.xlu0 0
        %1841 = vperm.xlu0 %1840, %v1795
        %v1842 = vpop.permute.xlu0 %1841
        %1845 = vset.pattern.permute.xlu0 0
        %1846 = vperm.xlu0 %1845, %v1796
        %v1847 = vpop.permute.xlu0 %1846
        %1850 = vset.pattern.permute.xlu0 0
        %1851 = vperm.xlu0 %1850, %v1797
        %v1852 = vpop.permute.xlu0 %1851
        %1855 = vset.pattern.permute.xlu0 0
        %1856 = vperm.xlu0 %1855, %v1798
        %v1857 = vpop.permute.xlu0 %1856
        %1860 = vset.pattern.permute.xlu0 0
        %1861 = vperm.xlu0 %1860, %v1799
        %v1862 = vpop.permute.xlu0 %1861
        %1865 = vset.pattern.permute.xlu0 0
        %1866 = vperm.xlu0 %1865, %v1800
        %v1867 = vpop.permute.xlu0 %1866
        %1870 = vset.pattern.permute.xlu0 0
        %1871 = vperm.xlu0 %1870, %v1801
        %v1872 = vpop.permute.xlu0 %1871
        %1875 = vset.pattern.permute.xlu0 0
        %1876 = vperm.xlu0 %1875, %v1802
        %v1877 = vpop.permute.xlu0 %1876
        %1880 = vset.pattern.permute.xlu0 0
        %1881 = vperm.xlu0 %1880, %v1803
        %v1882 = vpop.permute.xlu0 %1881
        %v1884 = vmul.f32 %v1807, %v551
        %v1885 = vmul.f32 %v1812, %v557
        %v1886 = vmul.f32 %v1817, %v563
        %v1887 = vmul.f32 %v1822, %v569
        %v1888 = vmul.f32 %v1827, %v575
        %v1889 = vmul.f32 %v1832, %v581
        %v1890 = vmul.f32 %v1837, %v587
        %v1891 = vmul.f32 %v1842, %v593
        %v1892 = vmul.f32 %v1847, %v599
        %v1893 = vmul.f32 %v1852, %v605
        %v1894 = vmul.f32 %v1857, %v611
        %v1895 = vmul.f32 %v1862, %v617
        %v1896 = vmul.f32 %v1867, %v623
        %v1897 = vmul.f32 %v1872, %v629
        %v1898 = vmul.f32 %v1877, %v635
        %v1899 = vmul.f32 %v1882, %v641
        %v1900 = vadd.f32 %v1884, 0.0
        %v1901 = vadd.f32 %v1885, 0.0
        %v1902 = vadd.f32 %v1886, 0.0
        %v1903 = vadd.f32 %v1887, 0.0
        %v1904 = vadd.f32 %v1888, 0.0
        %v1905 = vadd.f32 %v1889, 0.0
        %v1906 = vadd.f32 %v1890, 0.0
        %v1907 = vadd.f32 %v1891, 0.0
        %v1908 = vadd.f32 %v1892, 0.0
        %v1909 = vadd.f32 %v1893, 0.0
        %v1910 = vadd.f32 %v1894, 0.0
        %v1911 = vadd.f32 %v1895, 0.0
        %v1912 = vadd.f32 %v1896, 0.0
        %v1913 = vadd.f32 %v1897, 0.0
        %v1914 = vadd.f32 %v1898, 0.0
        %v1915 = vadd.f32 %v1899, 0.0
        %1916 = vset.pattern.permute.xlu0 1
        %1917 = vperm.xlu0 %1916, %v1788
        %v1918 = vpop.permute.xlu0 %1917
        %1920 = vset.pattern.permute.xlu0 1
        %1921 = vperm.xlu0 %1920, %v1789
        %v1922 = vpop.permute.xlu0 %1921
        %1924 = vset.pattern.permute.xlu0 1
        %1925 = vperm.xlu0 %1924, %v1790
        %v1926 = vpop.permute.xlu0 %1925
        %1928 = vset.pattern.permute.xlu0 1
        %1929 = vperm.xlu0 %1928, %v1791
        %v1930 = vpop.permute.xlu0 %1929
        %1932 = vset.pattern.permute.xlu0 1
        %1933 = vperm.xlu0 %1932, %v1792
        %v1934 = vpop.permute.xlu0 %1933
        %1936 = vset.pattern.permute.xlu0 1
        %1937 = vperm.xlu0 %1936, %v1793
        %v1938 = vpop.permute.xlu0 %1937
        %1940 = vset.pattern.permute.xlu0 1
        %1941 = vperm.xlu0 %1940, %v1794
        %v1942 = vpop.permute.xlu0 %1941
        %1944 = vset.pattern.permute.xlu0 1
        %1945 = vperm.xlu0 %1944, %v1795
        %v1946 = vpop.permute.xlu0 %1945
        %1948 = vset.pattern.permute.xlu0 1
        %1949 = vperm.xlu0 %1948, %v1796
        %v1950 = vpop.permute.xlu0 %1949
        %1952 = vset.pattern.permute.xlu0 1
        %1953 = vperm.xlu0 %1952, %v1797
        %v1954 = vpop.permute.xlu0 %1953
        %1956 = vset.pattern.permute.xlu0 1
        %1957 = vperm.xlu0 %1956, %v1798
        %v1958 = vpop.permute.xlu0 %1957
        %1960 = vset.pattern.permute.xlu0 1
        %1961 = vperm.xlu0 %1960, %v1799
        %v1962 = vpop.permute.xlu0 %1961
        %1964 = vset.pattern.permute.xlu0 1
        %1965 = vperm.xlu0 %1964, %v1800
        %v1966 = vpop.permute.xlu0 %1965
        %1968 = vset.pattern.permute.xlu0 1
        %1969 = vperm.xlu0 %1968, %v1801
        %v1970 = vpop.permute.xlu0 %1969
        %1972 = vset.pattern.permute.xlu0 1
        %1973 = vperm.xlu0 %1972, %v1802
        %v1974 = vpop.permute.xlu0 %1973
        %1976 = vset.pattern.permute.xlu0 1
        %1977 = vperm.xlu0 %1976, %v1803
        %v1978 = vpop.permute.xlu0 %1977
        %v1980 = vmul.f32 %v1918, %v553
        %v1981 = vmul.f32 %v1922, %v559
        %v1982 = vmul.f32 %v1926, %v565
        %v1983 = vmul.f32 %v1930, %v571
        %v1984 = vmul.f32 %v1934, %v577
        %v1985 = vmul.f32 %v1938, %v583
        %v1986 = vmul.f32 %v1942, %v589
        %v1987 = vmul.f32 %v1946, %v595
        %v1988 = vmul.f32 %v1950, %v601
        %v1989 = vmul.f32 %v1954, %v607
        %v1990 = vmul.f32 %v1958, %v613
        %v1991 = vmul.f32 %v1962, %v619
        %v1992 = vmul.f32 %v1966, %v625
        %v1993 = vmul.f32 %v1970, %v631
        %v1994 = vmul.f32 %v1974, %v637
        %v1995 = vmul.f32 %v1978, %v643
        %v1996 = vadd.f32 %v1900, %v1980
        %v1997 = vadd.f32 %v1901, %v1981
        %v1998 = vadd.f32 %v1902, %v1982
        %v1999 = vadd.f32 %v1903, %v1983
        %v2000 = vadd.f32 %v1904, %v1984
        %v2001 = vadd.f32 %v1905, %v1985
        %v2002 = vadd.f32 %v1906, %v1986
        %v2003 = vadd.f32 %v1907, %v1987
        %v2004 = vadd.f32 %v1908, %v1988
        %v2005 = vadd.f32 %v1909, %v1989
        %v2006 = vadd.f32 %v1910, %v1990
        %v2007 = vadd.f32 %v1911, %v1991
        %v2008 = vadd.f32 %v1912, %v1992
        %v2009 = vadd.f32 %v1913, %v1993
        %v2010 = vadd.f32 %v1914, %v1994
        %v2011 = vadd.f32 %v1915, %v1995
        %2012 = vset.pattern.permute.xlu0 2
        %2013 = vperm.xlu0 %2012, %v1788
        %v2014 = vpop.permute.xlu0 %2013
        %2016 = vset.pattern.permute.xlu0 2
        %2017 = vperm.xlu0 %2016, %v1789
        %v2018 = vpop.permute.xlu0 %2017
        %2020 = vset.pattern.permute.xlu0 2
        %2021 = vperm.xlu0 %2020, %v1790
        %v2022 = vpop.permute.xlu0 %2021
        %2024 = vset.pattern.permute.xlu0 2
        %2025 = vperm.xlu0 %2024, %v1791
        %v2026 = vpop.permute.xlu0 %2025
        %2028 = vset.pattern.permute.xlu0 2
        %2029 = vperm.xlu0 %2028, %v1792
        %v2030 = vpop.permute.xlu0 %2029
        %2032 = vset.pattern.permute.xlu0 2
        %2033 = vperm.xlu0 %2032, %v1793
        %v2034 = vpop.permute.xlu0 %2033
        %2036 = vset.pattern.permute.xlu0 2
        %2037 = vperm.xlu0 %2036, %v1794
        %v2038 = vpop.permute.xlu0 %2037
        %2040 = vset.pattern.permute.xlu0 2
        %2041 = vperm.xlu0 %2040, %v1795
        %v2042 = vpop.permute.xlu0 %2041
        %2044 = vset.pattern.permute.xlu0 2
        %2045 = vperm.xlu0 %2044, %v1796
        %v2046 = vpop.permute.xlu0 %2045
        %2048 = vset.pattern.permute.xlu0 2
        %2049 = vperm.xlu0 %2048, %v1797
        %v2050 = vpop.permute.xlu0 %2049
        %2052 = vset.pattern.permute.xlu0 2
        %2053 = vperm.xlu0 %2052, %v1798
        %v2054 = vpop.permute.xlu0 %2053
        %2056 = vset.pattern.permute.xlu0 2
        %2057 = vperm.xlu0 %2056, %v1799
        %v2058 = vpop.permute.xlu0 %2057
        %2060 = vset.pattern.permute.xlu0 2
        %2061 = vperm.xlu0 %2060, %v1800
        %v2062 = vpop.permute.xlu0 %2061
        %2064 = vset.pattern.permute.xlu0 2
        %2065 = vperm.xlu0 %2064, %v1801
        %v2066 = vpop.permute.xlu0 %2065
        %2068 = vset.pattern.permute.xlu0 2
        %2069 = vperm.xlu0 %2068, %v1802
        %v2070 = vpop.permute.xlu0 %2069
        %2072 = vset.pattern.permute.xlu0 2
        %2073 = vperm.xlu0 %2072, %v1803
        %v2074 = vpop.permute.xlu0 %2073
        %v2076 = vmul.f32 %v2014, %v712
        %v2077 = vmul.f32 %v2018, %v718
        %v2078 = vmul.f32 %v2022, %v724
        %v2079 = vmul.f32 %v2026, %v730
        %v2080 = vmul.f32 %v2030, %v736
        %v2081 = vmul.f32 %v2034, %v742
        %v2082 = vmul.f32 %v2038, %v748
        %v2083 = vmul.f32 %v2042, %v754
        %v2084 = vmul.f32 %v2046, %v760
        %v2085 = vmul.f32 %v2050, %v766
        %v2086 = vmul.f32 %v2054, %v772
        %v2087 = vmul.f32 %v2058, %v778
        %v2088 = vmul.f32 %v2062, %v784
        %v2089 = vmul.f32 %v2066, %v790
        %v2090 = vmul.f32 %v2070, %v796
        %v2091 = vmul.f32 %v2074, %v802
        %v2092 = vadd.f32 %v1996, %v2076
        %v2093 = vadd.f32 %v1997, %v2077
        %v2094 = vadd.f32 %v1998, %v2078
        %v2095 = vadd.f32 %v1999, %v2079
        %v2096 = vadd.f32 %v2000, %v2080
        %v2097 = vadd.f32 %v2001, %v2081
        %v2098 = vadd.f32 %v2002, %v2082
        %v2099 = vadd.f32 %v2003, %v2083
        %v2100 = vadd.f32 %v2004, %v2084
        %v2101 = vadd.f32 %v2005, %v2085
        %v2102 = vadd.f32 %v2006, %v2086
        %v2103 = vadd.f32 %v2007, %v2087
        %v2104 = vadd.f32 %v2008, %v2088
        %v2105 = vadd.f32 %v2009, %v2089
        %v2106 = vadd.f32 %v2010, %v2090
        %v2107 = vadd.f32 %v2011, %v2091
        %2108 = vset.pattern.permute.xlu0 3
        %2109 = vperm.xlu0 %2108, %v1788
        %v2110 = vpop.permute.xlu0 %2109
        %2112 = vset.pattern.permute.xlu0 3
        %2113 = vperm.xlu0 %2112, %v1789
        %v2114 = vpop.permute.xlu0 %2113
        %2116 = vset.pattern.permute.xlu0 3
        %2117 = vperm.xlu0 %2116, %v1790
        %v2118 = vpop.permute.xlu0 %2117
        %2120 = vset.pattern.permute.xlu0 3
        %2121 = vperm.xlu0 %2120, %v1791
        %v2122 = vpop.permute.xlu0 %2121
        %2124 = vset.pattern.permute.xlu0 3
        %2125 = vperm.xlu0 %2124, %v1792
        %v2126 = vpop.permute.xlu0 %2125
        %2128 = vset.pattern.permute.xlu0 3
        %2129 = vperm.xlu0 %2128, %v1793
        %v2130 = vpop.permute.xlu0 %2129
        %2132 = vset.pattern.permute.xlu0 3
        %2133 = vperm.xlu0 %2132, %v1794
        %v2134 = vpop.permute.xlu0 %2133
        %2136 = vset.pattern.permute.xlu0 3
        %2137 = vperm.xlu0 %2136, %v1795
        %v2138 = vpop.permute.xlu0 %2137
        %2140 = vset.pattern.permute.xlu0 3
        %2141 = vperm.xlu0 %2140, %v1796
        %v2142 = vpop.permute.xlu0 %2141
        %2144 = vset.pattern.permute.xlu0 3
        %2145 = vperm.xlu0 %2144, %v1797
        %v2146 = vpop.permute.xlu0 %2145
        %2148 = vset.pattern.permute.xlu0 3
        %2149 = vperm.xlu0 %2148, %v1798
        %v2150 = vpop.permute.xlu0 %2149
        %2152 = vset.pattern.permute.xlu0 3
        %2153 = vperm.xlu0 %2152, %v1799
        %v2154 = vpop.permute.xlu0 %2153
        %2156 = vset.pattern.permute.xlu0 3
        %2157 = vperm.xlu0 %2156, %v1800
        %v2158 = vpop.permute.xlu0 %2157
        %2160 = vset.pattern.permute.xlu0 3
        %2161 = vperm.xlu0 %2160, %v1801
        %v2162 = vpop.permute.xlu0 %2161
        %2164 = vset.pattern.permute.xlu0 3
        %2165 = vperm.xlu0 %2164, %v1802
        %v2166 = vpop.permute.xlu0 %2165
        %2168 = vset.pattern.permute.xlu0 3
        %2169 = vperm.xlu0 %2168, %v1803
        %v2170 = vpop.permute.xlu0 %2169
        %v2172 = vmul.f32 %v2110, %v714
        %v2173 = vmul.f32 %v2114, %v720
        %v2174 = vmul.f32 %v2118, %v726
        %v2175 = vmul.f32 %v2122, %v732
        %v2176 = vmul.f32 %v2126, %v738
        %v2177 = vmul.f32 %v2130, %v744
        %v2178 = vmul.f32 %v2134, %v750
        %v2179 = vmul.f32 %v2138, %v756
        %v2180 = vmul.f32 %v2142, %v762
        %v2181 = vmul.f32 %v2146, %v768
        %v2182 = vmul.f32 %v2150, %v774
        %v2183 = vmul.f32 %v2154, %v780
        %v2184 = vmul.f32 %v2158, %v786
        %v2185 = vmul.f32 %v2162, %v792
        %v2186 = vmul.f32 %v2166, %v798
        %v2187 = vmul.f32 %v2170, %v804
        %v2188 = vadd.f32 %v2092, %v2172
        %v2189 = vadd.f32 %v2093, %v2173
        %v2190 = vadd.f32 %v2094, %v2174
        %v2191 = vadd.f32 %v2095, %v2175
        %v2192 = vadd.f32 %v2096, %v2176
        %v2193 = vadd.f32 %v2097, %v2177
        %v2194 = vadd.f32 %v2098, %v2178
        %v2195 = vadd.f32 %v2099, %v2179
        %v2196 = vadd.f32 %v2100, %v2180
        %v2197 = vadd.f32 %v2101, %v2181
        %v2198 = vadd.f32 %v2102, %v2182
        %v2199 = vadd.f32 %v2103, %v2183
        %v2200 = vadd.f32 %v2104, %v2184
        %v2201 = vadd.f32 %v2105, %v2185
        %v2202 = vadd.f32 %v2106, %v2186
        %v2203 = vadd.f32 %v2107, %v2187
        %2204 = vset.pattern.permute.xlu0 4
        %2205 = vperm.xlu0 %2204, %v1788
        %v2206 = vpop.permute.xlu0 %2205
        %2208 = vset.pattern.permute.xlu0 4
        %2209 = vperm.xlu0 %2208, %v1789
        %v2210 = vpop.permute.xlu0 %2209
        %2212 = vset.pattern.permute.xlu0 4
        %2213 = vperm.xlu0 %2212, %v1790
        %v2214 = vpop.permute.xlu0 %2213
        %2216 = vset.pattern.permute.xlu0 4
        %2217 = vperm.xlu0 %2216, %v1791
        %v2218 = vpop.permute.xlu0 %2217
        %2220 = vset.pattern.permute.xlu0 4
        %2221 = vperm.xlu0 %2220, %v1792
        %v2222 = vpop.permute.xlu0 %2221
        %2224 = vset.pattern.permute.xlu0 4
        %2225 = vperm.xlu0 %2224, %v1793
        %v2226 = vpop.permute.xlu0 %2225
        %2228 = vset.pattern.permute.xlu0 4
        %2229 = vperm.xlu0 %2228, %v1794
        %v2230 = vpop.permute.xlu0 %2229
        %2232 = vset.pattern.permute.xlu0 4
        %2233 = vperm.xlu0 %2232, %v1795
        %v2234 = vpop.permute.xlu0 %2233
        %2236 = vset.pattern.permute.xlu0 4
        %2237 = vperm.xlu0 %2236, %v1796
        %v2238 = vpop.permute.xlu0 %2237
        %2240 = vset.pattern.permute.xlu0 4
        %2241 = vperm.xlu0 %2240, %v1797
        %v2242 = vpop.permute.xlu0 %2241
        %2244 = vset.pattern.permute.xlu0 4
        %2245 = vperm.xlu0 %2244, %v1798
        %v2246 = vpop.permute.xlu0 %2245
        %2248 = vset.pattern.permute.xlu0 4
        %2249 = vperm.xlu0 %2248, %v1799
        %v2250 = vpop.permute.xlu0 %2249
        %2252 = vset.pattern.permute.xlu0 4
        %2253 = vperm.xlu0 %2252, %v1800
        %v2254 = vpop.permute.xlu0 %2253
        %2256 = vset.pattern.permute.xlu0 4
        %2257 = vperm.xlu0 %2256, %v1801
        %v2258 = vpop.permute.xlu0 %2257
        %2260 = vset.pattern.permute.xlu0 4
        %2261 = vperm.xlu0 %2260, %v1802
        %v2262 = vpop.permute.xlu0 %2261
        %2264 = vset.pattern.permute.xlu0 4
        %2265 = vperm.xlu0 %2264, %v1803
        %v2266 = vpop.permute.xlu0 %2265
        %v2268 = vmul.f32 %v2206, %v873
        %v2269 = vmul.f32 %v2210, %v879
        %v2270 = vmul.f32 %v2214, %v885
        %v2271 = vmul.f32 %v2218, %v891
        %v2272 = vmul.f32 %v2222, %v897
        %v2273 = vmul.f32 %v2226, %v903
        %v2274 = vmul.f32 %v2230, %v909
        %v2275 = vmul.f32 %v2234, %v915
        %v2276 = vmul.f32 %v2238, %v921
        %v2277 = vmul.f32 %v2242, %v927
        %v2278 = vmul.f32 %v2246, %v933
        %v2279 = vmul.f32 %v2250, %v939
        %v2280 = vmul.f32 %v2254, %v945
        %v2281 = vmul.f32 %v2258, %v951
        %v2282 = vmul.f32 %v2262, %v957
        %v2283 = vmul.f32 %v2266, %v963
        %v2284 = vadd.f32 %v2188, %v2268
        %v2285 = vadd.f32 %v2189, %v2269
        %v2286 = vadd.f32 %v2190, %v2270
        %v2287 = vadd.f32 %v2191, %v2271
        %v2288 = vadd.f32 %v2192, %v2272
        %v2289 = vadd.f32 %v2193, %v2273
        %v2290 = vadd.f32 %v2194, %v2274
        %v2291 = vadd.f32 %v2195, %v2275
        %v2292 = vadd.f32 %v2196, %v2276
        %v2293 = vadd.f32 %v2197, %v2277
        %v2294 = vadd.f32 %v2198, %v2278
        %v2295 = vadd.f32 %v2199, %v2279
        %v2296 = vadd.f32 %v2200, %v2280
        %v2297 = vadd.f32 %v2201, %v2281
        %v2298 = vadd.f32 %v2202, %v2282
        %v2299 = vadd.f32 %v2203, %v2283
        %2300 = vset.pattern.permute.xlu0 5
        %2301 = vperm.xlu0 %2300, %v1788
        %v2302 = vpop.permute.xlu0 %2301
        %2304 = vset.pattern.permute.xlu0 5
        %2305 = vperm.xlu0 %2304, %v1789
        %v2306 = vpop.permute.xlu0 %2305
        %2308 = vset.pattern.permute.xlu0 5
        %2309 = vperm.xlu0 %2308, %v1790
        %v2310 = vpop.permute.xlu0 %2309
        %2312 = vset.pattern.permute.xlu0 5
        %2313 = vperm.xlu0 %2312, %v1791
        %v2314 = vpop.permute.xlu0 %2313
        %2316 = vset.pattern.permute.xlu0 5
        %2317 = vperm.xlu0 %2316, %v1792
        %v2318 = vpop.permute.xlu0 %2317
        %2320 = vset.pattern.permute.xlu0 5
        %2321 = vperm.xlu0 %2320, %v1793
        %v2322 = vpop.permute.xlu0 %2321
        %2324 = vset.pattern.permute.xlu0 5
        %2325 = vperm.xlu0 %2324, %v1794
        %v2326 = vpop.permute.xlu0 %2325
        %2328 = vset.pattern.permute.xlu0 5
        %2329 = vperm.xlu0 %2328, %v1795
        %v2330 = vpop.permute.xlu0 %2329
        %2332 = vset.pattern.permute.xlu0 5
        %2333 = vperm.xlu0 %2332, %v1796
        %v2334 = vpop.permute.xlu0 %2333
        %2336 = vset.pattern.permute.xlu0 5
        %2337 = vperm.xlu0 %2336, %v1797
        %v2338 = vpop.permute.xlu0 %2337
        %2340 = vset.pattern.permute.xlu0 5
        %2341 = vperm.xlu0 %2340, %v1798
        %v2342 = vpop.permute.xlu0 %2341
        %2344 = vset.pattern.permute.xlu0 5
        %2345 = vperm.xlu0 %2344, %v1799
        %v2346 = vpop.permute.xlu0 %2345
        %2348 = vset.pattern.permute.xlu0 5
        %2349 = vperm.xlu0 %2348, %v1800
        %v2350 = vpop.permute.xlu0 %2349
        %2352 = vset.pattern.permute.xlu0 5
        %2353 = vperm.xlu0 %2352, %v1801
        %v2354 = vpop.permute.xlu0 %2353
        %2356 = vset.pattern.permute.xlu0 5
        %2357 = vperm.xlu0 %2356, %v1802
        %v2358 = vpop.permute.xlu0 %2357
        %2360 = vset.pattern.permute.xlu0 5
        %2361 = vperm.xlu0 %2360, %v1803
        %v2362 = vpop.permute.xlu0 %2361
        %v2364 = vmul.f32 %v2302, %v875
        %v2365 = vmul.f32 %v2306, %v881
        %v2366 = vmul.f32 %v2310, %v887
        %v2367 = vmul.f32 %v2314, %v893
        %v2368 = vmul.f32 %v2318, %v899
        %v2369 = vmul.f32 %v2322, %v905
        %v2370 = vmul.f32 %v2326, %v911
        %v2371 = vmul.f32 %v2330, %v917
        %v2372 = vmul.f32 %v2334, %v923
        %v2373 = vmul.f32 %v2338, %v929
        %v2374 = vmul.f32 %v2342, %v935
        %v2375 = vmul.f32 %v2346, %v941
        %v2376 = vmul.f32 %v2350, %v947
        %v2377 = vmul.f32 %v2354, %v953
        %v2378 = vmul.f32 %v2358, %v959
        %v2379 = vmul.f32 %v2362, %v965
        %v2380 = vadd.f32 %v2284, %v2364
        %v2381 = vadd.f32 %v2285, %v2365
        %v2382 = vadd.f32 %v2286, %v2366
        %v2383 = vadd.f32 %v2287, %v2367
        %v2384 = vadd.f32 %v2288, %v2368
        %v2385 = vadd.f32 %v2289, %v2369
        %v2386 = vadd.f32 %v2290, %v2370
        %v2387 = vadd.f32 %v2291, %v2371
        %v2388 = vadd.f32 %v2292, %v2372
        %v2389 = vadd.f32 %v2293, %v2373
        %v2390 = vadd.f32 %v2294, %v2374
        %v2391 = vadd.f32 %v2295, %v2375
        %v2392 = vadd.f32 %v2296, %v2376
        %v2393 = vadd.f32 %v2297, %v2377
        %v2394 = vadd.f32 %v2298, %v2378
        %v2395 = vadd.f32 %v2299, %v2379
        %2396 = vset.pattern.permute.xlu0 6
        %2397 = vperm.xlu0 %2396, %v1788
        %v2398 = vpop.permute.xlu0 %2397
        %2400 = vset.pattern.permute.xlu0 6
        %2401 = vperm.xlu0 %2400, %v1789
        %v2402 = vpop.permute.xlu0 %2401
        %2404 = vset.pattern.permute.xlu0 6
        %2405 = vperm.xlu0 %2404, %v1790
        %v2406 = vpop.permute.xlu0 %2405
        %2408 = vset.pattern.permute.xlu0 6
        %2409 = vperm.xlu0 %2408, %v1791
        %v2410 = vpop.permute.xlu0 %2409
        %2412 = vset.pattern.permute.xlu0 6
        %2413 = vperm.xlu0 %2412, %v1792
        %v2414 = vpop.permute.xlu0 %2413
        %2416 = vset.pattern.permute.xlu0 6
        %2417 = vperm.xlu0 %2416, %v1793
        %v2418 = vpop.permute.xlu0 %2417
        %2420 = vset.pattern.permute.xlu0 6
        %2421 = vperm.xlu0 %2420, %v1794
        %v2422 = vpop.permute.xlu0 %2421
        %2424 = vset.pattern.permute.xlu0 6
        %2425 = vperm.xlu0 %2424, %v1795
        %v2426 = vpop.permute.xlu0 %2425
        %2428 = vset.pattern.permute.xlu0 6
        %2429 = vperm.xlu0 %2428, %v1796
        %v2430 = vpop.permute.xlu0 %2429
        %2432 = vset.pattern.permute.xlu0 6
        %2433 = vperm.xlu0 %2432, %v1797
        %v2434 = vpop.permute.xlu0 %2433
        %2436 = vset.pattern.permute.xlu0 6
        %2437 = vperm.xlu0 %2436, %v1798
        %v2438 = vpop.permute.xlu0 %2437
        %2440 = vset.pattern.permute.xlu0 6
        %2441 = vperm.xlu0 %2440, %v1799
        %v2442 = vpop.permute.xlu0 %2441
        %2444 = vset.pattern.permute.xlu0 6
        %2445 = vperm.xlu0 %2444, %v1800
        %v2446 = vpop.permute.xlu0 %2445
        %2448 = vset.pattern.permute.xlu0 6
        %2449 = vperm.xlu0 %2448, %v1801
        %v2450 = vpop.permute.xlu0 %2449
        %2452 = vset.pattern.permute.xlu0 6
        %2453 = vperm.xlu0 %2452, %v1802
        %v2454 = vpop.permute.xlu0 %2453
        %2456 = vset.pattern.permute.xlu0 6
        %2457 = vperm.xlu0 %2456, %v1803
        %v2458 = vpop.permute.xlu0 %2457
        %v2460 = vmul.f32 %v2398, %v1034
        %v2461 = vmul.f32 %v2402, %v1040
        %v2462 = vmul.f32 %v2406, %v1046
        %v2463 = vmul.f32 %v2410, %v1052
        %v2464 = vmul.f32 %v2414, %v1058
        %v2465 = vmul.f32 %v2418, %v1064
        %v2466 = vmul.f32 %v2422, %v1070
        %v2467 = vmul.f32 %v2426, %v1076
        %v2468 = vmul.f32 %v2430, %v1082
        %v2469 = vmul.f32 %v2434, %v1088
        %v2470 = vmul.f32 %v2438, %v1094
        %v2471 = vmul.f32 %v2442, %v1100
        %v2472 = vmul.f32 %v2446, %v1106
        %v2473 = vmul.f32 %v2450, %v1112
        %v2474 = vmul.f32 %v2454, %v1118
        %v2475 = vmul.f32 %v2458, %v1124
        %v2476 = vadd.f32 %v2380, %v2460
        %v2477 = vadd.f32 %v2381, %v2461
        %v2478 = vadd.f32 %v2382, %v2462
        %v2479 = vadd.f32 %v2383, %v2463
        %v2480 = vadd.f32 %v2384, %v2464
        %v2481 = vadd.f32 %v2385, %v2465
        %v2482 = vadd.f32 %v2386, %v2466
        %v2483 = vadd.f32 %v2387, %v2467
        %v2484 = vadd.f32 %v2388, %v2468
        %v2485 = vadd.f32 %v2389, %v2469
        %v2486 = vadd.f32 %v2390, %v2470
        %v2487 = vadd.f32 %v2391, %v2471
        %v2488 = vadd.f32 %v2392, %v2472
        %v2489 = vadd.f32 %v2393, %v2473
        %v2490 = vadd.f32 %v2394, %v2474
        %v2491 = vadd.f32 %v2395, %v2475
        %2492 = vset.pattern.permute.xlu0 7
        %2493 = vperm.xlu0 %2492, %v1788
        %v2494 = vpop.permute.xlu0 %2493
        %2496 = vset.pattern.permute.xlu0 7
        %2497 = vperm.xlu0 %2496, %v1789
        %v2498 = vpop.permute.xlu0 %2497
        %2500 = vset.pattern.permute.xlu0 7
        %2501 = vperm.xlu0 %2500, %v1790
        %v2502 = vpop.permute.xlu0 %2501
        %2504 = vset.pattern.permute.xlu0 7
        %2505 = vperm.xlu0 %2504, %v1791
        %v2506 = vpop.permute.xlu0 %2505
        %2508 = vset.pattern.permute.xlu0 7
        %2509 = vperm.xlu0 %2508, %v1792
        %v2510 = vpop.permute.xlu0 %2509
        %2512 = vset.pattern.permute.xlu0 7
        %2513 = vperm.xlu0 %2512, %v1793
        %v2514 = vpop.permute.xlu0 %2513
        %2516 = vset.pattern.permute.xlu0 7
        %2517 = vperm.xlu0 %2516, %v1794
        %v2518 = vpop.permute.xlu0 %2517
        %2520 = vset.pattern.permute.xlu0 7
        %2521 = vperm.xlu0 %2520, %v1795
        %v2522 = vpop.permute.xlu0 %2521
        %2524 = vset.pattern.permute.xlu0 7
        %2525 = vperm.xlu0 %2524, %v1796
        %v2526 = vpop.permute.xlu0 %2525
        %2528 = vset.pattern.permute.xlu0 7
        %2529 = vperm.xlu0 %2528, %v1797
        %v2530 = vpop.permute.xlu0 %2529
        %2532 = vset.pattern.permute.xlu0 7
        %2533 = vperm.xlu0 %2532, %v1798
        %v2534 = vpop.permute.xlu0 %2533
        %2536 = vset.pattern.permute.xlu0 7
        %2537 = vperm.xlu0 %2536, %v1799
        %v2538 = vpop.permute.xlu0 %2537
        %2540 = vset.pattern.permute.xlu0 7
        %2541 = vperm.xlu0 %2540, %v1800
        %v2542 = vpop.permute.xlu0 %2541
        %2544 = vset.pattern.permute.xlu0 7
        %2545 = vperm.xlu0 %2544, %v1801
        %v2546 = vpop.permute.xlu0 %2545
        %2548 = vset.pattern.permute.xlu0 7
        %2549 = vperm.xlu0 %2548, %v1802
        %v2550 = vpop.permute.xlu0 %2549
        %2552 = vset.pattern.permute.xlu0 7
        %2553 = vperm.xlu0 %2552, %v1803
        %v2554 = vpop.permute.xlu0 %2553
        %v2556 = vmul.f32 %v2494, %v1036
        %v2557 = vmul.f32 %v2498, %v1042
        %v2558 = vmul.f32 %v2502, %v1048
        %v2559 = vmul.f32 %v2506, %v1054
        %v2560 = vmul.f32 %v2510, %v1060
        %v2561 = vmul.f32 %v2514, %v1066
        %v2562 = vmul.f32 %v2518, %v1072
        %v2563 = vmul.f32 %v2522, %v1078
        %v2564 = vmul.f32 %v2526, %v1084
        %v2565 = vmul.f32 %v2530, %v1090
        %v2566 = vmul.f32 %v2534, %v1096
        %v2567 = vmul.f32 %v2538, %v1102
        %v2568 = vmul.f32 %v2542, %v1108
        %v2569 = vmul.f32 %v2546, %v1114
        %v2570 = vmul.f32 %v2550, %v1120
        %v2571 = vmul.f32 %v2554, %v1126
        %v2572 = vadd.f32 %v2476, %v2556
        %v2573 = vadd.f32 %v2477, %v2557
        %v2574 = vadd.f32 %v2478, %v2558
        %v2575 = vadd.f32 %v2479, %v2559
        %v2576 = vadd.f32 %v2480, %v2560
        %v2577 = vadd.f32 %v2481, %v2561
        %v2578 = vadd.f32 %v2482, %v2562
        %v2579 = vadd.f32 %v2483, %v2563
        %v2580 = vadd.f32 %v2484, %v2564
        %v2581 = vadd.f32 %v2485, %v2565
        %v2582 = vadd.f32 %v2486, %v2566
        %v2583 = vadd.f32 %v2487, %v2567
        %v2584 = vadd.f32 %v2488, %v2568
        %v2585 = vadd.f32 %v2489, %v2569
        %v2586 = vadd.f32 %v2490, %v2570
        %v2587 = vadd.f32 %v2491, %v2571
        %2588 = vset.pattern.permute.xlu0 8
        %2589 = vperm.xlu0 %2588, %v1788
        %v2590 = vpop.permute.xlu0 %2589
        %2592 = vset.pattern.permute.xlu0 8
        %2593 = vperm.xlu0 %2592, %v1789
        %v2594 = vpop.permute.xlu0 %2593
        %2596 = vset.pattern.permute.xlu0 8
        %2597 = vperm.xlu0 %2596, %v1790
        %v2598 = vpop.permute.xlu0 %2597
        %2600 = vset.pattern.permute.xlu0 8
        %2601 = vperm.xlu0 %2600, %v1791
        %v2602 = vpop.permute.xlu0 %2601
        %2604 = vset.pattern.permute.xlu0 8
        %2605 = vperm.xlu0 %2604, %v1792
        %v2606 = vpop.permute.xlu0 %2605
        %2608 = vset.pattern.permute.xlu0 8
        %2609 = vperm.xlu0 %2608, %v1793
        %v2610 = vpop.permute.xlu0 %2609
        %2612 = vset.pattern.permute.xlu0 8
        %2613 = vperm.xlu0 %2612, %v1794
        %v2614 = vpop.permute.xlu0 %2613
        %2616 = vset.pattern.permute.xlu0 8
        %2617 = vperm.xlu0 %2616, %v1795
        %v2618 = vpop.permute.xlu0 %2617
        %2620 = vset.pattern.permute.xlu0 8
        %2621 = vperm.xlu0 %2620, %v1796
        %v2622 = vpop.permute.xlu0 %2621
        %2624 = vset.pattern.permute.xlu0 8
        %2625 = vperm.xlu0 %2624, %v1797
        %v2626 = vpop.permute.xlu0 %2625
        %2628 = vset.pattern.permute.xlu0 8
        %2629 = vperm.xlu0 %2628, %v1798
        %v2630 = vpop.permute.xlu0 %2629
        %2632 = vset.pattern.permute.xlu0 8
        %2633 = vperm.xlu0 %2632, %v1799
        %v2634 = vpop.permute.xlu0 %2633
        %2636 = vset.pattern.permute.xlu0 8
        %2637 = vperm.xlu0 %2636, %v1800
        %v2638 = vpop.permute.xlu0 %2637
        %2640 = vset.pattern.permute.xlu0 8
        %2641 = vperm.xlu0 %2640, %v1801
        %v2642 = vpop.permute.xlu0 %2641
        %2644 = vset.pattern.permute.xlu0 8
        %2645 = vperm.xlu0 %2644, %v1802
        %v2646 = vpop.permute.xlu0 %2645
        %2648 = vset.pattern.permute.xlu0 8
        %2649 = vperm.xlu0 %2648, %v1803
        %v2650 = vpop.permute.xlu0 %2649
        %v2652 = vmul.f32 %v2590, %v1195
        %v2653 = vmul.f32 %v2594, %v1201
        %v2654 = vmul.f32 %v2598, %v1207
        %v2655 = vmul.f32 %v2602, %v1213
        %v2656 = vmul.f32 %v2606, %v1219
        %v2657 = vmul.f32 %v2610, %v1225
        %v2658 = vmul.f32 %v2614, %v1231
        %v2659 = vmul.f32 %v2618, %v1237
        %v2660 = vmul.f32 %v2622, %v1243
        %v2661 = vmul.f32 %v2626, %v1249
        %v2662 = vmul.f32 %v2630, %v1255
        %v2663 = vmul.f32 %v2634, %v1261
        %v2664 = vmul.f32 %v2638, %v1267
        %v2665 = vmul.f32 %v2642, %v1273
        %v2666 = vmul.f32 %v2646, %v1279
        %v2667 = vmul.f32 %v2650, %v1285
        %v2668 = vadd.f32 %v2572, %v2652
        %v2669 = vadd.f32 %v2573, %v2653
        %v2670 = vadd.f32 %v2574, %v2654
        %v2671 = vadd.f32 %v2575, %v2655
        %v2672 = vadd.f32 %v2576, %v2656
        %v2673 = vadd.f32 %v2577, %v2657
        %v2674 = vadd.f32 %v2578, %v2658
        %v2675 = vadd.f32 %v2579, %v2659
        %v2676 = vadd.f32 %v2580, %v2660
        %v2677 = vadd.f32 %v2581, %v2661
        %v2678 = vadd.f32 %v2582, %v2662
        %v2679 = vadd.f32 %v2583, %v2663
        %v2680 = vadd.f32 %v2584, %v2664
        %v2681 = vadd.f32 %v2585, %v2665
        %v2682 = vadd.f32 %v2586, %v2666
        %v2683 = vadd.f32 %v2587, %v2667
        %2684 = vset.pattern.permute.xlu0 9
        %2685 = vperm.xlu0 %2684, %v1788
        %v2686 = vpop.permute.xlu0 %2685
        %2688 = vset.pattern.permute.xlu0 9
        %2689 = vperm.xlu0 %2688, %v1789
        %v2690 = vpop.permute.xlu0 %2689
        %2692 = vset.pattern.permute.xlu0 9
        %2693 = vperm.xlu0 %2692, %v1790
        %v2694 = vpop.permute.xlu0 %2693
        %2696 = vset.pattern.permute.xlu0 9
        %2697 = vperm.xlu0 %2696, %v1791
        %v2698 = vpop.permute.xlu0 %2697
        %2700 = vset.pattern.permute.xlu0 9
        %2701 = vperm.xlu0 %2700, %v1792
        %v2702 = vpop.permute.xlu0 %2701
        %2704 = vset.pattern.permute.xlu0 9
        %2705 = vperm.xlu0 %2704, %v1793
        %v2706 = vpop.permute.xlu0 %2705
        %2708 = vset.pattern.permute.xlu0 9
        %2709 = vperm.xlu0 %2708, %v1794
        %v2710 = vpop.permute.xlu0 %2709
        %2712 = vset.pattern.permute.xlu0 9
        %2713 = vperm.xlu0 %2712, %v1795
        %v2714 = vpop.permute.xlu0 %2713
        %2716 = vset.pattern.permute.xlu0 9
        %2717 = vperm.xlu0 %2716, %v1796
        %v2718 = vpop.permute.xlu0 %2717
        %2720 = vset.pattern.permute.xlu0 9
        %2721 = vperm.xlu0 %2720, %v1797
        %v2722 = vpop.permute.xlu0 %2721
        %2724 = vset.pattern.permute.xlu0 9
        %2725 = vperm.xlu0 %2724, %v1798
        %v2726 = vpop.permute.xlu0 %2725
        %2728 = vset.pattern.permute.xlu0 9
        %2729 = vperm.xlu0 %2728, %v1799
        %v2730 = vpop.permute.xlu0 %2729
        %2732 = vset.pattern.permute.xlu0 9
        %2733 = vperm.xlu0 %2732, %v1800
        %v2734 = vpop.permute.xlu0 %2733
        %2736 = vset.pattern.permute.xlu0 9
        %2737 = vperm.xlu0 %2736, %v1801
        %v2738 = vpop.permute.xlu0 %2737
        %2740 = vset.pattern.permute.xlu0 9
        %2741 = vperm.xlu0 %2740, %v1802
        %v2742 = vpop.permute.xlu0 %2741
        %2744 = vset.pattern.permute.xlu0 9
        %2745 = vperm.xlu0 %2744, %v1803
        %v2746 = vpop.permute.xlu0 %2745
        %v2748 = vmul.f32 %v2686, %v1197
        %v2749 = vmul.f32 %v2690, %v1203
        %v2750 = vmul.f32 %v2694, %v1209
        %v2751 = vmul.f32 %v2698, %v1215
        %v2752 = vmul.f32 %v2702, %v1221
        %v2753 = vmul.f32 %v2706, %v1227
        %v2754 = vmul.f32 %v2710, %v1233
        %v2755 = vmul.f32 %v2714, %v1239
        %v2756 = vmul.f32 %v2718, %v1245
        %v2757 = vmul.f32 %v2722, %v1251
        %v2758 = vmul.f32 %v2726, %v1257
        %v2759 = vmul.f32 %v2730, %v1263
        %v2760 = vmul.f32 %v2734, %v1269
        %v2761 = vmul.f32 %v2738, %v1275
        %v2762 = vmul.f32 %v2742, %v1281
        %v2763 = vmul.f32 %v2746, %v1287
        %v2764 = vadd.f32 %v2668, %v2748
        %v2765 = vadd.f32 %v2669, %v2749
        %v2766 = vadd.f32 %v2670, %v2750
        %v2767 = vadd.f32 %v2671, %v2751
        %v2768 = vadd.f32 %v2672, %v2752
        %v2769 = vadd.f32 %v2673, %v2753
        %v2770 = vadd.f32 %v2674, %v2754
        %v2771 = vadd.f32 %v2675, %v2755
        %v2772 = vadd.f32 %v2676, %v2756
        %v2773 = vadd.f32 %v2677, %v2757
        %v2774 = vadd.f32 %v2678, %v2758
        %v2775 = vadd.f32 %v2679, %v2759
        %v2776 = vadd.f32 %v2680, %v2760
        %v2777 = vadd.f32 %v2681, %v2761
        %v2778 = vadd.f32 %v2682, %v2762
        %v2779 = vadd.f32 %v2683, %v2763
        %2780 = vset.pattern.permute.xlu0 10
        %2781 = vperm.xlu0 %2780, %v1788
        %v2782 = vpop.permute.xlu0 %2781
        %2784 = vset.pattern.permute.xlu0 10
        %2785 = vperm.xlu0 %2784, %v1789
        %v2786 = vpop.permute.xlu0 %2785
        %2788 = vset.pattern.permute.xlu0 10
        %2789 = vperm.xlu0 %2788, %v1790
        %v2790 = vpop.permute.xlu0 %2789
        %2792 = vset.pattern.permute.xlu0 10
        %2793 = vperm.xlu0 %2792, %v1791
        %v2794 = vpop.permute.xlu0 %2793
        %2796 = vset.pattern.permute.xlu0 10
        %2797 = vperm.xlu0 %2796, %v1792
        %v2798 = vpop.permute.xlu0 %2797
        %2800 = vset.pattern.permute.xlu0 10
        %2801 = vperm.xlu0 %2800, %v1793
        %v2802 = vpop.permute.xlu0 %2801
        %2804 = vset.pattern.permute.xlu0 10
        %2805 = vperm.xlu0 %2804, %v1794
        %v2806 = vpop.permute.xlu0 %2805
        %2808 = vset.pattern.permute.xlu0 10
        %2809 = vperm.xlu0 %2808, %v1795
        %v2810 = vpop.permute.xlu0 %2809
        %2812 = vset.pattern.permute.xlu0 10
        %2813 = vperm.xlu0 %2812, %v1796
        %v2814 = vpop.permute.xlu0 %2813
        %2816 = vset.pattern.permute.xlu0 10
        %2817 = vperm.xlu0 %2816, %v1797
        %v2818 = vpop.permute.xlu0 %2817
        %2820 = vset.pattern.permute.xlu0 10
        %2821 = vperm.xlu0 %2820, %v1798
        %v2822 = vpop.permute.xlu0 %2821
        %2824 = vset.pattern.permute.xlu0 10
        %2825 = vperm.xlu0 %2824, %v1799
        %v2826 = vpop.permute.xlu0 %2825
        %2828 = vset.pattern.permute.xlu0 10
        %2829 = vperm.xlu0 %2828, %v1800
        %v2830 = vpop.permute.xlu0 %2829
        %2832 = vset.pattern.permute.xlu0 10
        %2833 = vperm.xlu0 %2832, %v1801
        %v2834 = vpop.permute.xlu0 %2833
        %2836 = vset.pattern.permute.xlu0 10
        %2837 = vperm.xlu0 %2836, %v1802
        %v2838 = vpop.permute.xlu0 %2837
        %2840 = vset.pattern.permute.xlu0 10
        %2841 = vperm.xlu0 %2840, %v1803
        %v2842 = vpop.permute.xlu0 %2841
        %v2844 = vmul.f32 %v2782, %v1356
        %v2845 = vmul.f32 %v2786, %v1362
        %v2846 = vmul.f32 %v2790, %v1368
        %v2847 = vmul.f32 %v2794, %v1374
        %v2848 = vmul.f32 %v2798, %v1380
        %v2849 = vmul.f32 %v2802, %v1386
        %v2850 = vmul.f32 %v2806, %v1392
        %v2851 = vmul.f32 %v2810, %v1398
        %v2852 = vmul.f32 %v2814, %v1404
        %v2853 = vmul.f32 %v2818, %v1410
        %v2854 = vmul.f32 %v2822, %v1416
        %v2855 = vmul.f32 %v2826, %v1422
        %v2856 = vmul.f32 %v2830, %v1428
        %v2857 = vmul.f32 %v2834, %v1434
        %v2858 = vmul.f32 %v2838, %v1440
        %v2859 = vmul.f32 %v2842, %v1446
        %v2860 = vadd.f32 %v2764, %v2844
        %v2861 = vadd.f32 %v2765, %v2845
        %v2862 = vadd.f32 %v2766, %v2846
        %v2863 = vadd.f32 %v2767, %v2847
        %v2864 = vadd.f32 %v2768, %v2848
        %v2865 = vadd.f32 %v2769, %v2849
        %v2866 = vadd.f32 %v2770, %v2850
        %v2867 = vadd.f32 %v2771, %v2851
        %v2868 = vadd.f32 %v2772, %v2852
        %v2869 = vadd.f32 %v2773, %v2853
        %v2870 = vadd.f32 %v2774, %v2854
        %v2871 = vadd.f32 %v2775, %v2855
        %v2872 = vadd.f32 %v2776, %v2856
        %v2873 = vadd.f32 %v2777, %v2857
        %v2874 = vadd.f32 %v2778, %v2858
        %v2875 = vadd.f32 %v2779, %v2859
        %2876 = vset.pattern.permute.xlu0 11
        %2877 = vperm.xlu0 %2876, %v1788
        %v2878 = vpop.permute.xlu0 %2877
        %2880 = vset.pattern.permute.xlu0 11
        %2881 = vperm.xlu0 %2880, %v1789
        %v2882 = vpop.permute.xlu0 %2881
        %2884 = vset.pattern.permute.xlu0 11
        %2885 = vperm.xlu0 %2884, %v1790
        %v2886 = vpop.permute.xlu0 %2885
        %2888 = vset.pattern.permute.xlu0 11
        %2889 = vperm.xlu0 %2888, %v1791
        %v2890 = vpop.permute.xlu0 %2889
        %2892 = vset.pattern.permute.xlu0 11
        %2893 = vperm.xlu0 %2892, %v1792
        %v2894 = vpop.permute.xlu0 %2893
        %2896 = vset.pattern.permute.xlu0 11
        %2897 = vperm.xlu0 %2896, %v1793
        %v2898 = vpop.permute.xlu0 %2897
        %2900 = vset.pattern.permute.xlu0 11
        %2901 = vperm.xlu0 %2900, %v1794
        %v2902 = vpop.permute.xlu0 %2901
        %2904 = vset.pattern.permute.xlu0 11
        %2905 = vperm.xlu0 %2904, %v1795
        %v2906 = vpop.permute.xlu0 %2905
        %2908 = vset.pattern.permute.xlu0 11
        %2909 = vperm.xlu0 %2908, %v1796
        %v2910 = vpop.permute.xlu0 %2909
        %2912 = vset.pattern.permute.xlu0 11
        %2913 = vperm.xlu0 %2912, %v1797
        %v2914 = vpop.permute.xlu0 %2913
        %2916 = vset.pattern.permute.xlu0 11
        %2917 = vperm.xlu0 %2916, %v1798
        %v2918 = vpop.permute.xlu0 %2917
        %2920 = vset.pattern.permute.xlu0 11
        %2921 = vperm.xlu0 %2920, %v1799
        %v2922 = vpop.permute.xlu0 %2921
        %2924 = vset.pattern.permute.xlu0 11
        %2925 = vperm.xlu0 %2924, %v1800
        %v2926 = vpop.permute.xlu0 %2925
        %2928 = vset.pattern.permute.xlu0 11
        %2929 = vperm.xlu0 %2928, %v1801
        %v2930 = vpop.permute.xlu0 %2929
        %2932 = vset.pattern.permute.xlu0 11
        %2933 = vperm.xlu0 %2932, %v1802
        %v2934 = vpop.permute.xlu0 %2933
        %2936 = vset.pattern.permute.xlu0 11
        %2937 = vperm.xlu0 %2936, %v1803
        %v2938 = vpop.permute.xlu0 %2937
        %v2940 = vmul.f32 %v2878, %v1358
        %v2941 = vmul.f32 %v2882, %v1364
        %v2942 = vmul.f32 %v2886, %v1370
        %v2943 = vmul.f32 %v2890, %v1376
        %v2944 = vmul.f32 %v2894, %v1382
        %v2945 = vmul.f32 %v2898, %v1388
        %v2946 = vmul.f32 %v2902, %v1394
        %v2947 = vmul.f32 %v2906, %v1400
        %v2948 = vmul.f32 %v2910, %v1406
        %v2949 = vmul.f32 %v2914, %v1412
        %v2950 = vmul.f32 %v2918, %v1418
        %v2951 = vmul.f32 %v2922, %v1424
        %v2952 = vmul.f32 %v2926, %v1430
        %v2953 = vmul.f32 %v2930, %v1436
        %v2954 = vmul.f32 %v2934, %v1442
        %v2955 = vmul.f32 %v2938, %v1448
        %v2956 = vadd.f32 %v2860, %v2940
        %v2957 = vadd.f32 %v2861, %v2941
        %v2958 = vadd.f32 %v2862, %v2942
        %v2959 = vadd.f32 %v2863, %v2943
        %v2960 = vadd.f32 %v2864, %v2944
        %v2961 = vadd.f32 %v2865, %v2945
        %v2962 = vadd.f32 %v2866, %v2946
        %v2963 = vadd.f32 %v2867, %v2947
        %v2964 = vadd.f32 %v2868, %v2948
        %v2965 = vadd.f32 %v2869, %v2949
        %v2966 = vadd.f32 %v2870, %v2950
        %v2967 = vadd.f32 %v2871, %v2951
        %v2968 = vadd.f32 %v2872, %v2952
        %v2969 = vadd.f32 %v2873, %v2953
        %v2970 = vadd.f32 %v2874, %v2954
        %v2971 = vadd.f32 %v2875, %v2955
        %2972 = vset.pattern.permute.xlu0 12
        %2973 = vperm.xlu0 %2972, %v1788
        %v2974 = vpop.permute.xlu0 %2973
        %2976 = vset.pattern.permute.xlu0 12
        %2977 = vperm.xlu0 %2976, %v1789
        %v2978 = vpop.permute.xlu0 %2977
        %2980 = vset.pattern.permute.xlu0 12
        %2981 = vperm.xlu0 %2980, %v1790
        %v2982 = vpop.permute.xlu0 %2981
        %2984 = vset.pattern.permute.xlu0 12
        %2985 = vperm.xlu0 %2984, %v1791
        %v2986 = vpop.permute.xlu0 %2985
        %2988 = vset.pattern.permute.xlu0 12
        %2989 = vperm.xlu0 %2988, %v1792
        %v2990 = vpop.permute.xlu0 %2989
        %2992 = vset.pattern.permute.xlu0 12
        %2993 = vperm.xlu0 %2992, %v1793
        %v2994 = vpop.permute.xlu0 %2993
        %2996 = vset.pattern.permute.xlu0 12
        %2997 = vperm.xlu0 %2996, %v1794
        %v2998 = vpop.permute.xlu0 %2997
        %3000 = vset.pattern.permute.xlu0 12
        %3001 = vperm.xlu0 %3000, %v1795
        %v3002 = vpop.permute.xlu0 %3001
        %3004 = vset.pattern.permute.xlu0 12
        %3005 = vperm.xlu0 %3004, %v1796
        %v3006 = vpop.permute.xlu0 %3005
        %3008 = vset.pattern.permute.xlu0 12
        %3009 = vperm.xlu0 %3008, %v1797
        %v3010 = vpop.permute.xlu0 %3009
        %3012 = vset.pattern.permute.xlu0 12
        %3013 = vperm.xlu0 %3012, %v1798
        %v3014 = vpop.permute.xlu0 %3013
        %3016 = vset.pattern.permute.xlu0 12
        %3017 = vperm.xlu0 %3016, %v1799
        %v3018 = vpop.permute.xlu0 %3017
        %3020 = vset.pattern.permute.xlu0 12
        %3021 = vperm.xlu0 %3020, %v1800
        %v3022 = vpop.permute.xlu0 %3021
        %3024 = vset.pattern.permute.xlu0 12
        %3025 = vperm.xlu0 %3024, %v1801
        %v3026 = vpop.permute.xlu0 %3025
        %3028 = vset.pattern.permute.xlu0 12
        %3029 = vperm.xlu0 %3028, %v1802
        %v3030 = vpop.permute.xlu0 %3029
        %3032 = vset.pattern.permute.xlu0 12
        %3033 = vperm.xlu0 %3032, %v1803
        %v3034 = vpop.permute.xlu0 %3033
        %v3036 = vmul.f32 %v2974, %v1517
        %v3037 = vmul.f32 %v2978, %v1523
        %v3038 = vmul.f32 %v2982, %v1529
        %v3039 = vmul.f32 %v2986, %v1535
        %v3040 = vmul.f32 %v2990, %v1541
        %v3041 = vmul.f32 %v2994, %v1547
        %v3042 = vmul.f32 %v2998, %v1553
        %v3043 = vmul.f32 %v3002, %v1559
        %v3044 = vmul.f32 %v3006, %v1565
        %v3045 = vmul.f32 %v3010, %v1571
        %v3046 = vmul.f32 %v3014, %v1577
        %v3047 = vmul.f32 %v3018, %v1583
        %v3048 = vmul.f32 %v3022, %v1589
        %v3049 = vmul.f32 %v3026, %v1595
        %v3050 = vmul.f32 %v3030, %v1601
        %v3051 = vmul.f32 %v3034, %v1607
        %v3052 = vadd.f32 %v2956, %v3036
        %v3053 = vadd.f32 %v2957, %v3037
        %v3054 = vadd.f32 %v2958, %v3038
        %v3055 = vadd.f32 %v2959, %v3039
        %v3056 = vadd.f32 %v2960, %v3040
        %v3057 = vadd.f32 %v2961, %v3041
        %v3058 = vadd.f32 %v2962, %v3042
        %v3059 = vadd.f32 %v2963, %v3043
        %v3060 = vadd.f32 %v2964, %v3044
        %v3061 = vadd.f32 %v2965, %v3045
        %v3062 = vadd.f32 %v2966, %v3046
        %v3063 = vadd.f32 %v2967, %v3047
        %v3064 = vadd.f32 %v2968, %v3048
        %v3065 = vadd.f32 %v2969, %v3049
        %v3066 = vadd.f32 %v2970, %v3050
        %v3067 = vadd.f32 %v2971, %v3051
        %3068 = vset.pattern.permute.xlu0 13
        %3069 = vperm.xlu0 %3068, %v1788
        %v3070 = vpop.permute.xlu0 %3069
        %3072 = vset.pattern.permute.xlu0 13
        %3073 = vperm.xlu0 %3072, %v1789
        %v3074 = vpop.permute.xlu0 %3073
        %3076 = vset.pattern.permute.xlu0 13
        %3077 = vperm.xlu0 %3076, %v1790
        %v3078 = vpop.permute.xlu0 %3077
        %3080 = vset.pattern.permute.xlu0 13
        %3081 = vperm.xlu0 %3080, %v1791
        %v3082 = vpop.permute.xlu0 %3081
        %3084 = vset.pattern.permute.xlu0 13
        %3085 = vperm.xlu0 %3084, %v1792
        %v3086 = vpop.permute.xlu0 %3085
        %3088 = vset.pattern.permute.xlu0 13
        %3089 = vperm.xlu0 %3088, %v1793
        %v3090 = vpop.permute.xlu0 %3089
        %3092 = vset.pattern.permute.xlu0 13
        %3093 = vperm.xlu0 %3092, %v1794
        %v3094 = vpop.permute.xlu0 %3093
        %3096 = vset.pattern.permute.xlu0 13
        %3097 = vperm.xlu0 %3096, %v1795
        %v3098 = vpop.permute.xlu0 %3097
        %3100 = vset.pattern.permute.xlu0 13
        %3101 = vperm.xlu0 %3100, %v1796
        %v3102 = vpop.permute.xlu0 %3101
        %3104 = vset.pattern.permute.xlu0 13
        %3105 = vperm.xlu0 %3104, %v1797
        %v3106 = vpop.permute.xlu0 %3105
        %3108 = vset.pattern.permute.xlu0 13
        %3109 = vperm.xlu0 %3108, %v1798
        %v3110 = vpop.permute.xlu0 %3109
        %3112 = vset.pattern.permute.xlu0 13
        %3113 = vperm.xlu0 %3112, %v1799
        %v3114 = vpop.permute.xlu0 %3113
        %3116 = vset.pattern.permute.xlu0 13
        %3117 = vperm.xlu0 %3116, %v1800
        %v3118 = vpop.permute.xlu0 %3117
        %3120 = vset.pattern.permute.xlu0 13
        %3121 = vperm.xlu0 %3120, %v1801
        %v3122 = vpop.permute.xlu0 %3121
        %3124 = vset.pattern.permute.xlu0 13
        %3125 = vperm.xlu0 %3124, %v1802
        %v3126 = vpop.permute.xlu0 %3125
        %3128 = vset.pattern.permute.xlu0 13
        %3129 = vperm.xlu0 %3128, %v1803
        %v3130 = vpop.permute.xlu0 %3129
        %v3132 = vmul.f32 %v3070, %v1519
        %v3133 = vmul.f32 %v3074, %v1525
        %v3134 = vmul.f32 %v3078, %v1531
        %v3135 = vmul.f32 %v3082, %v1537
        %v3136 = vmul.f32 %v3086, %v1543
        %v3137 = vmul.f32 %v3090, %v1549
        %v3138 = vmul.f32 %v3094, %v1555
        %v3139 = vmul.f32 %v3098, %v1561
        %v3140 = vmul.f32 %v3102, %v1567
        %v3141 = vmul.f32 %v3106, %v1573
        %v3142 = vmul.f32 %v3110, %v1579
        %v3143 = vmul.f32 %v3114, %v1585
        %v3144 = vmul.f32 %v3118, %v1591
        %v3145 = vmul.f32 %v3122, %v1597
        %v3146 = vmul.f32 %v3126, %v1603
        %v3147 = vmul.f32 %v3130, %v1609
        %v3148 = vadd.f32 %v3052, %v3132
        %v3149 = vadd.f32 %v3053, %v3133
        %v3150 = vadd.f32 %v3054, %v3134
        %v3151 = vadd.f32 %v3055, %v3135
        %v3152 = vadd.f32 %v3056, %v3136
        %v3153 = vadd.f32 %v3057, %v3137
        %v3154 = vadd.f32 %v3058, %v3138
        %v3155 = vadd.f32 %v3059, %v3139
        %v3156 = vadd.f32 %v3060, %v3140
        %v3157 = vadd.f32 %v3061, %v3141
        %v3158 = vadd.f32 %v3062, %v3142
        %v3159 = vadd.f32 %v3063, %v3143
        %v3160 = vadd.f32 %v3064, %v3144
        %v3161 = vadd.f32 %v3065, %v3145
        %v3162 = vadd.f32 %v3066, %v3146
        %v3163 = vadd.f32 %v3067, %v3147
        %3164 = vset.pattern.permute.xlu0 14
        %3165 = vperm.xlu0 %3164, %v1788
        %v3166 = vpop.permute.xlu0 %3165
        %3168 = vset.pattern.permute.xlu0 14
        %3169 = vperm.xlu0 %3168, %v1789
        %v3170 = vpop.permute.xlu0 %3169
        %3172 = vset.pattern.permute.xlu0 14
        %3173 = vperm.xlu0 %3172, %v1790
        %v3174 = vpop.permute.xlu0 %3173
        %3176 = vset.pattern.permute.xlu0 14
        %3177 = vperm.xlu0 %3176, %v1791
        %v3178 = vpop.permute.xlu0 %3177
        %3180 = vset.pattern.permute.xlu0 14
        %3181 = vperm.xlu0 %3180, %v1792
        %v3182 = vpop.permute.xlu0 %3181
        %3184 = vset.pattern.permute.xlu0 14
        %3185 = vperm.xlu0 %3184, %v1793
        %v3186 = vpop.permute.xlu0 %3185
        %3188 = vset.pattern.permute.xlu0 14
        %3189 = vperm.xlu0 %3188, %v1794
        %v3190 = vpop.permute.xlu0 %3189
        %3192 = vset.pattern.permute.xlu0 14
        %3193 = vperm.xlu0 %3192, %v1795
        %v3194 = vpop.permute.xlu0 %3193
        %3196 = vset.pattern.permute.xlu0 14
        %3197 = vperm.xlu0 %3196, %v1796
        %v3198 = vpop.permute.xlu0 %3197
        %3200 = vset.pattern.permute.xlu0 14
        %3201 = vperm.xlu0 %3200, %v1797
        %v3202 = vpop.permute.xlu0 %3201
        %3204 = vset.pattern.permute.xlu0 14
        %3205 = vperm.xlu0 %3204, %v1798
        %v3206 = vpop.permute.xlu0 %3205
        %3208 = vset.pattern.permute.xlu0 14
        %3209 = vperm.xlu0 %3208, %v1799
        %v3210 = vpop.permute.xlu0 %3209
        %3212 = vset.pattern.permute.xlu0 14
        %3213 = vperm.xlu0 %3212, %v1800
        %v3214 = vpop.permute.xlu0 %3213
        %3216 = vset.pattern.permute.xlu0 14
        %3217 = vperm.xlu0 %3216, %v1801
        %v3218 = vpop.permute.xlu0 %3217
        %3220 = vset.pattern.permute.xlu0 14
        %3221 = vperm.xlu0 %3220, %v1802
        %v3222 = vpop.permute.xlu0 %3221
        %3224 = vset.pattern.permute.xlu0 14
        %3225 = vperm.xlu0 %3224, %v1803
        %v3226 = vpop.permute.xlu0 %3225
        %v3228 = vmul.f32 %v3166, %v1678
        %v3229 = vmul.f32 %v3170, %v1684
        %v3230 = vmul.f32 %v3174, %v1690
        %v3231 = vmul.f32 %v3178, %v1696
        %v3232 = vmul.f32 %v3182, %v1702
        %v3233 = vmul.f32 %v3186, %v1708
        %v3234 = vmul.f32 %v3190, %v1714
        %v3235 = vmul.f32 %v3194, %v1720
        %v3236 = vmul.f32 %v3198, %v1726
        %v3237 = vmul.f32 %v3202, %v1732
        %v3238 = vmul.f32 %v3206, %v1738
        %v3239 = vmul.f32 %v3210, %v1744
        %v3240 = vmul.f32 %v3214, %v1750
        %v3241 = vmul.f32 %v3218, %v1756
        %v3242 = vmul.f32 %v3222, %v1762
        %v3243 = vmul.f32 %v3226, %v1768
        %v3244 = vadd.f32 %v3148, %v3228
        %v3245 = vadd.f32 %v3149, %v3229
        %v3246 = vadd.f32 %v3150, %v3230
        %v3247 = vadd.f32 %v3151, %v3231
        %v3248 = vadd.f32 %v3152, %v3232
        %v3249 = vadd.f32 %v3153, %v3233
        %v3250 = vadd.f32 %v3154, %v3234
        %v3251 = vadd.f32 %v3155, %v3235
        %v3252 = vadd.f32 %v3156, %v3236
        %v3253 = vadd.f32 %v3157, %v3237
        %v3254 = vadd.f32 %v3158, %v3238
        %v3255 = vadd.f32 %v3159, %v3239
        %v3256 = vadd.f32 %v3160, %v3240
        %v3257 = vadd.f32 %v3161, %v3241
        %v3258 = vadd.f32 %v3162, %v3242
        %v3259 = vadd.f32 %v3163, %v3243
        %3260 = vset.pattern.permute.xlu0 15
        %3261 = vperm.xlu0 %3260, %v1788
        %v3262 = vpop.permute.xlu0 %3261
        %3264 = vset.pattern.permute.xlu0 15
        %3265 = vperm.xlu0 %3264, %v1789
        %v3266 = vpop.permute.xlu0 %3265
        %3268 = vset.pattern.permute.xlu0 15
        %3269 = vperm.xlu0 %3268, %v1790
        %v3270 = vpop.permute.xlu0 %3269
        %3272 = vset.pattern.permute.xlu0 15
        %3273 = vperm.xlu0 %3272, %v1791
        %v3274 = vpop.permute.xlu0 %3273
        %3276 = vset.pattern.permute.xlu0 15
        %3277 = vperm.xlu0 %3276, %v1792
        %v3278 = vpop.permute.xlu0 %3277
        %3280 = vset.pattern.permute.xlu0 15
        %3281 = vperm.xlu0 %3280, %v1793
        %v3282 = vpop.permute.xlu0 %3281
        %3284 = vset.pattern.permute.xlu0 15
        %3285 = vperm.xlu0 %3284, %v1794
        %v3286 = vpop.permute.xlu0 %3285
        %3288 = vset.pattern.permute.xlu0 15
        %3289 = vperm.xlu0 %3288, %v1795
        %v3290 = vpop.permute.xlu0 %3289
        %3292 = vset.pattern.permute.xlu0 15
        %3293 = vperm.xlu0 %3292, %v1796
        %v3294 = vpop.permute.xlu0 %3293
        %3296 = vset.pattern.permute.xlu0 15
        %3297 = vperm.xlu0 %3296, %v1797
        %v3298 = vpop.permute.xlu0 %3297
        %3300 = vset.pattern.permute.xlu0 15
        %3301 = vperm.xlu0 %3300, %v1798
        %v3302 = vpop.permute.xlu0 %3301
        %3304 = vset.pattern.permute.xlu0 15
        %3305 = vperm.xlu0 %3304, %v1799
        %v3306 = vpop.permute.xlu0 %3305
        %3308 = vset.pattern.permute.xlu0 15
        %3309 = vperm.xlu0 %3308, %v1800
        %v3310 = vpop.permute.xlu0 %3309
        %3312 = vset.pattern.permute.xlu0 15
        %3313 = vperm.xlu0 %3312, %v1801
        %v3314 = vpop.permute.xlu0 %3313
        %3316 = vset.pattern.permute.xlu0 15
        %3317 = vperm.xlu0 %3316, %v1802
        %v3318 = vpop.permute.xlu0 %3317
        %3320 = vset.pattern.permute.xlu0 15
        %3321 = vperm.xlu0 %3320, %v1803
        %v3322 = vpop.permute.xlu0 %3321
        %v3324 = vmul.f32 %v3262, %v1680
        %v3325 = vmul.f32 %v3266, %v1686
        %v3326 = vmul.f32 %v3270, %v1692
        %v3327 = vmul.f32 %v3274, %v1698
        %v3328 = vmul.f32 %v3278, %v1704
        %v3329 = vmul.f32 %v3282, %v1710
        %v3330 = vmul.f32 %v3286, %v1716
        %v3331 = vmul.f32 %v3290, %v1722
        %v3332 = vmul.f32 %v3294, %v1728
        %v3333 = vmul.f32 %v3298, %v1734
        %v3334 = vmul.f32 %v3302, %v1740
        %v3335 = vmul.f32 %v3306, %v1746
        %v3336 = vmul.f32 %v3310, %v1752
        %v3337 = vmul.f32 %v3314, %v1758
        %v3338 = vmul.f32 %v3318, %v1764
        %v3339 = vmul.f32 %v3322, %v1770
        %v3340 = vadd.f32 %v3244, %v3324
        %v3341 = vadd.f32 %v3245, %v3325
        %v3342 = vadd.f32 %v3246, %v3326
        %v3343 = vadd.f32 %v3247, %v3327
        %v3344 = vadd.f32 %v3248, %v3328
        %v3345 = vadd.f32 %v3249, %v3329
        %v3346 = vadd.f32 %v3250, %v3330
        %v3347 = vadd.f32 %v3251, %v3331
        %v3348 = vadd.f32 %v3252, %v3332
        %v3349 = vadd.f32 %v3253, %v3333
        %v3350 = vadd.f32 %v3254, %v3334
        %v3351 = vadd.f32 %v3255, %v3335
        %v3352 = vadd.f32 %v3256, %v3336
        %v3353 = vadd.f32 %v3257, %v3337
        %v3354 = vadd.f32 %v3258, %v3338
        %v3355 = vadd.f32 %v3259, %v3339
        %3356 = vst [vmem:[%s215] sm:$0xff] %v3340
        %3357 = vst [vmem:[%s215 + $0x8] sm:$0xff] %v3341
        %3358 = vst [vmem:[%s215 + $0x10] sm:$0xff] %v3342
        %3359 = vst [vmem:[%s215 + $0x18] sm:$0xff] %v3343
        %3360 = vst [vmem:[%s215 + $0x20] sm:$0xff] %v3344
        %3361 = vst [vmem:[%s215 + $0x28] sm:$0xff] %v3345
        %3362 = vst [vmem:[%s215 + $0x30] sm:$0xff] %v3346
        %3363 = vst [vmem:[%s215 + $0x38] sm:$0xff] %v3347
        %3364 = vst [vmem:[%s215 + $0x40] sm:$0xff] %v3348
        %3365 = vst [vmem:[%s215 + $0x48] sm:$0xff] %v3349
        %3366 = vst [vmem:[%s215 + $0x50] sm:$0xff] %v3350
        %3367 = vst [vmem:[%s215 + $0x58] sm:$0xff] %v3351
        %3368 = vst [vmem:[%s215 + $0x60] sm:$0xff] %v3352
        %3369 = vst [vmem:[%s215 + $0x68] sm:$0xff] %v3353
        %3370 = vst [vmem:[%s215 + $0x70] sm:$0xff] %v3354
        %3371 = vst [vmem:[%s215 + $0x78] sm:$0xff] %v3355
        %s3372 = sand.u32 %s98, 1
        %s3373 = scalar_lea.sflag [#allocation4], %s3372
        %s3374 = sand.u32 %s98, 1
        %s3375 = smul.addr %s3374, 128
        %s3376 = scalar_lea.vmem [#allocation7], %s3375
        // Predicated region
        $region37: #{tpu_custom_call.1} parent=27 // pred_check
          %p3377 = pneg %p108
        $region38: #{tpu_custom_call.1} parent=27 // pred_check_branch
          %3379 = sbr.rel (%p3377) target = $region40
        $region39: #{tpu_custom_call.1} parent=27 // pred_region
          %s3380 = smul.u32 16, %s27
          %s3382 = ssub.s32 2048, 2048
          %3383 = vsyncadd %s3373, %s3382
          %s3384 = smul.addr %s26, 16
          %s3385 = sadd.s32 %s3380, %s3384
          %s3386 = smul.addr %s3385, 128
          %s3387 = scalar_lea.hbm %s2, %s3386
          %s3388 = sshll.u32 %s3376, 4
          %s3389 = int_to_ptr.vmem [resolvable:$true] %s3388
          %3394 = dma.vmem_to_hbm [thread:$0]  %s3389, 2048, %s3387, %s3373, 128, 128, 8
        $region40: #{tpu_custom_call.1} parent=27 // pred_fallthru
          _
      $region28: #{tpu_custom_call.1} parent=5 // pred_fallthru
        _
      %p3395 = scmp.le.s32.totalorder 2, %s17
      // Predicated region
      $region41: #{tpu_custom_call.1} parent=5 // pred_check
        %p3396 = pneg %p3395
      $region42: #{tpu_custom_call.1} parent=5 // pred_check_branch
        %3398 = sbr.rel (%p3396) target = $region44
      $region43: #{tpu_custom_call.1} parent=5 // pred_region
        %s3399 = ssub.s32 %s17, 2
        // Predicated region
        $region45: #{tpu_custom_call.1} parent=43 // pred_check
          %p3400 = pneg %p114
        $region46: #{tpu_custom_call.1} parent=43 // pred_check_branch
          %3402 = sbr.rel (%p3400) target = $region48
        $region47: #{tpu_custom_call.1} parent=43 // pred_region
          %s3403 = sand.u32 %s99, 1
          %s3404 = scalar_lea.sflag [#allocation4], %s3403
          %s3405 = sand.u32 %s99, 1
          %s3406 = smul.addr %s3405, 128
          %s3407 = scalar_lea.vmem [#allocation7], %s3406
          %3408 = dma.done %s3404, 2048
        $region48: #{tpu_custom_call.1} parent=43 // pred_fallthru
          _
      $region44: #{tpu_custom_call.1} parent=5 // pred_fallthru
        _
    $region6: #{tpu_custom_call.1} parent=1 // loop_footer
      %s21 = sadd.s32 1, %s17
    $region7: #{tpu_custom_call.1} parent=1 // loop_footer_branch
      %16 = sbr.rel target = $region3
    $region8: #{tpu_custom_call.1} parent=1 // loop_exit
      _
    %3409 = vsyncpa [#allocation3], 1
    %s3410 = scalar_lea.sflag [#allocation3], 1
    %3411 = vsyncpa %s3410, 1
    %3412 = vsyncpa [#allocation6], 1
    %s3413 = scalar_lea.sflag [#allocation6], 1
    %3414 = vsyncpa %s3413, 1
    %3415 = vsyncpa [#allocation4], 1
    %s3416 = scalar_lea.sflag [#allocation4], 1
    %3417 = vsyncpa %s3416, 1

</llo_original>
